<compile_context>
chip_gen: v6e
topology: v6e:2x2x1
jax: 0.10.0
libtpu: 0.0.40
codegen_flags: <defaults>
</compile_context>

<pallas_src>
import functools

import jax
import jax.numpy as jnp
from jax import lax
from jax.experimental import pallas as pl
from jax.experimental.pallas import tpu as pltpu


def _round_up(x, m):
    return -(-x // m) * m


_CHUNK_ROWS = 256   # target Tc*B rows per time chunk (bounds VMEM on all generations)


# ----------------------------------------------------------------------------
# Pallas kernel 1: one LSTM layer over a time-chunked sequence.
# PyTorch semantics: c' = f*c + i*g ; h' = o*tanh(c')  (gate cols reordered i,f,o,g).
# ----------------------------------------------------------------------------
def _make_lstm_layer_kernel(*, Tc, B, H, T_true, has_init, emit_hseq,
                            emit_final, has_tail):
    def kernel(*refs):
        pos = 0
        x_ref = refs[pos]; pos += 1
        h0_ref = c0_ref = None
        if has_init:
            h0_ref, c0_ref = refs[pos], refs[pos + 1]; pos += 2
        wih_ref, whh_ref, b_ref = refs[pos], refs[pos + 1], refs[pos + 2]; pos += 3
        hseq_ref = None
        if emit_hseq:
            hseq_ref = refs[pos]; pos += 1
        hfin_ref = cfin_ref = None
        if emit_final:
            hfin_ref, cfin_ref = refs[pos], refs[pos + 1]; pos += 2
        h_sc, c_sc, xproj_sc = refs[pos], refs[pos + 1], refs[pos + 2]; pos += 3
        hbuf_sc = refs[pos] if emit_hseq else None

        ci = pl.program_id(0)

        @pl.when(ci == 0)
        def _init():
            if has_init:
                h_sc[...] = h0_ref[...]
                c_sc[...] = c0_ref[...]
            else:
                h_sc[...] = jnp.zeros_like(h_sc)   # encoder: zero init in-kernel
                c_sc[...] = jnp.zeros_like(c_sc)

        # Chunk-wide input projection: one big-M GEMM, bias folded, off the
        # serial recurrent path.
        xproj_sc[...] = (
            jnp.dot(x_ref[...], wih_ref[...], preferred_element_type=jnp.float32)
            + b_ref[...])

        def step(t, carry):
            h, c = carry                               # f32 (B, H)
            off = pl.multiple_of(t * B, B)
            gates = xproj_sc[pl.ds(off, B), :] + jnp.dot(
                h.astype(jnp.bfloat16), whh_ref[...],
                preferred_element_type=jnp.float32)    # (B, 4H) f32
            sig = jax.nn.sigmoid(gates[:, :3 * H])     # [i | f | o]
            g_g = jnp.tanh(gates[:, 3 * H:])           # [g]
            i_g = sig[:, 0 * H:1 * H]
            f_g = sig[:, 1 * H:2 * H]
            o_g = sig[:, 2 * H:3 * H]
            c_new = f_g * c + i_g * g_g
            h_new = o_g * jnp.tanh(c_new)
            if has_tail:                               # only traced when T was padded
                valid = (ci * Tc + t) < T_true
                h_new = jnp.where(valid, h_new, h)
                c_new = jnp.where(valid, c_new, c)
            if emit_hseq:
                hbuf_sc[pl.ds(off, B), :] = h_new
            return (h_new, c_new)

        h_last, c_last = lax.fori_loop(
            0, Tc, step, (h_sc[...], c_sc[...]),
            unroll=True if Tc <= 16 else 8)
        h_sc[...] = h_last
        c_sc[...] = c_last

        if emit_hseq:
            # Single dense bf16 writeback per chunk (pipelined by BlockSpec).
            hseq_ref[...] = hbuf_sc[...].astype(hseq_ref.dtype)
        if emit_final:
            @pl.when(ci == pl.num_programs(0) - 1)
            def _fin():
                hfin_ref[...] = h_last
                cfin_ref[...] = c_last

    return kernel


def _lstm_layer(x2d, wih, whh, b, h0, c0, *, Tc, B, H, T_true, has_tail,
                emit_hseq, emit_final):
    """x2d: (T_pad*B, insz) bf16.  wih: (insz,4H) bf16.  whh: (H,4H) bf16.  b: (1,4H) f32.
    h0/c0: (B,H) f32 or None (zero init in kernel)."""
    rows, insz = x2d.shape
    crows = Tc * B
    n_chunks = rows // crows
    has_init = h0 is not None

    in_arrays = [x2d]
    in_specs = [pl.BlockSpec((crows, insz), lambda i: (i, 0))]
    if has_init:
        in_arrays += [h0, c0]
        in_specs += [pl.BlockSpec((B, H), lambda i: (0, 0)),
                     pl.BlockSpec((B, H), lambda i: (0, 0))]
    in_arrays += [wih, whh, b]
    in_specs += [pl.BlockSpec(wih.shape, lambda i: (0, 0)),
                 pl.BlockSpec(whh.shape, lambda i: (0, 0)),
                 pl.BlockSpec(b.shape, lambda i: (0, 0))]

    out_shapes, out_specs = [], []
    if emit_hseq:
        out_shapes.append(jax.ShapeDtypeStruct((rows, H), jnp.bfloat16))
        out_specs.append(pl.BlockSpec((crows, H), lambda i: (i, 0)))
    if emit_final:
        out_shapes += [jax.ShapeDtypeStruct((B, H), jnp.float32)] * 2
        out_specs += [pl.BlockSpec((B, H), lambda i: (0, 0)),
                      pl.BlockSpec((B, H), lambda i: (0, 0))]

    scratch = [pltpu.VMEM((B, H), jnp.float32),            # h state (persists)
               pltpu.VMEM((B, H), jnp.float32),            # c state (persists)
               pltpu.VMEM((crows, 4 * H), jnp.float32)]    # chunk input projection
    if emit_hseq:
        scratch.append(pltpu.VMEM((crows, H), jnp.float32))  # per-chunk h staging

    kernel = _make_lstm_layer_kernel(Tc=Tc, B=B, H=H, T_true=T_true,
                                     has_init=has_init, emit_hseq=emit_hseq,
                                     emit_final=emit_final, has_tail=has_tail)

    # TODO(synk): v7x dual-TensorCore batch split (leading "parallel" axis) when B >= 16.
    outs = pl.pallas_call(
        kernel,
        grid_spec=pltpu.PrefetchScalarGridSpec(
            num_scalar_prefetch=0,
            grid=(n_chunks,),
            in_specs=in_specs,
            out_specs=out_specs,
            scratch_shapes=scratch),
        out_shape=tuple(out_shapes),
        compiler_params=pltpu.CompilerParams(
            dimension_semantics=("arbitrary",)),
    )(*in_arrays)
    if not isinstance(outs, (list, tuple)):
        outs = (outs,)
    return tuple(outs)


def lstm_stack(x_seq, layers, h0_list, c0_list, *, need_hseq, need_final):
    """x_seq: (T, B, insz0) float.  layers: list of {'wih','whh','b'}.
    Returns (hseq2d (T*B,H) bf16 or None, [h_fin (B,H) f32,...] or None, [c_fin,...] or None)."""
    T, B, _ = x_seq.shape
    nlayers = len(layers)
    H = int(layers[0]["whh"].shape[0])

    Tc = max(1, min(T, _CHUNK_ROWS // B))
    if Tc < T and (B % 16) and (Tc % 2):
        Tc += 1                                  # keep bf16 block rows 16-aligned
    n_chunks = -(-T // Tc)
    T_pad = n_chunks * Tc
    has_tail = (T_pad != T)
    if has_tail:
        x_seq = jnp.pad(x_seq, ((0, T_pad - T), (0, 0), (0, 0)))
    x2d = x_seq.reshape(T_pad * B, -1).astype(jnp.bfloat16)   # bf16 activation traffic

    h_fins, c_fins = [], []
    for l in range(nlayers):
        emit_hseq = (l < nlayers - 1) or need_hseq   # last encoder layer skips hseq
        outs = _lstm_layer(
            x2d, layers[l]["wih"], layers[l]["whh"], layers[l]["b"],
            None if h0_list is None else h0_list[l],
            None if c0_list is None else c0_list[l],
            Tc=Tc, B=B, H=H, T_true=T, has_tail=has_tail,
            emit_hseq=emit_hseq, emit_final=need_final)
        idx = 0
        if emit_hseq:
            x2d = outs[idx]; idx += 1                 # feeds the next layer (bf16)
        if need_final:
            h_fins.append(outs[idx]); c_fins.append(outs[idx + 1])

    hseq2d = None
    if need_hseq:
        hseq2d = x2d
        if has_tail:
            hseq2d = hseq2d.reshape(T_pad, B, H)[:T].reshape(T * B, H)
    return (hseq2d,
            h_fins if need_final else None,
            c_fins if need_final else None)


# ----------------------------------------------------------------------------
# Pallas kernel 2: Linear(hsz -> nc) + masked, lane-dense LogSoftmax.
# ----------------------------------------------------------------------------
def _pred_kernel(x_ref, w_ref, b_ref, out_ref, *, nc):
    logits = (jnp.dot(x_ref[...], w_ref[...],
                      preferred_element_type=jnp.float32) + b_ref[...])
    lane = lax.broadcasted_iota(jnp.int32, logits.shape, 1)
    logits = jnp.where(lane < nc, logits, jnp.float32(-1e30))  # mask padded vocab lanes
    m = jnp.max(logits, axis=-1, keepdims=True)
    z = logits - m
    lse = jnp.log(jnp.sum(jnp.exp(z), axis=-1, keepdims=True))
    out_ref[...] = z - lse


def pred_logsoftmax(x_flat, w_t, b_row, nc):
    """x_flat: (N, H) bf16 (N multiple of 8).  w_t: (H, nc_pad) bf16.  b_row: (1, nc_pad) f32."""
    N, H = x_flat.shape
    nc_pad = int(w_t.shape[1])
    # TODO(synk): tile the vocab (nc) dimension with a two-pass log-softmax for very
    # large vocabularies; single lane-dense weight tile assumed to fit VMEM here.
    row_tile = 512 if N >= 512 else _round_up(N, 16)
    n_blocks = -(-N // row_tile)
    n_pad = n_blocks * row_tile
    if n_pad != N:
        x_flat = jnp.pad(x_flat, ((0, n_pad - N), (0, 0)))

    out = pl.pallas_call(
        functools.partial(_pred_kernel, nc=nc),
        grid_spec=pltpu.PrefetchScalarGridSpec(
            num_scalar_prefetch=0,
            grid=(n_blocks,),
            in_specs=[pl.BlockSpec((row_tile, H), lambda i: (i, 0)),
                      pl.BlockSpec((H, nc_pad), lambda i: (0, 0)),
                      pl.BlockSpec((1, nc_pad), lambda i: (0, 0))],
            out_specs=pl.BlockSpec((row_tile, nc_pad), lambda i: (i, 0))),
        out_shape=jax.ShapeDtypeStruct((n_pad, nc_pad), jnp.float32),
        compiler_params=pltpu.CompilerParams(
            dimension_semantics=("parallel",)),
    )(x_flat, w_t, b_row)
    return out[:N, :nc]


# ----------------------------------------------------------------------------
# Seq2Seq forward (matches Seq2SeqModel.forward, rnntype='lstm', batchfirst=True).
# ----------------------------------------------------------------------------
def seq2seq_forward(params, src, dst):
    B = src.shape[0]
    b_pad = _round_up(max(B, 8), 8)                 # sublane-align the batch
    if b_pad != B:
        # token 0 == padding_idx -> zero embedding rows; padded batch rows discarded.
        src = jnp.pad(src, ((0, b_pad - B), (0, 0)))
        dst = jnp.pad(dst, ((0, b_pad - B), (0, 0)))

    # ---------------- encode ----------------
    emb_in = jnp.take(params["embed_in"], jnp.transpose(src, (1, 0)), axis=0)  # (Tsrc,Bp,dsz)
    # rnn_enc_seq is never consumed downstream (as in the reference model).
    _, h_fin, c_fin = lstm_stack(emb_in, params["enc"], None, None,
                                 need_hseq=False, need_final=True)

    # ---------------- decode ----------------
    emb_out = jnp.take(params["embed_out"], jnp.transpose(dst, (1, 0)), axis=0)  # (Tdst,Bp,hsz)
    hseq2d, _, _ = lstm_stack(emb_out, params["dec"], h_fin, c_fin,
                              need_hseq=True, need_final=False)

    Tdst = dst.shape[1]
    pred = pred_logsoftmax(hseq2d, params["w_pred_t"], params["b_pred"], params["nc"])
    pred = pred.reshape(Tdst, b_pad, -1)
    pred = jnp.transpose(pred, (1, 0, 2))           # batch-first (Bp, Tdst, nc)
    return pred[:B]


# ----------------------------------------------------------------------------
# Deterministic parameter construction (PyTorch LSTM/Linear layouts, pre-reordered/padded).
# ----------------------------------------------------------------------------
def make_params(key, vsz1, vsz2, dsz, hsz, nlayers):
    keys = iter(jax.random.split(key, 64))

    def u(shape, scale):
        return jax.random.uniform(next(keys), shape, jnp.float32, -scale, scale)

    # Embedding tables (padding_idx=0 -> row 0 is zero).
    embed_in = u((vsz1 + 1, dsz), 0.5).at[0].set(0.0)
    embed_out = u((vsz2 + 1, hsz), 0.5).at[0].set(0.0)

    k = 1.0 / float(hsz) ** 0.5

    def reorder(w4h):     # rows (4H, ...) in PyTorch order (i,f,g,o) -> (i,f,o,g)
        i, f, g, o = jnp.split(w4h, 4, axis=0)
        return jnp.concatenate([i, f, o, g], axis=0)

    def lstm_params(insz):
        wih = u((4 * hsz, insz), k)                  # PyTorch layout (4H, insz)
        whh = u((4 * hsz, hsz), k)
        b_ih = u((4 * hsz,), k)
        b_hh = u((4 * hsz,), k)
        return {
            "wih": reorder(wih).T.astype(jnp.bfloat16),        # (insz, 4H)
            "whh": reorder(whh).T.astype(jnp.bfloat16),        # (H, 4H)
            "b": reorder((b_ih + b_hh).reshape(4 * hsz, 1)).reshape(1, 4 * hsz),
        }

    enc = [lstm_params(dsz if l == 0 else hsz) for l in range(nlayers)]
    dec = [lstm_params(hsz) for _ in range(nlayers)]

    nc = vsz2 + 1
    nc_pad = max(128, _round_up(nc, 128))            # lane-dense prediction head
    w_pred = u((nc, hsz), k)
    b_pred = u((nc,), k)
    w_pred_t = jnp.zeros((hsz, nc_pad), jnp.float32).at[:, :nc].set(w_pred.T)
    b_pred_p = jnp.zeros((1, nc_pad), jnp.float32).at[0, :nc].set(b_pred)

    # TODO(synk): rnntype='gru' branch of _rnn is not implemented (lstm only).
    return {
        "embed_in": embed_in,
        "embed_out": embed_out,
        "enc": enc,
        "dec": dec,
        "w_pred_t": w_pred_t.astype(jnp.bfloat16),
        "b_pred": b_pred_p,
        "nc": nc,
    }


if __name__ == "__main__":
    # Small config consistent with the module:
    #   embed1.dsz = 32, embed2.dsz = hsz = 32 (decoder input must equal hsz),
    #   nlayers = 2, rnntype = 'lstm', batchfirst = True.
    B, Tsrc, Tdst = 2, 8, 8
    dsz, hsz, nlayers = 32, 32, 2
    vsz1, vsz2 = 20, 20
    nc = vsz2 + 1

    key = jax.random.PRNGKey(0)
    kp, ks, kd = jax.random.split(key, 3)

    params = make_params(kp, vsz1, vsz2, dsz, hsz, nlayers)
    src = jax.random.randint(ks, (B, Tsrc), 1, vsz1 + 1, dtype=jnp.int32)
    dst = jax.random.randint(kd, (B, Tdst), 1, vsz2 + 1, dtype=jnp.int32)

    fwd = jax.jit(functools.partial(seq2seq_forward, params))
    pred = jax.block_until_ready(fwd(src, dst))

    assert pred.shape == (B, Tdst, nc), pred.shape
    assert pred.dtype == jnp.float32
    # log-softmax rows must sum (in prob space) to ~1
    assert jnp.allclose(jnp.sum(jnp.exp(pred), axis=-1), 1.0, atol=1e-4)

    print("KERNEL_OK")
</pallas_src>

<mosaic_0001>
module attributes {stable_mosaic.version = 11 : i64} {
  func.func @_pred_kernel(%arg0: i32, %arg1: memref<64x32xbf16, #tpu.memory_space<vmem>>, %arg2: memref<32x128xbf16, #tpu.memory_space<vmem>>, %arg3: memref<1x128xf32, #tpu.memory_space<vmem>>, %arg4: memref<64x128xf32, #tpu.memory_space<vmem>>) attributes {dimension_semantics = [#tpu.dimension_semantics<parallel>], iteration_bounds = array<i64: 1>, scalar_prefetch = 0 : i64, scratch_operands = 0 : i64, tpu.core_type = #tpu.core_type<tc>, window_params = [{transform_indices = @transform_0, window_bounds = array<i64: 64, 32>}, {pipeline_mode = #tpu.pipeline_mode<synchronous>, transform_indices = @transform_1, window_bounds = array<i64: 32, 128>}, {pipeline_mode = #tpu.pipeline_mode<synchronous>, transform_indices = @transform_2, window_bounds = array<i64: 1, 128>}, {transform_indices = @transform_3, window_bounds = array<i64: 64, 128>}]} {
    %c0 = arith.constant 0 : index
    %c0_0 = arith.constant 0 : index
    %0 = vector.load %arg1[%c0, %c0_0] : memref<64x32xbf16, #tpu.memory_space<vmem>>, vector<64x32xbf16>
    %c0_1 = arith.constant 0 : index
    %c0_2 = arith.constant 0 : index
    %1 = vector.load %arg2[%c0_1, %c0_2] : memref<32x128xbf16, #tpu.memory_space<vmem>>, vector<32x128xbf16>
    %cst = arith.constant dense<0.000000e+00> : vector<64x128xf32>
    %2 = tpu.matmul %0, %1, %cst {dimension_numbers = #tpu.dot_dimension_numbers<[1], [0], [0], [1], [0, 0, 1, 1], [], []>} : vector<64x32xbf16>, vector<32x128xbf16>, vector<64x128xf32> -> vector<64x128xf32>
    %c0_3 = arith.constant 0 : index
    %c0_4 = arith.constant 0 : index
    %3 = vector.load %arg3[%c0_3, %c0_4] : memref<1x128xf32, #tpu.memory_space<vmem>>, vector<1x128xf32>
    %4 = vector.broadcast %3 : vector<1x128xf32> to vector<64x128xf32>
    %5 = arith.addf %2, %4 : vector<64x128xf32>
    %6 = tpu.iota {dimensions = array<i32: 1>} : vector<64x128xi32>
    %c21_i32 = arith.constant 21 : i32
    %7 = vector.broadcast %c21_i32 : i32 to vector<64x128xi32>
    %8 = arith.cmpi slt, %6, %7 : vector<64x128xi32>
    %cst_5 = arith.constant -1.000000e+30 : f32
    %9 = vector.broadcast %cst_5 : f32 to vector<64x128xf32>
    %10 = arith.select %8, %5, %9 : vector<64x128xi1>, vector<64x128xf32>
    %cst_6 = arith.constant dense<0xFF800000> : vector<64xf32>
    %11 = vector.multi_reduction <maximumf>, %10, %cst_6 [1] : vector<64x128xf32> to vector<64xf32>
    %12 = vector.shape_cast %11 : vector<64xf32> to vector<64x1xf32>
    %13 = vector.broadcast %12 : vector<64x1xf32> to vector<64x128xf32>
    %14 = arith.subf %10, %13 : vector<64x128xf32>
    %15 = math.exp %14 : vector<64x128xf32>
    %cst_7 = arith.constant dense<0.000000e+00> : vector<64xf32>
    %16 = vector.multi_reduction <add>, %15, %cst_7 [1] : vector<64x128xf32> to vector<64xf32>
    %17 = vector.shape_cast %16 : vector<64xf32> to vector<64x1xf32>
    %18 = math.log %17 : vector<64x1xf32>
    %19 = vector.broadcast %18 : vector<64x1xf32> to vector<64x128xf32>
    %20 = arith.subf %14, %19 : vector<64x128xf32>
    %c0_8 = arith.constant 0 : index
    %c0_9 = arith.constant 0 : index
    %21 = vector.load %arg4[%c0_8, %c0_9] : memref<64x128xf32, #tpu.memory_space<vmem>>, vector<64x128xf32>
    tpu.vector_store %arg4[%c0_8, %c0_9], %20 {strides = array<i32>} : memref<64x128xf32, #tpu.memory_space<vmem>>, vector<64x128xf32>,
    return
  }
  func.func @transform_0(%arg0: i32) -> (i32, i32) {
    %c0_i32 = arith.constant 0 : i32
    %c0_i32_0 = arith.constant 0 : i32
    return %arg0, %c0_i32 : i32, i32
  }
  func.func @transform_1(%arg0: i32) -> (i32, i32) {
    %c0_i32 = arith.constant 0 : i32
    %c0_i32_0 = arith.constant 0 : i32
    %c0_i32_1 = arith.constant 0 : i32
    return %c0_i32, %c0_i32_0 : i32, i32
  }
  func.func @transform_2(%arg0: i32) -> (i32, i32) {
    %c0_i32 = arith.constant 0 : i32
    %c0_i32_0 = arith.constant 0 : i32
    %c0_i32_1 = arith.constant 0 : i32
    return %c0_i32, %c0_i32_0 : i32, i32
  }
  func.func @transform_3(%arg0: i32) -> (i32, i32) {
    %c0_i32 = arith.constant 0 : i32
    %c0_i32_0 = arith.constant 0 : i32
    return %arg0, %c0_i32 : i32, i32
  }
}

module attributes {stable_mosaic.version = 11 : i64} {
  func.func @kernel(%arg0: i32, %arg1: memref<64x32xbf16, #tpu.memory_space<vmem>>, %arg2: memref<32x128xbf16, #tpu.memory_space<vmem>>, %arg3: memref<32x128xbf16, #tpu.memory_space<vmem>>, %arg4: memref<1x128xf32, #tpu.memory_space<vmem>>, %arg5: memref<8x32xf32, #tpu.memory_space<vmem>>, %arg6: memref<8x32xf32, #tpu.memory_space<vmem>>, %arg7: memref<8x32xf32, #tpu.memory_space<vmem>>, %arg8: memref<8x32xf32, #tpu.memory_space<vmem>>, %arg9: memref<64x128xf32, #tpu.memory_space<vmem>>) attributes {dimension_semantics = [#tpu.dimension_semantics<arbitrary>], iteration_bounds = array<i64: 1>, scalar_prefetch = 0 : i64, scratch_operands = 3 : i64, tpu.core_type = #tpu.core_type<tc>, window_params = [{transform_indices = @transform_0, window_bounds = array<i64: 64, 32>}, {pipeline_mode = #tpu.pipeline_mode<synchronous>, transform_indices = @transform_1, window_bounds = array<i64: 32, 128>}, {pipeline_mode = #tpu.pipeline_mode<synchronous>, transform_indices = @transform_2, window_bounds = array<i64: 32, 128>}, {pipeline_mode = #tpu.pipeline_mode<synchronous>, transform_indices = @transform_3, window_bounds = array<i64: 1, 128>}, {pipeline_mode = #tpu.pipeline_mode<synchronous>, transform_indices = @transform_4, window_bounds = array<i64: 8, 32>}, {pipeline_mode = #tpu.pipeline_mode<synchronous>, transform_indices = @transform_5, window_bounds = array<i64: 8, 32>}]} {
    %c0_i32 = arith.constant 0 : i32
    %0 = arith.cmpi eq, %arg0, %c0_i32 : i32
    %1 = arith.extui %0 : i1 to i32
    %c0_i32_0 = arith.constant 0 : i32
    %2 = arith.cmpi ne, %1, %c0_i32_0 : i32
    scf.if %2 {
      %cst_67 = arith.constant 0.000000e+00 : f32
      %209 = vector.broadcast %cst_67 : f32 to vector<8x32xf32>
      %c0_68 = arith.constant 0 : index
      %c0_69 = arith.constant 0 : index
      %210 = vector.load %arg7[%c0_68, %c0_69] : memref<8x32xf32, #tpu.memory_space<vmem>>, vector<8x32xf32>
      tpu.vector_store %arg7[%c0_68, %c0_69], %209 {strides = array<i32>} : memref<8x32xf32, #tpu.memory_space<vmem>>, vector<8x32xf32>,
      %cst_70 = arith.constant 0.000000e+00 : f32
      %211 = vector.broadcast %cst_70 : f32 to vector<8x32xf32>
      %c0_71 = arith.constant 0 : index
      %c0_72 = arith.constant 0 : index
      %212 = vector.load %arg8[%c0_71, %c0_72] : memref<8x32xf32, #tpu.memory_space<vmem>>, vector<8x32xf32>
      tpu.vector_store %arg8[%c0_71, %c0_72], %211 {strides = array<i32>} : memref<8x32xf32, #tpu.memory_space<vmem>>, vector<8x32xf32>,
    } else {
    }
    %c0 = arith.constant 0 : index
    %c0_1 = arith.constant 0 : index
    %3 = vector.load %arg1[%c0, %c0_1] : memref<64x32xbf16, #tpu.memory_space<vmem>>, vector<64x32xbf16>
    %c0_2 = arith.constant 0 : index
    %c0_3 = arith.constant 0 : index
    %4 = vector.load %arg2[%c0_2, %c0_3] : memref<32x128xbf16, #tpu.memory_space<vmem>>, vector<32x128xbf16>
    %cst = arith.constant dense<0.000000e+00> : vector<64x128xf32>
    %5 = tpu.matmul %3, %4, %cst {dimension_numbers = #tpu.dot_dimension_numbers<[1], [0], [0], [1], [0, 0, 1, 1], [], []>} : vector<64x32xbf16>, vector<32x128xbf16>, vector<64x128xf32> -> vector<64x128xf32>
    %c0_4 = arith.constant 0 : index
    %c0_5 = arith.constant 0 : index
    %6 = vector.load %arg4[%c0_4, %c0_5] : memref<1x128xf32, #tpu.memory_space<vmem>>, vector<1x128xf32>
    %7 = vector.broadcast %6 : vector<1x128xf32> to vector<64x128xf32>
    %8 = arith.addf %5, %7 : vector<64x128xf32>
    %c0_6 = arith.constant 0 : index
    %c0_7 = arith.constant 0 : index
    %9 = vector.load %arg9[%c0_6, %c0_7] : memref<64x128xf32, #tpu.memory_space<vmem>>, vector<64x128xf32>
    tpu.vector_store %arg9[%c0_6, %c0_7], %8 {strides = array<i32>} : memref<64x128xf32, #tpu.memory_space<vmem>>, vector<64x128xf32>,
    %c0_8 = arith.constant 0 : index
    %c0_9 = arith.constant 0 : index
    %10 = vector.load %arg7[%c0_8, %c0_9] : memref<8x32xf32, #tpu.memory_space<vmem>>, vector<8x32xf32>
    %c0_10 = arith.constant 0 : index
    %c0_11 = arith.constant 0 : index
    %11 = vector.load %arg8[%c0_10, %c0_11] : memref<8x32xf32, #tpu.memory_space<vmem>>, vector<8x32xf32>
    %c0_i32_12 = arith.constant 0 : i32
    %c8_i32 = arith.constant 8 : i32
    %12 = arith.muli %c0_i32_12, %c8_i32 : i32
    %13 = tpu.assume_multiple %12, 8 : i32
    %14 = arith.index_cast %13 : i32 to index
    %c0_13 = arith.constant 0 : index
    %15 = vector.load %arg9[%14, %c0_13] : memref<64x128xf32, #tpu.memory_space<vmem>>, vector<8x128xf32>
    %16 = arith.truncf %10 : vector<8x32xf32> to vector<8x32xbf16>
    %c0_14 = arith.constant 0 : index
    %c0_15 = arith.constant 0 : index
    %17 = vector.load %arg3[%c0_14, %c0_15] : memref<32x128xbf16, #tpu.memory_space<vmem>>, vector<32x128xbf16>
    %cst_16 = arith.constant dense<0.000000e+00> : vector<8x128xf32>
    %18 = tpu.matmul %16, %17, %cst_16 {dimension_numbers = #tpu.dot_dimension_numbers<[1], [0], [0], [1], [0, 0, 1, 1], [], []>} : vector<8x32xbf16>, vector<32x128xbf16>, vector<8x128xf32> -> vector<8x128xf32>
    %19 = arith.addf %15, %18 : vector<8x128xf32>
    %20 = vector.extract_strided_slice %19 {offsets = [0, 0], sizes = [8, 96], strides = [1, 1]} : vector<8x128xf32> to vector<8x96xf32>
    %21 = arith.negf %20 : vector<8x96xf32>
    %22 = math.exp %21 : vector<8x96xf32>
    %cst_17 = arith.constant 1.000000e+00 : f32
    %23 = vector.broadcast %cst_17 : f32 to vector<8x96xf32>
    %24 = arith.addf %23, %22 : vector<8x96xf32>
    %25 = arith.divf %23, %24 : vector<8x96xf32>
    %26 = vector.extract_strided_slice %19 {offsets = [0, 96], sizes = [8, 32], strides = [1, 1]} : vector<8x128xf32> to vector<8x32xf32>
    %27 = math.tanh %26 : vector<8x32xf32>
    %28 = vector.extract_strided_slice %25 {offsets = [0, 0], sizes = [8, 32], strides = [1, 1]} : vector<8x96xf32> to vector<8x32xf32>
    %29 = vector.extract_strided_slice %25 {offsets = [0, 32], sizes = [8, 32], strides = [1, 1]} : vector<8x96xf32> to vector<8x32xf32>
    %30 = vector.extract_strided_slice %25 {offsets = [0, 64], sizes = [8, 32], strides = [1, 1]} : vector<8x96xf32> to vector<8x32xf32>
    %31 = arith.mulf %29, %11 : vector<8x32xf32>
    %32 = arith.mulf %28, %27 : vector<8x32xf32>
    %33 = arith.addf %31, %32 : vector<8x32xf32>
    %34 = math.tanh %33 : vector<8x32xf32>
    %35 = arith.mulf %30, %34 : vector<8x32xf32>
    %c1_i32 = arith.constant 1 : i32
    %c8_i32_18 = arith.constant 8 : i32
    %36 = arith.muli %c1_i32, %c8_i32_18 : i32
    %37 = tpu.assume_multiple %36, 8 : i32
    %38 = arith.index_cast %37 : i32 to index
    %c0_19 = arith.constant 0 : index
    %39 = vector.load %arg9[%38, %c0_19] : memref<64x128xf32, #tpu.memory_space<vmem>>, vector<8x128xf32>
    %40 = arith.truncf %35 : vector<8x32xf32> to vector<8x32xbf16>
    %c0_20 = arith.constant 0 : index
    %c0_21 = arith.constant 0 : index
    %41 = vector.load %arg3[%c0_20, %c0_21] : memref<32x128xbf16, #tpu.memory_space<vmem>>, vector<32x128xbf16>
    %cst_22 = arith.constant dense<0.000000e+00> : vector<8x128xf32>
    %42 = tpu.matmul %40, %41, %cst_22 {dimension_numbers = #tpu.dot_dimension_numbers<[1], [0], [0], [1], [0, 0, 1, 1], [], []>} : vector<8x32xbf16>, vector<32x128xbf16>, vector<8x128xf32> -> vector<8x128xf32>
    %43 = arith.addf %39, %42 : vector<8x128xf32>
    %44 = vector.extract_strided_slice %43 {offsets = [0, 0], sizes = [8, 96], strides = [1, 1]} : vector<8x128xf32> to vector<8x96xf32>
    %45 = arith.negf %44 : vector<8x96xf32>
    %46 = math.exp %45 : vector<8x96xf32>
    %cst_23 = arith.constant 1.000000e+00 : f32
    %47 = vector.broadcast %cst_23 : f32 to vector<8x96xf32>
    %48 = arith.addf %47, %46 : vector<8x96xf32>
    %49 = arith.divf %47, %48 : vector<8x96xf32>
    %50 = vector.extract_strided_slice %43 {offsets = [0, 96], sizes = [8, 32], strides = [1, 1]} : vector<8x128xf32> to vector<8x32xf32>
    %51 = math.tanh %50 : vector<8x32xf32>
    %52 = vector.extract_strided_slice %49 {offsets = [0, 0], sizes = [8, 32], strides = [1, 1]} : vector<8x96xf32> to vector<8x32xf32>
    %53 = vector.extract_strided_slice %49 {offsets = [0, 32], sizes = [8, 32], strides = [1, 1]} : vector<8x96xf32> to vector<8x32xf32>
    %54 = vector.extract_strided_slice %49 {offsets = [0, 64], sizes = [8, 32], strides = [1, 1]} : vector<8x96xf32> to vector<8x32xf32>
    %55 = arith.mulf %53, %33 : vector<8x32xf32>
    %56 = arith.mulf %52, %51 : vector<8x32xf32>
    %57 = arith.addf %55, %56 : vector<8x32xf32>
    %58 = math.tanh %57 : vector<8x32xf32>
    %59 = arith.mulf %54, %58 : vector<8x32xf32>
    %c2_i32 = arith.constant 2 : i32
    %c8_i32_24 = arith.constant 8 : i32
    %60 = arith.muli %c2_i32, %c8_i32_24 : i32
    %61 = tpu.assume_multiple %60, 8 : i32
    %62 = arith.index_cast %61 : i32 to index
    %c0_25 = arith.constant 0 : index
    %63 = vector.load %arg9[%62, %c0_25] : memref<64x128xf32, #tpu.memory_space<vmem>>, vector<8x128xf32>
    %64 = arith.truncf %59 : vector<8x32xf32> to vector<8x32xbf16>
    %c0_26 = arith.constant 0 : index
    %c0_27 = arith.constant 0 : index
    %65 = vector.load %arg3[%c0_26, %c0_27] : memref<32x128xbf16, #tpu.memory_space<vmem>>, vector<32x128xbf16>
    %cst_28 = arith.constant dense<0.000000e+00> : vector<8x128xf32>
    %66 = tpu.matmul %64, %65, %cst_28 {dimension_numbers = #tpu.dot_dimension_numbers<[1], [0], [0], [1], [0, 0, 1, 1], [], []>} : vector<8x32xbf16>, vector<32x128xbf16>, vector<8x128xf32> -> vector<8x128xf32>
    %67 = arith.addf %63, %66 : vector<8x128xf32>
    %68 = vector.extract_strided_slice %67 {offsets = [0, 0], sizes = [8, 96], strides = [1, 1]} : vector<8x128xf32> to vector<8x96xf32>
    %69 = arith.negf %68 : vector<8x96xf32>
    %70 = math.exp %69 : vector<8x96xf32>
    %cst_29 = arith.constant 1.000000e+00 : f32
    %71 = vector.broadcast %cst_29 : f32 to vector<8x96xf32>
    %72 = arith.addf %71, %70 : vector<8x96xf32>
    %73 = arith.divf %71, %72 : vector<8x96xf32>
    %74 = vector.extract_strided_slice %67 {offsets = [0, 96], sizes = [8, 32], strides = [1, 1]} : vector<8x128xf32> to vector<8x32xf32>
    %75 = math.tanh %74 : vector<8x32xf32>
    %76 = vector.extract_strided_slice %73 {offsets = [0, 0], sizes = [8, 32], strides = [1, 1]} : vector<8x96xf32> to vector<8x32xf32>
    %77 = vector.extract_strided_slice %73 {offsets = [0, 32], sizes = [8, 32], strides = [1, 1]} : vector<8x96xf32> to vector<8x32xf32>
    %78 = vector.extract_strided_slice %73 {offsets = [0, 64], sizes = [8, 32], strides = [1, 1]} : vector<8x96xf32> to vector<8x32xf32>
    %79 = arith.mulf %77, %57 : vector<8x32xf32>
    %80 = arith.mulf %76, %75 : vector<8x32xf32>
    %81 = arith.addf %79, %80 : vector<8x32xf32>
    %82 = math.tanh %81 : vector<8x32xf32>
    %83 = arith.mulf %78, %82 : vector<8x32xf32>
    %c3_i32 = arith.constant 3 : i32
    %c8_i32_30 = arith.constant 8 : i32
    %84 = arith.muli %c3_i32, %c8_i32_30 : i32
    %85 = tpu.assume_multiple %84, 8 : i32
    %86 = arith.index_cast %85 : i32 to index
    %c0_31 = arith.constant 0 : index
    %87 = vector.load %arg9[%86, %c0_31] : memref<64x128xf32, #tpu.memory_space<vmem>>, vector<8x128xf32>
    %88 = arith.truncf %83 : vector<8x32xf32> to vector<8x32xbf16>
    %c0_32 = arith.constant 0 : index
    %c0_33 = arith.constant 0 : index
    %89 = vector.load %arg3[%c0_32, %c0_33] : memref<32x128xbf16, #tpu.memory_space<vmem>>, vector<32x128xbf16>
    %cst_34 = arith.constant dense<0.000000e+00> : vector<8x128xf32>
    %90 = tpu.matmul %88, %89, %cst_34 {dimension_numbers = #tpu.dot_dimension_numbers<[1], [0], [0], [1], [0, 0, 1, 1], [], []>} : vector<8x32xbf16>, vector<32x128xbf16>, vector<8x128xf32> -> vector<8x128xf32>
    %91 = arith.addf %87, %90 : vector<8x128xf32>
    %92 = vector.extract_strided_slice %91 {offsets = [0, 0], sizes = [8, 96], strides = [1, 1]} : vector<8x128xf32> to vector<8x96xf32>
    %93 = arith.negf %92 : vector<8x96xf32>
    %94 = math.exp %93 : vector<8x96xf32>
    %cst_35 = arith.constant 1.000000e+00 : f32
    %95 = vector.broadcast %cst_35 : f32 to vector<8x96xf32>
    %96 = arith.addf %95, %94 : vector<8x96xf32>
    %97 = arith.divf %95, %96 : vector<8x96xf32>
    %98 = vector.extract_strided_slice %91 {offsets = [0, 96], sizes = [8, 32], strides = [1, 1]} : vector<8x128xf32> to vector<8x32xf32>
    %99 = math.tanh %98 : vector<8x32xf32>
    %100 = vector.extract_strided_slice %97 {offsets = [0, 0], sizes = [8, 32], strides = [1, 1]} : vector<8x96xf32> to vector<8x32xf32>
    %101 = vector.extract_strided_slice %97 {offsets = [0, 32], sizes = [8, 32], strides = [1, 1]} : vector<8x96xf32> to vector<8x32xf32>
    %102 = vector.extract_strided_slice %97 {offsets = [0, 64], sizes = [8, 32], strides = [1, 1]} : vector<8x96xf32> to vector<8x32xf32>
    %103 = arith.mulf %101, %81 : vector<8x32xf32>
    %104 = arith.mulf %100, %99 : vector<8x32xf32>
    %105 = arith.addf %103, %104 : vector<8x32xf32>
    %106 = math.tanh %105 : vector<8x32xf32>
    %107 = arith.mulf %102, %106 : vector<8x32xf32>
    %c4_i32 = arith.constant 4 : i32
    %c8_i32_36 = arith.constant 8 : i32
    %108 = arith.muli %c4_i32, %c8_i32_36 : i32
    %109 = tpu.assume_multiple %108, 8 : i32
    %110 = arith.index_cast %109 : i32 to index
    %c0_37 = arith.constant 0 : index
    %111 = vector.load %arg9[%110, %c0_37] : memref<64x128xf32, #tpu.memory_space<vmem>>, vector<8x128xf32>
    %112 = arith.truncf %107 : vector<8x32xf32> to vector<8x32xbf16>
    %c0_38 = arith.constant 0 : index
    %c0_39 = arith.constant 0 : index
    %113 = vector.load %arg3[%c0_38, %c0_39] : memref<32x128xbf16, #tpu.memory_space<vmem>>, vector<32x128xbf16>
    %cst_40 = arith.constant dense<0.000000e+00> : vector<8x128xf32>
    %114 = tpu.matmul %112, %113, %cst_40 {dimension_numbers = #tpu.dot_dimension_numbers<[1], [0], [0], [1], [0, 0, 1, 1], [], []>} : vector<8x32xbf16>, vector<32x128xbf16>, vector<8x128xf32> -> vector<8x128xf32>
    %115 = arith.addf %111, %114 : vector<8x128xf32>
    %116 = vector.extract_strided_slice %115 {offsets = [0, 0], sizes = [8, 96], strides = [1, 1]} : vector<8x128xf32> to vector<8x96xf32>
    %117 = arith.negf %116 : vector<8x96xf32>
    %118 = math.exp %117 : vector<8x96xf32>
    %cst_41 = arith.constant 1.000000e+00 : f32
    %119 = vector.broadcast %cst_41 : f32 to vector<8x96xf32>
    %120 = arith.addf %119, %118 : vector<8x96xf32>
    %121 = arith.divf %119, %120 : vector<8x96xf32>
    %122 = vector.extract_strided_slice %115 {offsets = [0, 96], sizes = [8, 32], strides = [1, 1]} : vector<8x128xf32> to vector<8x32xf32>
    %123 = math.tanh %122 : vector<8x32xf32>
    %124 = vector.extract_strided_slice %121 {offsets = [0, 0], sizes = [8, 32], strides = [1, 1]} : vector<8x96xf32> to vector<8x32xf32>
    %125 = vector.extract_strided_slice %121 {offsets = [0, 32], sizes = [8, 32], strides = [1, 1]} : vector<8x96xf32> to vector<8x32xf32>
    %126 = vector.extract_strided_slice %121 {offsets = [0, 64], sizes = [8, 32], strides = [1, 1]} : vector<8x96xf32> to vector<8x32xf32>
    %127 = arith.mulf %125, %105 : vector<8x32xf32>
    %128 = arith.mulf %124, %123 : vector<8x32xf32>
    %129 = arith.addf %127, %128 : vector<8x32xf32>
    %130 = math.tanh %129 : vector<8x32xf32>
    %131 = arith.mulf %126, %130 : vector<8x32xf32>
    %c5_i32 = arith.constant 5 : i32
    %c8_i32_42 = arith.constant 8 : i32
    %132 = arith.muli %c5_i32, %c8_i32_42 : i32
    %133 = tpu.assume_multiple %132, 8 : i32
    %134 = arith.index_cast %133 : i32 to index
    %c0_43 = arith.constant 0 : index
    %135 = vector.load %arg9[%134, %c0_43] : memref<64x128xf32, #tpu.memory_space<vmem>>, vector<8x128xf32>
    %136 = arith.truncf %131 : vector<8x32xf32> to vector<8x32xbf16>
    %c0_44 = arith.constant 0 : index
    %c0_45 = arith.constant 0 : index
    %137 = vector.load %arg3[%c0_44, %c0_45] : memref<32x128xbf16, #tpu.memory_space<vmem>>, vector<32x128xbf16>
    %cst_46 = arith.constant dense<0.000000e+00> : vector<8x128xf32>
    %138 = tpu.matmul %136, %137, %cst_46 {dimension_numbers = #tpu.dot_dimension_numbers<[1], [0], [0], [1], [0, 0, 1, 1], [], []>} : vector<8x32xbf16>, vector<32x128xbf16>, vector<8x128xf32> -> vector<8x128xf32>
    %139 = arith.addf %135, %138 : vector<8x128xf32>
    %140 = vector.extract_strided_slice %139 {offsets = [0, 0], sizes = [8, 96], strides = [1, 1]} : vector<8x128xf32> to vector<8x96xf32>
    %141 = arith.negf %140 : vector<8x96xf32>
    %142 = math.exp %141 : vector<8x96xf32>
    %cst_47 = arith.constant 1.000000e+00 : f32
    %143 = vector.broadcast %cst_47 : f32 to vector<8x96xf32>
    %144 = arith.addf %143, %142 : vector<8x96xf32>
    %145 = arith.divf %143, %144 : vector<8x96xf32>
    %146 = vector.extract_strided_slice %139 {offsets = [0, 96], sizes = [8, 32], strides = [1, 1]} : vector<8x128xf32> to vector<8x32xf32>
    %147 = math.tanh %146 : vector<8x32xf32>
    %148 = vector.extract_strided_slice %145 {offsets = [0, 0], sizes = [8, 32], strides = [1, 1]} : vector<8x96xf32> to vector<8x32xf32>
    %149 = vector.extract_strided_slice %145 {offsets = [0, 32], sizes = [8, 32], strides = [1, 1]} : vector<8x96xf32> to vector<8x32xf32>
    %150 = vector.extract_strided_slice %145 {offsets = [0, 64], sizes = [8, 32], strides = [1, 1]} : vector<8x96xf32> to vector<8x32xf32>
    %151 = arith.mulf %149, %129 : vector<8x32xf32>
    %152 = arith.mulf %148, %147 : vector<8x32xf32>
    %153 = arith.addf %151, %152 : vector<8x32xf32>
    %154 = math.tanh %153 : vector<8x32xf32>
    %155 = arith.mulf %150, %154 : vector<8x32xf32>
    %c6_i32 = arith.constant 6 : i32
    %c8_i32_48 = arith.constant 8 : i32
    %156 = arith.muli %c6_i32, %c8_i32_48 : i32
    %157 = tpu.assume_multiple %156, 8 : i32
    %158 = arith.index_cast %157 : i32 to index
    %c0_49 = arith.constant 0 : index
    %159 = vector.load %arg9[%158, %c0_49] : memref<64x128xf32, #tpu.memory_space<vmem>>, vector<8x128xf32>
    %160 = arith.truncf %155 : vector<8x32xf32> to vector<8x32xbf16>
    %c0_50 = arith.constant 0 : index
    %c0_51 = arith.constant 0 : index
    %161 = vector.load %arg3[%c0_50, %c0_51] : memref<32x128xbf16, #tpu.memory_space<vmem>>, vector<32x128xbf16>
    %cst_52 = arith.constant dense<0.000000e+00> : vector<8x128xf32>
    %162 = tpu.matmul %160, %161, %cst_52 {dimension_numbers = #tpu.dot_dimension_numbers<[1], [0], [0], [1], [0, 0, 1, 1], [], []>} : vector<8x32xbf16>, vector<32x128xbf16>, vector<8x128xf32> -> vector<8x128xf32>
    %163 = arith.addf %159, %162 : vector<8x128xf32>
    %164 = vector.extract_strided_slice %163 {offsets = [0, 0], sizes = [8, 96], strides = [1, 1]} : vector<8x128xf32> to vector<8x96xf32>
    %165 = arith.negf %164 : vector<8x96xf32>
    %166 = math.exp %165 : vector<8x96xf32>
    %cst_53 = arith.constant 1.000000e+00 : f32
    %167 = vector.broadcast %cst_53 : f32 to vector<8x96xf32>
    %168 = arith.addf %167, %166 : vector<8x96xf32>
    %169 = arith.divf %167, %168 : vector<8x96xf32>
    %170 = vector.extract_strided_slice %163 {offsets = [0, 96], sizes = [8, 32], strides = [1, 1]} : vector<8x128xf32> to vector<8x32xf32>
    %171 = math.tanh %170 : vector<8x32xf32>
    %172 = vector.extract_strided_slice %169 {offsets = [0, 0], sizes = [8, 32], strides = [1, 1]} : vector<8x96xf32> to vector<8x32xf32>
    %173 = vector.extract_strided_slice %169 {offsets = [0, 32], sizes = [8, 32], strides = [1, 1]} : vector<8x96xf32> to vector<8x32xf32>
    %174 = vector.extract_strided_slice %169 {offsets = [0, 64], sizes = [8, 32], strides = [1, 1]} : vector<8x96xf32> to vector<8x32xf32>
    %175 = arith.mulf %173, %153 : vector<8x32xf32>
    %176 = arith.mulf %172, %171 : vector<8x32xf32>
    %177 = arith.addf %175, %176 : vector<8x32xf32>
    %178 = math.tanh %177 : vector<8x32xf32>
    %179 = arith.mulf %174, %178 : vector<8x32xf32>
    %c7_i32 = arith.constant 7 : i32
    %c8_i32_54 = arith.constant 8 : i32
    %180 = arith.muli %c7_i32, %c8_i32_54 : i32
    %181 = tpu.assume_multiple %180, 8 : i32
    %182 = arith.index_cast %181 : i32 to index
    %c0_55 = arith.constant 0 : index
    %183 = vector.load %arg9[%182, %c0_55] : memref<64x128xf32, #tpu.memory_space<vmem>>, vector<8x128xf32>
    %184 = arith.truncf %179 : vector<8x32xf32> to vector<8x32xbf16>
    %c0_56 = arith.constant 0 : index
    %c0_57 = arith.constant 0 : index
    %185 = vector.load %arg3[%c0_56, %c0_57] : memref<32x128xbf16, #tpu.memory_space<vmem>>, vector<32x128xbf16>
    %cst_58 = arith.constant dense<0.000000e+00> : vector<8x128xf32>
    %186 = tpu.matmul %184, %185, %cst_58 {dimension_numbers = #tpu.dot_dimension_numbers<[1], [0], [0], [1], [0, 0, 1, 1], [], []>} : vector<8x32xbf16>, vector<32x128xbf16>, vector<8x128xf32> -> vector<8x128xf32>
    %187 = arith.addf %183, %186 : vector<8x128xf32>
    %188 = vector.extract_strided_slice %187 {offsets = [0, 0], sizes = [8, 96], strides = [1, 1]} : vector<8x128xf32> to vector<8x96xf32>
    %189 = arith.negf %188 : vector<8x96xf32>
    %190 = math.exp %189 : vector<8x96xf32>
    %cst_59 = arith.constant 1.000000e+00 : f32
    %191 = vector.broadcast %cst_59 : f32 to vector<8x96xf32>
    %192 = arith.addf %191, %190 : vector<8x96xf32>
    %193 = arith.divf %191, %192 : vector<8x96xf32>
    %194 = vector.extract_strided_slice %187 {offsets = [0, 96], sizes = [8, 32], strides = [1, 1]} : vector<8x128xf32> to vector<8x32xf32>
    %195 = math.tanh %194 : vector<8x32xf32>
    %196 = vector.extract_strided_slice %193 {offsets = [0, 0], sizes = [8, 32], strides = [1, 1]} : vector<8x96xf32> to vector<8x32xf32>
    %197 = vector.extract_strided_slice %193 {offsets = [0, 32], sizes = [8, 32], strides = [1, 1]} : vector<8x96xf32> to vector<8x32xf32>
    %198 = vector.extract_strided_slice %193 {offsets = [0, 64], sizes = [8, 32], strides = [1, 1]} : vector<8x96xf32> to vector<8x32xf32>
    %199 = arith.mulf %197, %177 : vector<8x32xf32>
    %200 = arith.mulf %196, %195 : vector<8x32xf32>
    %201 = arith.addf %199, %200 : vector<8x32xf32>
    %202 = math.tanh %201 : vector<8x32xf32>
    %203 = arith.mulf %198, %202 : vector<8x32xf32>
    %c8_i32_60 = arith.constant 8 : i32
    %c0_61 = arith.constant 0 : index
    %c0_62 = arith.constant 0 : index
    %204 = vector.load %arg7[%c0_61, %c0_62] : memref<8x32xf32, #tpu.memory_space<vmem>>, vector<8x32xf32>
    tpu.vector_store %arg7[%c0_61, %c0_62], %203 {strides = array<i32>} : memref<8x32xf32, #tpu.memory_space<vmem>>, vector<8x32xf32>,
    %c0_63 = arith.constant 0 : index
    %c0_64 = arith.constant 0 : index
    %205 = vector.load %arg8[%c0_63, %c0_64] : memref<8x32xf32, #tpu.memory_space<vmem>>, vector<8x32xf32>
    tpu.vector_store %arg8[%c0_63, %c0_64], %201 {strides = array<i32>} : memref<8x32xf32, #tpu.memory_space<vmem>>, vector<8x32xf32>,
    %c0_i32_65 = arith.constant 0 : i32
    %206 = arith.cmpi eq, %arg0, %c0_i32_65 : i32
    %207 = arith.extui %206 : i1 to i32
    %c0_i32_66 = arith.constant 0 : i32
    %208 = arith.cmpi ne, %207, %c0_i32_66 : i32
    scf.if %208 {
      %c0_67 = arith.constant 0 : index
      %c0_68 = arith.constant 0 : index
      %209 = vector.load %arg5[%c0_67, %c0_68] : memref<8x32xf32, #tpu.memory_space<vmem>>, vector<8x32xf32>
      tpu.vector_store %arg5[%c0_67, %c0_68], %203 {strides = array<i32>} : memref<8x32xf32, #tpu.memory_space<vmem>>, vector<8x32xf32>,
      %c0_69 = arith.constant 0 : index
      %c0_70 = arith.constant 0 : index
      %210 = vector.load %arg6[%c0_69, %c0_70] : memref<8x32xf32, #tpu.memory_space<vmem>>, vector<8x32xf32>
      tpu.vector_store %arg6[%c0_69, %c0_70], %201 {strides = array<i32>} : memref<8x32xf32, #tpu.memory_space<vmem>>, vector<8x32xf32>,
    } else {
    }
    return
  }
  func.func @transform_0(%arg0: i32) -> (i32, i32) {
    %c0_i32 = arith.constant 0 : i32
    %c0_i32_0 = arith.constant 0 : i32
    return %arg0, %c0_i32 : i32, i32
  }
  func.func @transform_1(%arg0: i32) -> (i32, i32) {
    %c0_i32 = arith.constant 0 : i32
    %c0_i32_0 = arith.constant 0 : i32
    %c0_i32_1 = arith.constant 0 : i32
    return %c0_i32, %c0_i32_0 : i32, i32
  }
  func.func @transform_2(%arg0: i32) -> (i32, i32) {
    %c0_i32 = arith.constant 0 : i32
    %c0_i32_0 = arith.constant 0 : i32
    %c0_i32_1 = arith.constant 0 : i32
    return %c0_i32, %c0_i32_0 : i32, i32
  }
  func.func @transform_3(%arg0: i32) -> (i32, i32) {
    %c0_i32 = arith.constant 0 : i32
    %c0_i32_0 = arith.constant 0 : i32
    %c0_i32_1 = arith.constant 0 : i32
    return %c0_i32, %c0_i32_0 : i32, i32
  }
  func.func @transform_4(%arg0: i32) -> (i32, i32) {
    %c0_i32 = arith.constant 0 : i32
    %c0_i32_0 = arith.constant 0 : i32
    %c0_i32_1 = arith.constant 0 : i32
    return %c0_i32, %c0_i32_0 : i32, i32
  }
  func.func @transform_5(%arg0: i32) -> (i32, i32) {
    %c0_i32 = arith.constant 0 : i32
    %c0_i32_0 = arith.constant 0 : i32
    %c0_i32_1 = arith.constant 0 : i32
    return %c0_i32, %c0_i32_0 : i32, i32
  }
}

module attributes {stable_mosaic.version = 11 : i64} {
  func.func @kernel(%arg0: i32, %arg1: memref<64x32xbf16, #tpu.memory_space<vmem>>, %arg2: memref<32x128xbf16, #tpu.memory_space<vmem>>, %arg3: memref<32x128xbf16, #tpu.memory_space<vmem>>, %arg4: memref<1x128xf32, #tpu.memory_space<vmem>>, %arg5: memref<64x32xbf16, #tpu.memory_space<vmem>>, %arg6: memref<8x32xf32, #tpu.memory_space<vmem>>, %arg7: memref<8x32xf32, #tpu.memory_space<vmem>>, %arg8: memref<8x32xf32, #tpu.memory_space<vmem>>, %arg9: memref<8x32xf32, #tpu.memory_space<vmem>>, %arg10: memref<64x128xf32, #tpu.memory_space<vmem>>, %arg11: memref<64x32xf32, #tpu.memory_space<vmem>>) attributes {dimension_semantics = [#tpu.dimension_semantics<arbitrary>], iteration_bounds = array<i64: 1>, scalar_prefetch = 0 : i64, scratch_operands = 4 : i64, tpu.core_type = #tpu.core_type<tc>, window_params = [{transform_indices = @transform_0, window_bounds = array<i64: 64, 32>}, {pipeline_mode = #tpu.pipeline_mode<synchronous>, transform_indices = @transform_1, window_bounds = array<i64: 32, 128>}, {pipeline_mode = #tpu.pipeline_mode<synchronous>, transform_indices = @transform_2, window_bounds = array<i64: 32, 128>}, {pipeline_mode = #tpu.pipeline_mode<synchronous>, transform_indices = @transform_3, window_bounds = array<i64: 1, 128>}, {transform_indices = @transform_4, window_bounds = array<i64: 64, 32>}, {pipeline_mode = #tpu.pipeline_mode<synchronous>, transform_indices = @transform_5, window_bounds = array<i64: 8, 32>}, {pipeline_mode = #tpu.pipeline_mode<synchronous>, transform_indices = @transform_6, window_bounds = array<i64: 8, 32>}]} {
    %c0_i32 = arith.constant 0 : i32
    %0 = arith.cmpi eq, %arg0, %c0_i32 : i32
    %1 = arith.extui %0 : i1 to i32
    %c0_i32_0 = arith.constant 0 : i32
    %2 = arith.cmpi ne, %1, %c0_i32_0 : i32
    scf.if %2 {
      %cst_79 = arith.constant 0.000000e+00 : f32
      %228 = vector.broadcast %cst_79 : f32 to vector<8x32xf32>
      %c0_80 = arith.constant 0 : index
      %c0_81 = arith.constant 0 : index
      %229 = vector.load %arg8[%c0_80, %c0_81] : memref<8x32xf32, #tpu.memory_space<vmem>>, vector<8x32xf32>
      tpu.vector_store %arg8[%c0_80, %c0_81], %228 {strides = array<i32>} : memref<8x32xf32, #tpu.memory_space<vmem>>, vector<8x32xf32>,
      %cst_82 = arith.constant 0.000000e+00 : f32
      %230 = vector.broadcast %cst_82 : f32 to vector<8x32xf32>
      %c0_83 = arith.constant 0 : index
      %c0_84 = arith.constant 0 : index
      %231 = vector.load %arg9[%c0_83, %c0_84] : memref<8x32xf32, #tpu.memory_space<vmem>>, vector<8x32xf32>
      tpu.vector_store %arg9[%c0_83, %c0_84], %230 {strides = array<i32>} : memref<8x32xf32, #tpu.memory_space<vmem>>, vector<8x32xf32>,
    } else {
    }
    %c0 = arith.constant 0 : index
    %c0_1 = arith.constant 0 : index
    %3 = vector.load %arg1[%c0, %c0_1] : memref<64x32xbf16, #tpu.memory_space<vmem>>, vector<64x32xbf16>
    %c0_2 = arith.constant 0 : index
    %c0_3 = arith.constant 0 : index
    %4 = vector.load %arg2[%c0_2, %c0_3] : memref<32x128xbf16, #tpu.memory_space<vmem>>, vector<32x128xbf16>
    %cst = arith.constant dense<0.000000e+00> : vector<64x128xf32>
    %5 = tpu.matmul %3, %4, %cst {dimension_numbers = #tpu.dot_dimension_numbers<[1], [0], [0], [1], [0, 0, 1, 1], [], []>} : vector<64x32xbf16>, vector<32x128xbf16>, vector<64x128xf32> -> vector<64x128xf32>
    %c0_4 = arith.constant 0 : index
    %c0_5 = arith.constant 0 : index
    %6 = vector.load %arg4[%c0_4, %c0_5] : memref<1x128xf32, #tpu.memory_space<vmem>>, vector<1x128xf32>
    %7 = vector.broadcast %6 : vector<1x128xf32> to vector<64x128xf32>
    %8 = arith.addf %5, %7 : vector<64x128xf32>
    %c0_6 = arith.constant 0 : index
    %c0_7 = arith.constant 0 : index
    %9 = vector.load %arg10[%c0_6, %c0_7] : memref<64x128xf32, #tpu.memory_space<vmem>>, vector<64x128xf32>
    tpu.vector_store %arg10[%c0_6, %c0_7], %8 {strides = array<i32>} : memref<64x128xf32, #tpu.memory_space<vmem>>, vector<64x128xf32>,
    %c0_8 = arith.constant 0 : index
    %c0_9 = arith.constant 0 : index
    %10 = vector.load %arg8[%c0_8, %c0_9] : memref<8x32xf32, #tpu.memory_space<vmem>>, vector<8x32xf32>
    %c0_10 = arith.constant 0 : index
    %c0_11 = arith.constant 0 : index
    %11 = vector.load %arg9[%c0_10, %c0_11] : memref<8x32xf32, #tpu.memory_space<vmem>>, vector<8x32xf32>
    %c0_i32_12 = arith.constant 0 : i32
    %c8_i32 = arith.constant 8 : i32
    %12 = arith.muli %c0_i32_12, %c8_i32 : i32
    %13 = tpu.assume_multiple %12, 8 : i32
    %14 = arith.index_cast %13 : i32 to index
    %c0_13 = arith.constant 0 : index
    %15 = vector.load %arg10[%14, %c0_13] : memref<64x128xf32, #tpu.memory_space<vmem>>, vector<8x128xf32>
    %16 = arith.truncf %10 : vector<8x32xf32> to vector<8x32xbf16>
    %c0_14 = arith.constant 0 : index
    %c0_15 = arith.constant 0 : index
    %17 = vector.load %arg3[%c0_14, %c0_15] : memref<32x128xbf16, #tpu.memory_space<vmem>>, vector<32x128xbf16>
    %cst_16 = arith.constant dense<0.000000e+00> : vector<8x128xf32>
    %18 = tpu.matmul %16, %17, %cst_16 {dimension_numbers = #tpu.dot_dimension_numbers<[1], [0], [0], [1], [0, 0, 1, 1], [], []>} : vector<8x32xbf16>, vector<32x128xbf16>, vector<8x128xf32> -> vector<8x128xf32>
    %19 = arith.addf %15, %18 : vector<8x128xf32>
    %20 = vector.extract_strided_slice %19 {offsets = [0, 0], sizes = [8, 96], strides = [1, 1]} : vector<8x128xf32> to vector<8x96xf32>
    %21 = arith.negf %20 : vector<8x96xf32>
    %22 = math.exp %21 : vector<8x96xf32>
    %cst_17 = arith.constant 1.000000e+00 : f32
    %23 = vector.broadcast %cst_17 : f32 to vector<8x96xf32>
    %24 = arith.addf %23, %22 : vector<8x96xf32>
    %25 = arith.divf %23, %24 : vector<8x96xf32>
    %26 = vector.extract_strided_slice %19 {offsets = [0, 96], sizes = [8, 32], strides = [1, 1]} : vector<8x128xf32> to vector<8x32xf32>
    %27 = math.tanh %26 : vector<8x32xf32>
    %28 = vector.extract_strided_slice %25 {offsets = [0, 0], sizes = [8, 32], strides = [1, 1]} : vector<8x96xf32> to vector<8x32xf32>
    %29 = vector.extract_strided_slice %25 {offsets = [0, 32], sizes = [8, 32], strides = [1, 1]} : vector<8x96xf32> to vector<8x32xf32>
    %30 = vector.extract_strided_slice %25 {offsets = [0, 64], sizes = [8, 32], strides = [1, 1]} : vector<8x96xf32> to vector<8x32xf32>
    %31 = arith.mulf %29, %11 : vector<8x32xf32>
    %32 = arith.mulf %28, %27 : vector<8x32xf32>
    %33 = arith.addf %31, %32 : vector<8x32xf32>
    %34 = math.tanh %33 : vector<8x32xf32>
    %35 = arith.mulf %30, %34 : vector<8x32xf32>
    %36 = arith.index_cast %13 : i32 to index
    %c0_18 = arith.constant 0 : index
    %37 = vector.load %arg11[%36, %c0_18] : memref<64x32xf32, #tpu.memory_space<vmem>>, vector<8x32xf32>
    tpu.vector_store %arg11[%36, %c0_18], %35 {strides = array<i32>} : memref<64x32xf32, #tpu.memory_space<vmem>>, vector<8x32xf32>,
    %c1_i32 = arith.constant 1 : i32
    %c8_i32_19 = arith.constant 8 : i32
    %38 = arith.muli %c1_i32, %c8_i32_19 : i32
    %39 = tpu.assume_multiple %38, 8 : i32
    %40 = arith.index_cast %39 : i32 to index
    %c0_20 = arith.constant 0 : index
    %41 = vector.load %arg10[%40, %c0_20] : memref<64x128xf32, #tpu.memory_space<vmem>>, vector<8x128xf32>
    %42 = arith.truncf %35 : vector<8x32xf32> to vector<8x32xbf16>
    %c0_21 = arith.constant 0 : index
    %c0_22 = arith.constant 0 : index
    %43 = vector.load %arg3[%c0_21, %c0_22] : memref<32x128xbf16, #tpu.memory_space<vmem>>, vector<32x128xbf16>
    %cst_23 = arith.constant dense<0.000000e+00> : vector<8x128xf32>
    %44 = tpu.matmul %42, %43, %cst_23 {dimension_numbers = #tpu.dot_dimension_numbers<[1], [0], [0], [1], [0, 0, 1, 1], [], []>} : vector<8x32xbf16>, vector<32x128xbf16>, vector<8x128xf32> -> vector<8x128xf32>
    %45 = arith.addf %41, %44 : vector<8x128xf32>
    %46 = vector.extract_strided_slice %45 {offsets = [0, 0], sizes = [8, 96], strides = [1, 1]} : vector<8x128xf32> to vector<8x96xf32>
    %47 = arith.negf %46 : vector<8x96xf32>
    %48 = math.exp %47 : vector<8x96xf32>
    %cst_24 = arith.constant 1.000000e+00 : f32
    %49 = vector.broadcast %cst_24 : f32 to vector<8x96xf32>
    %50 = arith.addf %49, %48 : vector<8x96xf32>
    %51 = arith.divf %49, %50 : vector<8x96xf32>
    %52 = vector.extract_strided_slice %45 {offsets = [0, 96], sizes = [8, 32], strides = [1, 1]} : vector<8x128xf32> to vector<8x32xf32>
    %53 = math.tanh %52 : vector<8x32xf32>
    %54 = vector.extract_strided_slice %51 {offsets = [0, 0], sizes = [8, 32], strides = [1, 1]} : vector<8x96xf32> to vector<8x32xf32>
    %55 = vector.extract_strided_slice %51 {offsets = [0, 32], sizes = [8, 32], strides = [1, 1]} : vector<8x96xf32> to vector<8x32xf32>
    %56 = vector.extract_strided_slice %51 {offsets = [0, 64], sizes = [8, 32], strides = [1, 1]} : vector<8x96xf32> to vector<8x32xf32>
    %57 = arith.mulf %55, %33 : vector<8x32xf32>
    %58 = arith.mulf %54, %53 : vector<8x32xf32>
    %59 = arith.addf %57, %58 : vector<8x32xf32>
    %60 = math.tanh %59 : vector<8x32xf32>
    %61 = arith.mulf %56, %60 : vector<8x32xf32>
    %62 = arith.index_cast %39 : i32 to index
    %c0_25 = arith.constant 0 : index
    %63 = vector.load %arg11[%62, %c0_25] : memref<64x32xf32, #tpu.memory_space<vmem>>, vector<8x32xf32>
    tpu.vector_store %arg11[%62, %c0_25], %61 {strides = array<i32>} : memref<64x32xf32, #tpu.memory_space<vmem>>, vector<8x32xf32>,
    %c2_i32 = arith.constant 2 : i32
    %c8_i32_26 = arith.constant 8 : i32
    %64 = arith.muli %c2_i32, %c8_i32_26 : i32
    %65 = tpu.assume_multiple %64, 8 : i32
    %66 = arith.index_cast %65 : i32 to index
    %c0_27 = arith.constant 0 : index
    %67 = vector.load %arg10[%66, %c0_27] : memref<64x128xf32, #tpu.memory_space<vmem>>, vector<8x128xf32>
    %68 = arith.truncf %61 : vector<8x32xf32> to vector<8x32xbf16>
    %c0_28 = arith.constant 0 : index
    %c0_29 = arith.constant 0 : index
    %69 = vector.load %arg3[%c0_28, %c0_29] : memref<32x128xbf16, #tpu.memory_space<vmem>>, vector<32x128xbf16>
    %cst_30 = arith.constant dense<0.000000e+00> : vector<8x128xf32>
    %70 = tpu.matmul %68, %69, %cst_30 {dimension_numbers = #tpu.dot_dimension_numbers<[1], [0], [0], [1], [0, 0, 1, 1], [], []>} : vector<8x32xbf16>, vector<32x128xbf16>, vector<8x128xf32> -> vector<8x128xf32>
    %71 = arith.addf %67, %70 : vector<8x128xf32>
    %72 = vector.extract_strided_slice %71 {offsets = [0, 0], sizes = [8, 96], strides = [1, 1]} : vector<8x128xf32> to vector<8x96xf32>
    %73 = arith.negf %72 : vector<8x96xf32>
    %74 = math.exp %73 : vector<8x96xf32>
    %cst_31 = arith.constant 1.000000e+00 : f32
    %75 = vector.broadcast %cst_31 : f32 to vector<8x96xf32>
    %76 = arith.addf %75, %74 : vector<8x96xf32>
    %77 = arith.divf %75, %76 : vector<8x96xf32>
    %78 = vector.extract_strided_slice %71 {offsets = [0, 96], sizes = [8, 32], strides = [1, 1]} : vector<8x128xf32> to vector<8x32xf32>
    %79 = math.tanh %78 : vector<8x32xf32>
    %80 = vector.extract_strided_slice %77 {offsets = [0, 0], sizes = [8, 32], strides = [1, 1]} : vector<8x96xf32> to vector<8x32xf32>
    %81 = vector.extract_strided_slice %77 {offsets = [0, 32], sizes = [8, 32], strides = [1, 1]} : vector<8x96xf32> to vector<8x32xf32>
    %82 = vector.extract_strided_slice %77 {offsets = [0, 64], sizes = [8, 32], strides = [1, 1]} : vector<8x96xf32> to vector<8x32xf32>
    %83 = arith.mulf %81, %59 : vector<8x32xf32>
    %84 = arith.mulf %80, %79 : vector<8x32xf32>
    %85 = arith.addf %83, %84 : vector<8x32xf32>
    %86 = math.tanh %85 : vector<8x32xf32>
    %87 = arith.mulf %82, %86 : vector<8x32xf32>
    %88 = arith.index_cast %65 : i32 to index
    %c0_32 = arith.constant 0 : index
    %89 = vector.load %arg11[%88, %c0_32] : memref<64x32xf32, #tpu.memory_space<vmem>>, vector<8x32xf32>
    tpu.vector_store %arg11[%88, %c0_32], %87 {strides = array<i32>} : memref<64x32xf32, #tpu.memory_space<vmem>>, vector<8x32xf32>,
    %c3_i32 = arith.constant 3 : i32
    %c8_i32_33 = arith.constant 8 : i32
    %90 = arith.muli %c3_i32, %c8_i32_33 : i32
    %91 = tpu.assume_multiple %90, 8 : i32
    %92 = arith.index_cast %91 : i32 to index
    %c0_34 = arith.constant 0 : index
    %93 = vector.load %arg10[%92, %c0_34] : memref<64x128xf32, #tpu.memory_space<vmem>>, vector<8x128xf32>
    %94 = arith.truncf %87 : vector<8x32xf32> to vector<8x32xbf16>
    %c0_35 = arith.constant 0 : index
    %c0_36 = arith.constant 0 : index
    %95 = vector.load %arg3[%c0_35, %c0_36] : memref<32x128xbf16, #tpu.memory_space<vmem>>, vector<32x128xbf16>
    %cst_37 = arith.constant dense<0.000000e+00> : vector<8x128xf32>
    %96 = tpu.matmul %94, %95, %cst_37 {dimension_numbers = #tpu.dot_dimension_numbers<[1], [0], [0], [1], [0, 0, 1, 1], [], []>} : vector<8x32xbf16>, vector<32x128xbf16>, vector<8x128xf32> -> vector<8x128xf32>
    %97 = arith.addf %93, %96 : vector<8x128xf32>
    %98 = vector.extract_strided_slice %97 {offsets = [0, 0], sizes = [8, 96], strides = [1, 1]} : vector<8x128xf32> to vector<8x96xf32>
    %99 = arith.negf %98 : vector<8x96xf32>
    %100 = math.exp %99 : vector<8x96xf32>
    %cst_38 = arith.constant 1.000000e+00 : f32
    %101 = vector.broadcast %cst_38 : f32 to vector<8x96xf32>
    %102 = arith.addf %101, %100 : vector<8x96xf32>
    %103 = arith.divf %101, %102 : vector<8x96xf32>
    %104 = vector.extract_strided_slice %97 {offsets = [0, 96], sizes = [8, 32], strides = [1, 1]} : vector<8x128xf32> to vector<8x32xf32>
    %105 = math.tanh %104 : vector<8x32xf32>
    %106 = vector.extract_strided_slice %103 {offsets = [0, 0], sizes = [8, 32], strides = [1, 1]} : vector<8x96xf32> to vector<8x32xf32>
    %107 = vector.extract_strided_slice %103 {offsets = [0, 32], sizes = [8, 32], strides = [1, 1]} : vector<8x96xf32> to vector<8x32xf32>
    %108 = vector.extract_strided_slice %103 {offsets = [0, 64], sizes = [8, 32], strides = [1, 1]} : vector<8x96xf32> to vector<8x32xf32>
    %109 = arith.mulf %107, %85 : vector<8x32xf32>
    %110 = arith.mulf %106, %105 : vector<8x32xf32>
    %111 = arith.addf %109, %110 : vector<8x32xf32>
    %112 = math.tanh %111 : vector<8x32xf32>
    %113 = arith.mulf %108, %112 : vector<8x32xf32>
    %114 = arith.index_cast %91 : i32 to index
    %c0_39 = arith.constant 0 : index
    %115 = vector.load %arg11[%114, %c0_39] : memref<64x32xf32, #tpu.memory_space<vmem>>, vector<8x32xf32>
    tpu.vector_store %arg11[%114, %c0_39], %113 {strides = array<i32>} : memref<64x32xf32, #tpu.memory_space<vmem>>, vector<8x32xf32>,
    %c4_i32 = arith.constant 4 : i32
    %c8_i32_40 = arith.constant 8 : i32
    %116 = arith.muli %c4_i32, %c8_i32_40 : i32
    %117 = tpu.assume_multiple %116, 8 : i32
    %118 = arith.index_cast %117 : i32 to index
    %c0_41 = arith.constant 0 : index
    %119 = vector.load %arg10[%118, %c0_41] : memref<64x128xf32, #tpu.memory_space<vmem>>, vector<8x128xf32>
    %120 = arith.truncf %113 : vector<8x32xf32> to vector<8x32xbf16>
    %c0_42 = arith.constant 0 : index
    %c0_43 = arith.constant 0 : index
    %121 = vector.load %arg3[%c0_42, %c0_43] : memref<32x128xbf16, #tpu.memory_space<vmem>>, vector<32x128xbf16>
    %cst_44 = arith.constant dense<0.000000e+00> : vector<8x128xf32>
    %122 = tpu.matmul %120, %121, %cst_44 {dimension_numbers = #tpu.dot_dimension_numbers<[1], [0], [0], [1], [0, 0, 1, 1], [], []>} : vector<8x32xbf16>, vector<32x128xbf16>, vector<8x128xf32> -> vector<8x128xf32>
    %123 = arith.addf %119, %122 : vector<8x128xf32>
    %124 = vector.extract_strided_slice %123 {offsets = [0, 0], sizes = [8, 96], strides = [1, 1]} : vector<8x128xf32> to vector<8x96xf32>
    %125 = arith.negf %124 : vector<8x96xf32>
    %126 = math.exp %125 : vector<8x96xf32>
    %cst_45 = arith.constant 1.000000e+00 : f32
    %127 = vector.broadcast %cst_45 : f32 to vector<8x96xf32>
    %128 = arith.addf %127, %126 : vector<8x96xf32>
    %129 = arith.divf %127, %128 : vector<8x96xf32>
    %130 = vector.extract_strided_slice %123 {offsets = [0, 96], sizes = [8, 32], strides = [1, 1]} : vector<8x128xf32> to vector<8x32xf32>
    %131 = math.tanh %130 : vector<8x32xf32>
    %132 = vector.extract_strided_slice %129 {offsets = [0, 0], sizes = [8, 32], strides = [1, 1]} : vector<8x96xf32> to vector<8x32xf32>
    %133 = vector.extract_strided_slice %129 {offsets = [0, 32], sizes = [8, 32], strides = [1, 1]} : vector<8x96xf32> to vector<8x32xf32>
    %134 = vector.extract_strided_slice %129 {offsets = [0, 64], sizes = [8, 32], strides = [1, 1]} : vector<8x96xf32> to vector<8x32xf32>
    %135 = arith.mulf %133, %111 : vector<8x32xf32>
    %136 = arith.mulf %132, %131 : vector<8x32xf32>
    %137 = arith.addf %135, %136 : vector<8x32xf32>
    %138 = math.tanh %137 : vector<8x32xf32>
    %139 = arith.mulf %134, %138 : vector<8x32xf32>
    %140 = arith.index_cast %117 : i32 to index
    %c0_46 = arith.constant 0 : index
    %141 = vector.load %arg11[%140, %c0_46] : memref<64x32xf32, #tpu.memory_space<vmem>>, vector<8x32xf32>
    tpu.vector_store %arg11[%140, %c0_46], %139 {strides = array<i32>} : memref<64x32xf32, #tpu.memory_space<vmem>>, vector<8x32xf32>,
    %c5_i32 = arith.constant 5 : i32
    %c8_i32_47 = arith.constant 8 : i32
    %142 = arith.muli %c5_i32, %c8_i32_47 : i32
    %143 = tpu.assume_multiple %142, 8 : i32
    %144 = arith.index_cast %143 : i32 to index
    %c0_48 = arith.constant 0 : index
    %145 = vector.load %arg10[%144, %c0_48] : memref<64x128xf32, #tpu.memory_space<vmem>>, vector<8x128xf32>
    %146 = arith.truncf %139 : vector<8x32xf32> to vector<8x32xbf16>
    %c0_49 = arith.constant 0 : index
    %c0_50 = arith.constant 0 : index
    %147 = vector.load %arg3[%c0_49, %c0_50] : memref<32x128xbf16, #tpu.memory_space<vmem>>, vector<32x128xbf16>
    %cst_51 = arith.constant dense<0.000000e+00> : vector<8x128xf32>
    %148 = tpu.matmul %146, %147, %cst_51 {dimension_numbers = #tpu.dot_dimension_numbers<[1], [0], [0], [1], [0, 0, 1, 1], [], []>} : vector<8x32xbf16>, vector<32x128xbf16>, vector<8x128xf32> -> vector<8x128xf32>
    %149 = arith.addf %145, %148 : vector<8x128xf32>
    %150 = vector.extract_strided_slice %149 {offsets = [0, 0], sizes = [8, 96], strides = [1, 1]} : vector<8x128xf32> to vector<8x96xf32>
    %151 = arith.negf %150 : vector<8x96xf32>
    %152 = math.exp %151 : vector<8x96xf32>
    %cst_52 = arith.constant 1.000000e+00 : f32
    %153 = vector.broadcast %cst_52 : f32 to vector<8x96xf32>
    %154 = arith.addf %153, %152 : vector<8x96xf32>
    %155 = arith.divf %153, %154 : vector<8x96xf32>
    %156 = vector.extract_strided_slice %149 {offsets = [0, 96], sizes = [8, 32], strides = [1, 1]} : vector<8x128xf32> to vector<8x32xf32>
    %157 = math.tanh %156 : vector<8x32xf32>
    %158 = vector.extract_strided_slice %155 {offsets = [0, 0], sizes = [8, 32], strides = [1, 1]} : vector<8x96xf32> to vector<8x32xf32>
    %159 = vector.extract_strided_slice %155 {offsets = [0, 32], sizes = [8, 32], strides = [1, 1]} : vector<8x96xf32> to vector<8x32xf32>
    %160 = vector.extract_strided_slice %155 {offsets = [0, 64], sizes = [8, 32], strides = [1, 1]} : vector<8x96xf32> to vector<8x32xf32>
    %161 = arith.mulf %159, %137 : vector<8x32xf32>
    %162 = arith.mulf %158, %157 : vector<8x32xf32>
    %163 = arith.addf %161, %162 : vector<8x32xf32>
    %164 = math.tanh %163 : vector<8x32xf32>
    %165 = arith.mulf %160, %164 : vector<8x32xf32>
    %166 = arith.index_cast %143 : i32 to index
    %c0_53 = arith.constant 0 : index
    %167 = vector.load %arg11[%166, %c0_53] : memref<64x32xf32, #tpu.memory_space<vmem>>, vector<8x32xf32>
    tpu.vector_store %arg11[%166, %c0_53], %165 {strides = array<i32>} : memref<64x32xf32, #tpu.memory_space<vmem>>, vector<8x32xf32>,
    %c6_i32 = arith.constant 6 : i32
    %c8_i32_54 = arith.constant 8 : i32
    %168 = arith.muli %c6_i32, %c8_i32_54 : i32
    %169 = tpu.assume_multiple %168, 8 : i32
    %170 = arith.index_cast %169 : i32 to index
    %c0_55 = arith.constant 0 : index
    %171 = vector.load %arg10[%170, %c0_55] : memref<64x128xf32, #tpu.memory_space<vmem>>, vector<8x128xf32>
    %172 = arith.truncf %165 : vector<8x32xf32> to vector<8x32xbf16>
    %c0_56 = arith.constant 0 : index
    %c0_57 = arith.constant 0 : index
    %173 = vector.load %arg3[%c0_56, %c0_57] : memref<32x128xbf16, #tpu.memory_space<vmem>>, vector<32x128xbf16>
    %cst_58 = arith.constant dense<0.000000e+00> : vector<8x128xf32>
    %174 = tpu.matmul %172, %173, %cst_58 {dimension_numbers = #tpu.dot_dimension_numbers<[1], [0], [0], [1], [0, 0, 1, 1], [], []>} : vector<8x32xbf16>, vector<32x128xbf16>, vector<8x128xf32> -> vector<8x128xf32>
    %175 = arith.addf %171, %174 : vector<8x128xf32>
    %176 = vector.extract_strided_slice %175 {offsets = [0, 0], sizes = [8, 96], strides = [1, 1]} : vector<8x128xf32> to vector<8x96xf32>
    %177 = arith.negf %176 : vector<8x96xf32>
    %178 = math.exp %177 : vector<8x96xf32>
    %cst_59 = arith.constant 1.000000e+00 : f32
    %179 = vector.broadcast %cst_59 : f32 to vector<8x96xf32>
    %180 = arith.addf %179, %178 : vector<8x96xf32>
    %181 = arith.divf %179, %180 : vector<8x96xf32>
    %182 = vector.extract_strided_slice %175 {offsets = [0, 96], sizes = [8, 32], strides = [1, 1]} : vector<8x128xf32> to vector<8x32xf32>
    %183 = math.tanh %182 : vector<8x32xf32>
    %184 = vector.extract_strided_slice %181 {offsets = [0, 0], sizes = [8, 32], strides = [1, 1]} : vector<8x96xf32> to vector<8x32xf32>
    %185 = vector.extract_strided_slice %181 {offsets = [0, 32], sizes = [8, 32], strides = [1, 1]} : vector<8x96xf32> to vector<8x32xf32>
    %186 = vector.extract_strided_slice %181 {offsets = [0, 64], sizes = [8, 32], strides = [1, 1]} : vector<8x96xf32> to vector<8x32xf32>
    %187 = arith.mulf %185, %163 : vector<8x32xf32>
    %188 = arith.mulf %184, %183 : vector<8x32xf32>
    %189 = arith.addf %187, %188 : vector<8x32xf32>
    %190 = math.tanh %189 : vector<8x32xf32>
    %191 = arith.mulf %186, %190 : vector<8x32xf32>
    %192 = arith.index_cast %169 : i32 to index
    %c0_60 = arith.constant 0 : index
    %193 = vector.load %arg11[%192, %c0_60] : memref<64x32xf32, #tpu.memory_space<vmem>>, vector<8x32xf32>
    tpu.vector_store %arg11[%192, %c0_60], %191 {strides = array<i32>} : memref<64x32xf32, #tpu.memory_space<vmem>>, vector<8x32xf32>,
    %c7_i32 = arith.constant 7 : i32
    %c8_i32_61 = arith.constant 8 : i32
    %194 = arith.muli %c7_i32, %c8_i32_61 : i32
    %195 = tpu.assume_multiple %194, 8 : i32
    %196 = arith.index_cast %195 : i32 to index
    %c0_62 = arith.constant 0 : index
    %197 = vector.load %arg10[%196, %c0_62] : memref<64x128xf32, #tpu.memory_space<vmem>>, vector<8x128xf32>
    %198 = arith.truncf %191 : vector<8x32xf32> to vector<8x32xbf16>
    %c0_63 = arith.constant 0 : index
    %c0_64 = arith.constant 0 : index
    %199 = vector.load %arg3[%c0_63, %c0_64] : memref<32x128xbf16, #tpu.memory_space<vmem>>, vector<32x128xbf16>
    %cst_65 = arith.constant dense<0.000000e+00> : vector<8x128xf32>
    %200 = tpu.matmul %198, %199, %cst_65 {dimension_numbers = #tpu.dot_dimension_numbers<[1], [0], [0], [1], [0, 0, 1, 1], [], []>} : vector<8x32xbf16>, vector<32x128xbf16>, vector<8x128xf32> -> vector<8x128xf32>
    %201 = arith.addf %197, %200 : vector<8x128xf32>
    %202 = vector.extract_strided_slice %201 {offsets = [0, 0], sizes = [8, 96], strides = [1, 1]} : vector<8x128xf32> to vector<8x96xf32>
    %203 = arith.negf %202 : vector<8x96xf32>
    %204 = math.exp %203 : vector<8x96xf32>
    %cst_66 = arith.constant 1.000000e+00 : f32
    %205 = vector.broadcast %cst_66 : f32 to vector<8x96xf32>
    %206 = arith.addf %205, %204 : vector<8x96xf32>
    %207 = arith.divf %205, %206 : vector<8x96xf32>
    %208 = vector.extract_strided_slice %201 {offsets = [0, 96], sizes = [8, 32], strides = [1, 1]} : vector<8x128xf32> to vector<8x32xf32>
    %209 = math.tanh %208 : vector<8x32xf32>
    %210 = vector.extract_strided_slice %207 {offsets = [0, 0], sizes = [8, 32], strides = [1, 1]} : vector<8x96xf32> to vector<8x32xf32>
    %211 = vector.extract_strided_slice %207 {offsets = [0, 32], sizes = [8, 32], strides = [1, 1]} : vector<8x96xf32> to vector<8x32xf32>
    %212 = vector.extract_strided_slice %207 {offsets = [0, 64], sizes = [8, 32], strides = [1, 1]} : vector<8x96xf32> to vector<8x32xf32>
    %213 = arith.mulf %211, %189 : vector<8x32xf32>
    %214 = arith.mulf %210, %209 : vector<8x32xf32>
    %215 = arith.addf %213, %214 : vector<8x32xf32>
    %216 = math.tanh %215 : vector<8x32xf32>
    %217 = arith.mulf %212, %216 : vector<8x32xf32>
    %218 = arith.index_cast %195 : i32 to index
    %c0_67 = arith.constant 0 : index
    %219 = vector.load %arg11[%218, %c0_67] : memref<64x32xf32, #tpu.memory_space<vmem>>, vector<8x32xf32>
    tpu.vector_store %arg11[%218, %c0_67], %217 {strides = array<i32>} : memref<64x32xf32, #tpu.memory_space<vmem>>, vector<8x32xf32>,
    %c8_i32_68 = arith.constant 8 : i32
    %c0_69 = arith.constant 0 : index
    %c0_70 = arith.constant 0 : index
    %220 = vector.load %arg8[%c0_69, %c0_70] : memref<8x32xf32, #tpu.memory_space<vmem>>, vector<8x32xf32>
    tpu.vector_store %arg8[%c0_69, %c0_70], %217 {strides = array<i32>} : memref<8x32xf32, #tpu.memory_space<vmem>>, vector<8x32xf32>,
    %c0_71 = arith.constant 0 : index
    %c0_72 = arith.constant 0 : index
    %221 = vector.load %arg9[%c0_71, %c0_72] : memref<8x32xf32, #tpu.memory_space<vmem>>, vector<8x32xf32>
    tpu.vector_store %arg9[%c0_71, %c0_72], %215 {strides = array<i32>} : memref<8x32xf32, #tpu.memory_space<vmem>>, vector<8x32xf32>,
    %c0_73 = arith.constant 0 : index
    %c0_74 = arith.constant 0 : index
    %222 = vector.load %arg11[%c0_73, %c0_74] : memref<64x32xf32, #tpu.memory_space<vmem>>, vector<64x32xf32>
    %223 = arith.truncf %222 : vector<64x32xf32> to vector<64x32xbf16>
    %c0_75 = arith.constant 0 : index
    %c0_76 = arith.constant 0 : index
    %224 = vector.load %arg5[%c0_75, %c0_76] : memref<64x32xbf16, #tpu.memory_space<vmem>>, vector<64x32xbf16>
    tpu.vector_store %arg5[%c0_75, %c0_76], %223 {strides = array<i32>} : memref<64x32xbf16, #tpu.memory_space<vmem>>, vector<64x32xbf16>,
    %c0_i32_77 = arith.constant 0 : i32
    %225 = arith.cmpi eq, %arg0, %c0_i32_77 : i32
    %226 = arith.extui %225 : i1 to i32
    %c0_i32_78 = arith.constant 0 : i32
    %227 = arith.cmpi ne, %226, %c0_i32_78 : i32
    scf.if %227 {
      %c0_79 = arith.constant 0 : index
      %c0_80 = arith.constant 0 : index
      %228 = vector.load %arg6[%c0_79, %c0_80] : memref<8x32xf32, #tpu.memory_space<vmem>>, vector<8x32xf32>
      tpu.vector_store %arg6[%c0_79, %c0_80], %217 {strides = array<i32>} : memref<8x32xf32, #tpu.memory_space<vmem>>, vector<8x32xf32>,
      %c0_81 = arith.constant 0 : index
      %c0_82 = arith.constant 0 : index
      %229 = vector.load %arg7[%c0_81, %c0_82] : memref<8x32xf32, #tpu.memory_space<vmem>>, vector<8x32xf32>
      tpu.vector_store %arg7[%c0_81, %c0_82], %215 {strides = array<i32>} : memref<8x32xf32, #tpu.memory_space<vmem>>, vector<8x32xf32>,
    } else {
    }
    return
  }
  func.func @transform_0(%arg0: i32) -> (i32, i32) {
    %c0_i32 = arith.constant 0 : i32
    %c0_i32_0 = arith.constant 0 : i32
    return %arg0, %c0_i32 : i32, i32
  }
  func.func @transform_1(%arg0: i32) -> (i32, i32) {
    %c0_i32 = arith.constant 0 : i32
    %c0_i32_0 = arith.constant 0 : i32
    %c0_i32_1 = arith.constant 0 : i32
    return %c0_i32, %c0_i32_0 : i32, i32
  }
  func.func @transform_2(%arg0: i32) -> (i32, i32) {
    %c0_i32 = arith.constant 0 : i32
    %c0_i32_0 = arith.constant 0 : i32
    %c0_i32_1 = arith.constant 0 : i32
    return %c0_i32, %c0_i32_0 : i32, i32
  }
  func.func @transform_3(%arg0: i32) -> (i32, i32) {
    %c0_i32 = arith.constant 0 : i32
    %c0_i32_0 = arith.constant 0 : i32
    %c0_i32_1 = arith.constant 0 : i32
    return %c0_i32, %c0_i32_0 : i32, i32
  }
  func.func @transform_4(%arg0: i32) -> (i32, i32) {
    %c0_i32 = arith.constant 0 : i32
    %c0_i32_0 = arith.constant 0 : i32
    return %arg0, %c0_i32 : i32, i32
  }
  func.func @transform_5(%arg0: i32) -> (i32, i32) {
    %c0_i32 = arith.constant 0 : i32
    %c0_i32_0 = arith.constant 0 : i32
    %c0_i32_1 = arith.constant 0 : i32
    return %c0_i32, %c0_i32_0 : i32, i32
  }
  func.func @transform_6(%arg0: i32) -> (i32, i32) {
    %c0_i32 = arith.constant 0 : i32
    %c0_i32_0 = arith.constant 0 : i32
    %c0_i32_1 = arith.constant 0 : i32
    return %c0_i32, %c0_i32_0 : i32, i32
  }
}

module attributes {stable_mosaic.version = 11 : i64} {
  func.func @kernel(%arg0: i32, %arg1: memref<64x32xbf16, #tpu.memory_space<vmem>>, %arg2: memref<8x32xf32, #tpu.memory_space<vmem>>, %arg3: memref<8x32xf32, #tpu.memory_space<vmem>>, %arg4: memref<32x128xbf16, #tpu.memory_space<vmem>>, %arg5: memref<32x128xbf16, #tpu.memory_space<vmem>>, %arg6: memref<1x128xf32, #tpu.memory_space<vmem>>, %arg7: memref<64x32xbf16, #tpu.memory_space<vmem>>, %arg8: memref<8x32xf32, #tpu.memory_space<vmem>>, %arg9: memref<8x32xf32, #tpu.memory_space<vmem>>, %arg10: memref<64x128xf32, #tpu.memory_space<vmem>>, %arg11: memref<64x32xf32, #tpu.memory_space<vmem>>) attributes {dimension_semantics = [#tpu.dimension_semantics<arbitrary>], iteration_bounds = array<i64: 1>, scalar_prefetch = 0 : i64, scratch_operands = 4 : i64, tpu.core_type = #tpu.core_type<tc>, window_params = [{transform_indices = @transform_0, window_bounds = array<i64: 64, 32>}, {pipeline_mode = #tpu.pipeline_mode<synchronous>, transform_indices = @transform_1, window_bounds = array<i64: 8, 32>}, {pipeline_mode = #tpu.pipeline_mode<synchronous>, transform_indices = @transform_2, window_bounds = array<i64: 8, 32>}, {pipeline_mode = #tpu.pipeline_mode<synchronous>, transform_indices = @transform_3, window_bounds = array<i64: 32, 128>}, {pipeline_mode = #tpu.pipeline_mode<synchronous>, transform_indices = @transform_4, window_bounds = array<i64: 32, 128>}, {pipeline_mode = #tpu.pipeline_mode<synchronous>, transform_indices = @transform_5, window_bounds = array<i64: 1, 128>}, {transform_indices = @transform_6, window_bounds = array<i64: 64, 32>}]} {
    %c0_i32 = arith.constant 0 : i32
    %0 = arith.cmpi eq, %arg0, %c0_i32 : i32
    %1 = arith.extui %0 : i1 to i32
    %c0_i32_0 = arith.constant 0 : i32
    %2 = arith.cmpi ne, %1, %c0_i32_0 : i32
    scf.if %2 {
      %c0_77 = arith.constant 0 : index
      %c0_78 = arith.constant 0 : index
      %225 = vector.load %arg2[%c0_77, %c0_78] : memref<8x32xf32, #tpu.memory_space<vmem>>, vector<8x32xf32>
      %c0_79 = arith.constant 0 : index
      %c0_80 = arith.constant 0 : index
      %226 = vector.load %arg8[%c0_79, %c0_80] : memref<8x32xf32, #tpu.memory_space<vmem>>, vector<8x32xf32>
      tpu.vector_store %arg8[%c0_79, %c0_80], %225 {strides = array<i32>} : memref<8x32xf32, #tpu.memory_space<vmem>>, vector<8x32xf32>,
      %c0_81 = arith.constant 0 : index
      %c0_82 = arith.constant 0 : index
      %227 = vector.load %arg3[%c0_81, %c0_82] : memref<8x32xf32, #tpu.memory_space<vmem>>, vector<8x32xf32>
      %c0_83 = arith.constant 0 : index
      %c0_84 = arith.constant 0 : index
      %228 = vector.load %arg9[%c0_83, %c0_84] : memref<8x32xf32, #tpu.memory_space<vmem>>, vector<8x32xf32>
      tpu.vector_store %arg9[%c0_83, %c0_84], %227 {strides = array<i32>} : memref<8x32xf32, #tpu.memory_space<vmem>>, vector<8x32xf32>,
    } else {
    }
    %c0 = arith.constant 0 : index
    %c0_1 = arith.constant 0 : index
    %3 = vector.load %arg1[%c0, %c0_1] : memref<64x32xbf16, #tpu.memory_space<vmem>>, vector<64x32xbf16>
    %c0_2 = arith.constant 0 : index
    %c0_3 = arith.constant 0 : index
    %4 = vector.load %arg4[%c0_2, %c0_3] : memref<32x128xbf16, #tpu.memory_space<vmem>>, vector<32x128xbf16>
    %cst = arith.constant dense<0.000000e+00> : vector<64x128xf32>
    %5 = tpu.matmul %3, %4, %cst {dimension_numbers = #tpu.dot_dimension_numbers<[1], [0], [0], [1], [0, 0, 1, 1], [], []>} : vector<64x32xbf16>, vector<32x128xbf16>, vector<64x128xf32> -> vector<64x128xf32>
    %c0_4 = arith.constant 0 : index
    %c0_5 = arith.constant 0 : index
    %6 = vector.load %arg6[%c0_4, %c0_5] : memref<1x128xf32, #tpu.memory_space<vmem>>, vector<1x128xf32>
    %7 = vector.broadcast %6 : vector<1x128xf32> to vector<64x128xf32>
    %8 = arith.addf %5, %7 : vector<64x128xf32>
    %c0_6 = arith.constant 0 : index
    %c0_7 = arith.constant 0 : index
    %9 = vector.load %arg10[%c0_6, %c0_7] : memref<64x128xf32, #tpu.memory_space<vmem>>, vector<64x128xf32>
    tpu.vector_store %arg10[%c0_6, %c0_7], %8 {strides = array<i32>} : memref<64x128xf32, #tpu.memory_space<vmem>>, vector<64x128xf32>,
    %c0_8 = arith.constant 0 : index
    %c0_9 = arith.constant 0 : index
    %10 = vector.load %arg8[%c0_8, %c0_9] : memref<8x32xf32, #tpu.memory_space<vmem>>, vector<8x32xf32>
    %c0_10 = arith.constant 0 : index
    %c0_11 = arith.constant 0 : index
    %11 = vector.load %arg9[%c0_10, %c0_11] : memref<8x32xf32, #tpu.memory_space<vmem>>, vector<8x32xf32>
    %c0_i32_12 = arith.constant 0 : i32
    %c8_i32 = arith.constant 8 : i32
    %12 = arith.muli %c0_i32_12, %c8_i32 : i32
    %13 = tpu.assume_multiple %12, 8 : i32
    %14 = arith.index_cast %13 : i32 to index
    %c0_13 = arith.constant 0 : index
    %15 = vector.load %arg10[%14, %c0_13] : memref<64x128xf32, #tpu.memory_space<vmem>>, vector<8x128xf32>
    %16 = arith.truncf %10 : vector<8x32xf32> to vector<8x32xbf16>
    %c0_14 = arith.constant 0 : index
    %c0_15 = arith.constant 0 : index
    %17 = vector.load %arg5[%c0_14, %c0_15] : memref<32x128xbf16, #tpu.memory_space<vmem>>, vector<32x128xbf16>
    %cst_16 = arith.constant dense<0.000000e+00> : vector<8x128xf32>
    %18 = tpu.matmul %16, %17, %cst_16 {dimension_numbers = #tpu.dot_dimension_numbers<[1], [0], [0], [1], [0, 0, 1, 1], [], []>} : vector<8x32xbf16>, vector<32x128xbf16>, vector<8x128xf32> -> vector<8x128xf32>
    %19 = arith.addf %15, %18 : vector<8x128xf32>
    %20 = vector.extract_strided_slice %19 {offsets = [0, 0], sizes = [8, 96], strides = [1, 1]} : vector<8x128xf32> to vector<8x96xf32>
    %21 = arith.negf %20 : vector<8x96xf32>
    %22 = math.exp %21 : vector<8x96xf32>
    %cst_17 = arith.constant 1.000000e+00 : f32
    %23 = vector.broadcast %cst_17 : f32 to vector<8x96xf32>
    %24 = arith.addf %23, %22 : vector<8x96xf32>
    %25 = arith.divf %23, %24 : vector<8x96xf32>
    %26 = vector.extract_strided_slice %19 {offsets = [0, 96], sizes = [8, 32], strides = [1, 1]} : vector<8x128xf32> to vector<8x32xf32>
    %27 = math.tanh %26 : vector<8x32xf32>
    %28 = vector.extract_strided_slice %25 {offsets = [0, 0], sizes = [8, 32], strides = [1, 1]} : vector<8x96xf32> to vector<8x32xf32>
    %29 = vector.extract_strided_slice %25 {offsets = [0, 32], sizes = [8, 32], strides = [1, 1]} : vector<8x96xf32> to vector<8x32xf32>
    %30 = vector.extract_strided_slice %25 {offsets = [0, 64], sizes = [8, 32], strides = [1, 1]} : vector<8x96xf32> to vector<8x32xf32>
    %31 = arith.mulf %29, %11 : vector<8x32xf32>
    %32 = arith.mulf %28, %27 : vector<8x32xf32>
    %33 = arith.addf %31, %32 : vector<8x32xf32>
    %34 = math.tanh %33 : vector<8x32xf32>
    %35 = arith.mulf %30, %34 : vector<8x32xf32>
    %36 = arith.index_cast %13 : i32 to index
    %c0_18 = arith.constant 0 : index
    %37 = vector.load %arg11[%36, %c0_18] : memref<64x32xf32, #tpu.memory_space<vmem>>, vector<8x32xf32>
    tpu.vector_store %arg11[%36, %c0_18], %35 {strides = array<i32>} : memref<64x32xf32, #tpu.memory_space<vmem>>, vector<8x32xf32>,
    %c1_i32 = arith.constant 1 : i32
    %c8_i32_19 = arith.constant 8 : i32
    %38 = arith.muli %c1_i32, %c8_i32_19 : i32
    %39 = tpu.assume_multiple %38, 8 : i32
    %40 = arith.index_cast %39 : i32 to index
    %c0_20 = arith.constant 0 : index
    %41 = vector.load %arg10[%40, %c0_20] : memref<64x128xf32, #tpu.memory_space<vmem>>, vector<8x128xf32>
    %42 = arith.truncf %35 : vector<8x32xf32> to vector<8x32xbf16>
    %c0_21 = arith.constant 0 : index
    %c0_22 = arith.constant 0 : index
    %43 = vector.load %arg5[%c0_21, %c0_22] : memref<32x128xbf16, #tpu.memory_space<vmem>>, vector<32x128xbf16>
    %cst_23 = arith.constant dense<0.000000e+00> : vector<8x128xf32>
    %44 = tpu.matmul %42, %43, %cst_23 {dimension_numbers = #tpu.dot_dimension_numbers<[1], [0], [0], [1], [0, 0, 1, 1], [], []>} : vector<8x32xbf16>, vector<32x128xbf16>, vector<8x128xf32> -> vector<8x128xf32>
    %45 = arith.addf %41, %44 : vector<8x128xf32>
    %46 = vector.extract_strided_slice %45 {offsets = [0, 0], sizes = [8, 96], strides = [1, 1]} : vector<8x128xf32> to vector<8x96xf32>
    %47 = arith.negf %46 : vector<8x96xf32>
    %48 = math.exp %47 : vector<8x96xf32>
    %cst_24 = arith.constant 1.000000e+00 : f32
    %49 = vector.broadcast %cst_24 : f32 to vector<8x96xf32>
    %50 = arith.addf %49, %48 : vector<8x96xf32>
    %51 = arith.divf %49, %50 : vector<8x96xf32>
    %52 = vector.extract_strided_slice %45 {offsets = [0, 96], sizes = [8, 32], strides = [1, 1]} : vector<8x128xf32> to vector<8x32xf32>
    %53 = math.tanh %52 : vector<8x32xf32>
    %54 = vector.extract_strided_slice %51 {offsets = [0, 0], sizes = [8, 32], strides = [1, 1]} : vector<8x96xf32> to vector<8x32xf32>
    %55 = vector.extract_strided_slice %51 {offsets = [0, 32], sizes = [8, 32], strides = [1, 1]} : vector<8x96xf32> to vector<8x32xf32>
    %56 = vector.extract_strided_slice %51 {offsets = [0, 64], sizes = [8, 32], strides = [1, 1]} : vector<8x96xf32> to vector<8x32xf32>
    %57 = arith.mulf %55, %33 : vector<8x32xf32>
    %58 = arith.mulf %54, %53 : vector<8x32xf32>
    %59 = arith.addf %57, %58 : vector<8x32xf32>
    %60 = math.tanh %59 : vector<8x32xf32>
    %61 = arith.mulf %56, %60 : vector<8x32xf32>
    %62 = arith.index_cast %39 : i32 to index
    %c0_25 = arith.constant 0 : index
    %63 = vector.load %arg11[%62, %c0_25] : memref<64x32xf32, #tpu.memory_space<vmem>>, vector<8x32xf32>
    tpu.vector_store %arg11[%62, %c0_25], %61 {strides = array<i32>} : memref<64x32xf32, #tpu.memory_space<vmem>>, vector<8x32xf32>,
    %c2_i32 = arith.constant 2 : i32
    %c8_i32_26 = arith.constant 8 : i32
    %64 = arith.muli %c2_i32, %c8_i32_26 : i32
    %65 = tpu.assume_multiple %64, 8 : i32
    %66 = arith.index_cast %65 : i32 to index
    %c0_27 = arith.constant 0 : index
    %67 = vector.load %arg10[%66, %c0_27] : memref<64x128xf32, #tpu.memory_space<vmem>>, vector<8x128xf32>
    %68 = arith.truncf %61 : vector<8x32xf32> to vector<8x32xbf16>
    %c0_28 = arith.constant 0 : index
    %c0_29 = arith.constant 0 : index
    %69 = vector.load %arg5[%c0_28, %c0_29] : memref<32x128xbf16, #tpu.memory_space<vmem>>, vector<32x128xbf16>
    %cst_30 = arith.constant dense<0.000000e+00> : vector<8x128xf32>
    %70 = tpu.matmul %68, %69, %cst_30 {dimension_numbers = #tpu.dot_dimension_numbers<[1], [0], [0], [1], [0, 0, 1, 1], [], []>} : vector<8x32xbf16>, vector<32x128xbf16>, vector<8x128xf32> -> vector<8x128xf32>
    %71 = arith.addf %67, %70 : vector<8x128xf32>
    %72 = vector.extract_strided_slice %71 {offsets = [0, 0], sizes = [8, 96], strides = [1, 1]} : vector<8x128xf32> to vector<8x96xf32>
    %73 = arith.negf %72 : vector<8x96xf32>
    %74 = math.exp %73 : vector<8x96xf32>
    %cst_31 = arith.constant 1.000000e+00 : f32
    %75 = vector.broadcast %cst_31 : f32 to vector<8x96xf32>
    %76 = arith.addf %75, %74 : vector<8x96xf32>
    %77 = arith.divf %75, %76 : vector<8x96xf32>
    %78 = vector.extract_strided_slice %71 {offsets = [0, 96], sizes = [8, 32], strides = [1, 1]} : vector<8x128xf32> to vector<8x32xf32>
    %79 = math.tanh %78 : vector<8x32xf32>
    %80 = vector.extract_strided_slice %77 {offsets = [0, 0], sizes = [8, 32], strides = [1, 1]} : vector<8x96xf32> to vector<8x32xf32>
    %81 = vector.extract_strided_slice %77 {offsets = [0, 32], sizes = [8, 32], strides = [1, 1]} : vector<8x96xf32> to vector<8x32xf32>
    %82 = vector.extract_strided_slice %77 {offsets = [0, 64], sizes = [8, 32], strides = [1, 1]} : vector<8x96xf32> to vector<8x32xf32>
    %83 = arith.mulf %81, %59 : vector<8x32xf32>
    %84 = arith.mulf %80, %79 : vector<8x32xf32>
    %85 = arith.addf %83, %84 : vector<8x32xf32>
    %86 = math.tanh %85 : vector<8x32xf32>
    %87 = arith.mulf %82, %86 : vector<8x32xf32>
    %88 = arith.index_cast %65 : i32 to index
    %c0_32 = arith.constant 0 : index
    %89 = vector.load %arg11[%88, %c0_32] : memref<64x32xf32, #tpu.memory_space<vmem>>, vector<8x32xf32>
    tpu.vector_store %arg11[%88, %c0_32], %87 {strides = array<i32>} : memref<64x32xf32, #tpu.memory_space<vmem>>, vector<8x32xf32>,
    %c3_i32 = arith.constant 3 : i32
    %c8_i32_33 = arith.constant 8 : i32
    %90 = arith.muli %c3_i32, %c8_i32_33 : i32
    %91 = tpu.assume_multiple %90, 8 : i32
    %92 = arith.index_cast %91 : i32 to index
    %c0_34 = arith.constant 0 : index
    %93 = vector.load %arg10[%92, %c0_34] : memref<64x128xf32, #tpu.memory_space<vmem>>, vector<8x128xf32>
    %94 = arith.truncf %87 : vector<8x32xf32> to vector<8x32xbf16>
    %c0_35 = arith.constant 0 : index
    %c0_36 = arith.constant 0 : index
    %95 = vector.load %arg5[%c0_35, %c0_36] : memref<32x128xbf16, #tpu.memory_space<vmem>>, vector<32x128xbf16>
    %cst_37 = arith.constant dense<0.000000e+00> : vector<8x128xf32>
    %96 = tpu.matmul %94, %95, %cst_37 {dimension_numbers = #tpu.dot_dimension_numbers<[1], [0], [0], [1], [0, 0, 1, 1], [], []>} : vector<8x32xbf16>, vector<32x128xbf16>, vector<8x128xf32> -> vector<8x128xf32>
    %97 = arith.addf %93, %96 : vector<8x128xf32>
    %98 = vector.extract_strided_slice %97 {offsets = [0, 0], sizes = [8, 96], strides = [1, 1]} : vector<8x128xf32> to vector<8x96xf32>
    %99 = arith.negf %98 : vector<8x96xf32>
    %100 = math.exp %99 : vector<8x96xf32>
    %cst_38 = arith.constant 1.000000e+00 : f32
    %101 = vector.broadcast %cst_38 : f32 to vector<8x96xf32>
    %102 = arith.addf %101, %100 : vector<8x96xf32>
    %103 = arith.divf %101, %102 : vector<8x96xf32>
    %104 = vector.extract_strided_slice %97 {offsets = [0, 96], sizes = [8, 32], strides = [1, 1]} : vector<8x128xf32> to vector<8x32xf32>
    %105 = math.tanh %104 : vector<8x32xf32>
    %106 = vector.extract_strided_slice %103 {offsets = [0, 0], sizes = [8, 32], strides = [1, 1]} : vector<8x96xf32> to vector<8x32xf32>
    %107 = vector.extract_strided_slice %103 {offsets = [0, 32], sizes = [8, 32], strides = [1, 1]} : vector<8x96xf32> to vector<8x32xf32>
    %108 = vector.extract_strided_slice %103 {offsets = [0, 64], sizes = [8, 32], strides = [1, 1]} : vector<8x96xf32> to vector<8x32xf32>
    %109 = arith.mulf %107, %85 : vector<8x32xf32>
    %110 = arith.mulf %106, %105 : vector<8x32xf32>
    %111 = arith.addf %109, %110 : vector<8x32xf32>
    %112 = math.tanh %111 : vector<8x32xf32>
    %113 = arith.mulf %108, %112 : vector<8x32xf32>
    %114 = arith.index_cast %91 : i32 to index
    %c0_39 = arith.constant 0 : index
    %115 = vector.load %arg11[%114, %c0_39] : memref<64x32xf32, #tpu.memory_space<vmem>>, vector<8x32xf32>
    tpu.vector_store %arg11[%114, %c0_39], %113 {strides = array<i32>} : memref<64x32xf32, #tpu.memory_space<vmem>>, vector<8x32xf32>,
    %c4_i32 = arith.constant 4 : i32
    %c8_i32_40 = arith.constant 8 : i32
    %116 = arith.muli %c4_i32, %c8_i32_40 : i32
    %117 = tpu.assume_multiple %116, 8 : i32
    %118 = arith.index_cast %117 : i32 to index
    %c0_41 = arith.constant 0 : index
    %119 = vector.load %arg10[%118, %c0_41] : memref<64x128xf32, #tpu.memory_space<vmem>>, vector<8x128xf32>
    %120 = arith.truncf %113 : vector<8x32xf32> to vector<8x32xbf16>
    %c0_42 = arith.constant 0 : index
    %c0_43 = arith.constant 0 : index
    %121 = vector.load %arg5[%c0_42, %c0_43] : memref<32x128xbf16, #tpu.memory_space<vmem>>, vector<32x128xbf16>
    %cst_44 = arith.constant dense<0.000000e+00> : vector<8x128xf32>
    %122 = tpu.matmul %120, %121, %cst_44 {dimension_numbers = #tpu.dot_dimension_numbers<[1], [0], [0], [1], [0, 0, 1, 1], [], []>} : vector<8x32xbf16>, vector<32x128xbf16>, vector<8x128xf32> -> vector<8x128xf32>
    %123 = arith.addf %119, %122 : vector<8x128xf32>
    %124 = vector.extract_strided_slice %123 {offsets = [0, 0], sizes = [8, 96], strides = [1, 1]} : vector<8x128xf32> to vector<8x96xf32>
    %125 = arith.negf %124 : vector<8x96xf32>
    %126 = math.exp %125 : vector<8x96xf32>
    %cst_45 = arith.constant 1.000000e+00 : f32
    %127 = vector.broadcast %cst_45 : f32 to vector<8x96xf32>
    %128 = arith.addf %127, %126 : vector<8x96xf32>
    %129 = arith.divf %127, %128 : vector<8x96xf32>
    %130 = vector.extract_strided_slice %123 {offsets = [0, 96], sizes = [8, 32], strides = [1, 1]} : vector<8x128xf32> to vector<8x32xf32>
    %131 = math.tanh %130 : vector<8x32xf32>
    %132 = vector.extract_strided_slice %129 {offsets = [0, 0], sizes = [8, 32], strides = [1, 1]} : vector<8x96xf32> to vector<8x32xf32>
    %133 = vector.extract_strided_slice %129 {offsets = [0, 32], sizes = [8, 32], strides = [1, 1]} : vector<8x96xf32> to vector<8x32xf32>
    %134 = vector.extract_strided_slice %129 {offsets = [0, 64], sizes = [8, 32], strides = [1, 1]} : vector<8x96xf32> to vector<8x32xf32>
    %135 = arith.mulf %133, %111 : vector<8x32xf32>
    %136 = arith.mulf %132, %131 : vector<8x32xf32>
    %137 = arith.addf %135, %136 : vector<8x32xf32>
    %138 = math.tanh %137 : vector<8x32xf32>
    %139 = arith.mulf %134, %138 : vector<8x32xf32>
    %140 = arith.index_cast %117 : i32 to index
    %c0_46 = arith.constant 0 : index
    %141 = vector.load %arg11[%140, %c0_46] : memref<64x32xf32, #tpu.memory_space<vmem>>, vector<8x32xf32>
    tpu.vector_store %arg11[%140, %c0_46], %139 {strides = array<i32>} : memref<64x32xf32, #tpu.memory_space<vmem>>, vector<8x32xf32>,
    %c5_i32 = arith.constant 5 : i32
    %c8_i32_47 = arith.constant 8 : i32
    %142 = arith.muli %c5_i32, %c8_i32_47 : i32
    %143 = tpu.assume_multiple %142, 8 : i32
    %144 = arith.index_cast %143 : i32 to index
    %c0_48 = arith.constant 0 : index
    %145 = vector.load %arg10[%144, %c0_48] : memref<64x128xf32, #tpu.memory_space<vmem>>, vector<8x128xf32>
    %146 = arith.truncf %139 : vector<8x32xf32> to vector<8x32xbf16>
    %c0_49 = arith.constant 0 : index
    %c0_50 = arith.constant 0 : index
    %147 = vector.load %arg5[%c0_49, %c0_50] : memref<32x128xbf16, #tpu.memory_space<vmem>>, vector<32x128xbf16>
    %cst_51 = arith.constant dense<0.000000e+00> : vector<8x128xf32>
    %148 = tpu.matmul %146, %147, %cst_51 {dimension_numbers = #tpu.dot_dimension_numbers<[1], [0], [0], [1], [0, 0, 1, 1], [], []>} : vector<8x32xbf16>, vector<32x128xbf16>, vector<8x128xf32> -> vector<8x128xf32>
    %149 = arith.addf %145, %148 : vector<8x128xf32>
    %150 = vector.extract_strided_slice %149 {offsets = [0, 0], sizes = [8, 96], strides = [1, 1]} : vector<8x128xf32> to vector<8x96xf32>
    %151 = arith.negf %150 : vector<8x96xf32>
    %152 = math.exp %151 : vector<8x96xf32>
    %cst_52 = arith.constant 1.000000e+00 : f32
    %153 = vector.broadcast %cst_52 : f32 to vector<8x96xf32>
    %154 = arith.addf %153, %152 : vector<8x96xf32>
    %155 = arith.divf %153, %154 : vector<8x96xf32>
    %156 = vector.extract_strided_slice %149 {offsets = [0, 96], sizes = [8, 32], strides = [1, 1]} : vector<8x128xf32> to vector<8x32xf32>
    %157 = math.tanh %156 : vector<8x32xf32>
    %158 = vector.extract_strided_slice %155 {offsets = [0, 0], sizes = [8, 32], strides = [1, 1]} : vector<8x96xf32> to vector<8x32xf32>
    %159 = vector.extract_strided_slice %155 {offsets = [0, 32], sizes = [8, 32], strides = [1, 1]} : vector<8x96xf32> to vector<8x32xf32>
    %160 = vector.extract_strided_slice %155 {offsets = [0, 64], sizes = [8, 32], strides = [1, 1]} : vector<8x96xf32> to vector<8x32xf32>
    %161 = arith.mulf %159, %137 : vector<8x32xf32>
    %162 = arith.mulf %158, %157 : vector<8x32xf32>
    %163 = arith.addf %161, %162 : vector<8x32xf32>
    %164 = math.tanh %163 : vector<8x32xf32>
    %165 = arith.mulf %160, %164 : vector<8x32xf32>
    %166 = arith.index_cast %143 : i32 to index
    %c0_53 = arith.constant 0 : index
    %167 = vector.load %arg11[%166, %c0_53] : memref<64x32xf32, #tpu.memory_space<vmem>>, vector<8x32xf32>
    tpu.vector_store %arg11[%166, %c0_53], %165 {strides = array<i32>} : memref<64x32xf32, #tpu.memory_space<vmem>>, vector<8x32xf32>,
    %c6_i32 = arith.constant 6 : i32
    %c8_i32_54 = arith.constant 8 : i32
    %168 = arith.muli %c6_i32, %c8_i32_54 : i32
    %169 = tpu.assume_multiple %168, 8 : i32
    %170 = arith.index_cast %169 : i32 to index
    %c0_55 = arith.constant 0 : index
    %171 = vector.load %arg10[%170, %c0_55] : memref<64x128xf32, #tpu.memory_space<vmem>>, vector<8x128xf32>
    %172 = arith.truncf %165 : vector<8x32xf32> to vector<8x32xbf16>
    %c0_56 = arith.constant 0 : index
    %c0_57 = arith.constant 0 : index
    %173 = vector.load %arg5[%c0_56, %c0_57] : memref<32x128xbf16, #tpu.memory_space<vmem>>, vector<32x128xbf16>
    %cst_58 = arith.constant dense<0.000000e+00> : vector<8x128xf32>
    %174 = tpu.matmul %172, %173, %cst_58 {dimension_numbers = #tpu.dot_dimension_numbers<[1], [0], [0], [1], [0, 0, 1, 1], [], []>} : vector<8x32xbf16>, vector<32x128xbf16>, vector<8x128xf32> -> vector<8x128xf32>
    %175 = arith.addf %171, %174 : vector<8x128xf32>
    %176 = vector.extract_strided_slice %175 {offsets = [0, 0], sizes = [8, 96], strides = [1, 1]} : vector<8x128xf32> to vector<8x96xf32>
    %177 = arith.negf %176 : vector<8x96xf32>
    %178 = math.exp %177 : vector<8x96xf32>
    %cst_59 = arith.constant 1.000000e+00 : f32
    %179 = vector.broadcast %cst_59 : f32 to vector<8x96xf32>
    %180 = arith.addf %179, %178 : vector<8x96xf32>
    %181 = arith.divf %179, %180 : vector<8x96xf32>
    %182 = vector.extract_strided_slice %175 {offsets = [0, 96], sizes = [8, 32], strides = [1, 1]} : vector<8x128xf32> to vector<8x32xf32>
    %183 = math.tanh %182 : vector<8x32xf32>
    %184 = vector.extract_strided_slice %181 {offsets = [0, 0], sizes = [8, 32], strides = [1, 1]} : vector<8x96xf32> to vector<8x32xf32>
    %185 = vector.extract_strided_slice %181 {offsets = [0, 32], sizes = [8, 32], strides = [1, 1]} : vector<8x96xf32> to vector<8x32xf32>
    %186 = vector.extract_strided_slice %181 {offsets = [0, 64], sizes = [8, 32], strides = [1, 1]} : vector<8x96xf32> to vector<8x32xf32>
    %187 = arith.mulf %185, %163 : vector<8x32xf32>
    %188 = arith.mulf %184, %183 : vector<8x32xf32>
    %189 = arith.addf %187, %188 : vector<8x32xf32>
    %190 = math.tanh %189 : vector<8x32xf32>
    %191 = arith.mulf %186, %190 : vector<8x32xf32>
    %192 = arith.index_cast %169 : i32 to index
    %c0_60 = arith.constant 0 : index
    %193 = vector.load %arg11[%192, %c0_60] : memref<64x32xf32, #tpu.memory_space<vmem>>, vector<8x32xf32>
    tpu.vector_store %arg11[%192, %c0_60], %191 {strides = array<i32>} : memref<64x32xf32, #tpu.memory_space<vmem>>, vector<8x32xf32>,
    %c7_i32 = arith.constant 7 : i32
    %c8_i32_61 = arith.constant 8 : i32
    %194 = arith.muli %c7_i32, %c8_i32_61 : i32
    %195 = tpu.assume_multiple %194, 8 : i32
    %196 = arith.index_cast %195 : i32 to index
    %c0_62 = arith.constant 0 : index
    %197 = vector.load %arg10[%196, %c0_62] : memref<64x128xf32, #tpu.memory_space<vmem>>, vector<8x128xf32>
    %198 = arith.truncf %191 : vector<8x32xf32> to vector<8x32xbf16>
    %c0_63 = arith.constant 0 : index
    %c0_64 = arith.constant 0 : index
    %199 = vector.load %arg5[%c0_63, %c0_64] : memref<32x128xbf16, #tpu.memory_space<vmem>>, vector<32x128xbf16>
    %cst_65 = arith.constant dense<0.000000e+00> : vector<8x128xf32>
    %200 = tpu.matmul %198, %199, %cst_65 {dimension_numbers = #tpu.dot_dimension_numbers<[1], [0], [0], [1], [0, 0, 1, 1], [], []>} : vector<8x32xbf16>, vector<32x128xbf16>, vector<8x128xf32> -> vector<8x128xf32>
    %201 = arith.addf %197, %200 : vector<8x128xf32>
    %202 = vector.extract_strided_slice %201 {offsets = [0, 0], sizes = [8, 96], strides = [1, 1]} : vector<8x128xf32> to vector<8x96xf32>
    %203 = arith.negf %202 : vector<8x96xf32>
    %204 = math.exp %203 : vector<8x96xf32>
    %cst_66 = arith.constant 1.000000e+00 : f32
    %205 = vector.broadcast %cst_66 : f32 to vector<8x96xf32>
    %206 = arith.addf %205, %204 : vector<8x96xf32>
    %207 = arith.divf %205, %206 : vector<8x96xf32>
    %208 = vector.extract_strided_slice %201 {offsets = [0, 96], sizes = [8, 32], strides = [1, 1]} : vector<8x128xf32> to vector<8x32xf32>
    %209 = math.tanh %208 : vector<8x32xf32>
    %210 = vector.extract_strided_slice %207 {offsets = [0, 0], sizes = [8, 32], strides = [1, 1]} : vector<8x96xf32> to vector<8x32xf32>
    %211 = vector.extract_strided_slice %207 {offsets = [0, 32], sizes = [8, 32], strides = [1, 1]} : vector<8x96xf32> to vector<8x32xf32>
    %212 = vector.extract_strided_slice %207 {offsets = [0, 64], sizes = [8, 32], strides = [1, 1]} : vector<8x96xf32> to vector<8x32xf32>
    %213 = arith.mulf %211, %189 : vector<8x32xf32>
    %214 = arith.mulf %210, %209 : vector<8x32xf32>
    %215 = arith.addf %213, %214 : vector<8x32xf32>
    %216 = math.tanh %215 : vector<8x32xf32>
    %217 = arith.mulf %212, %216 : vector<8x32xf32>
    %218 = arith.index_cast %195 : i32 to index
    %c0_67 = arith.constant 0 : index
    %219 = vector.load %arg11[%218, %c0_67] : memref<64x32xf32, #tpu.memory_space<vmem>>, vector<8x32xf32>
    tpu.vector_store %arg11[%218, %c0_67], %217 {strides = array<i32>} : memref<64x32xf32, #tpu.memory_space<vmem>>, vector<8x32xf32>,
    %c8_i32_68 = arith.constant 8 : i32
    %c0_69 = arith.constant 0 : index
    %c0_70 = arith.constant 0 : index
    %220 = vector.load %arg8[%c0_69, %c0_70] : memref<8x32xf32, #tpu.memory_space<vmem>>, vector<8x32xf32>
    tpu.vector_store %arg8[%c0_69, %c0_70], %217 {strides = array<i32>} : memref<8x32xf32, #tpu.memory_space<vmem>>, vector<8x32xf32>,
    %c0_71 = arith.constant 0 : index
    %c0_72 = arith.constant 0 : index
    %221 = vector.load %arg9[%c0_71, %c0_72] : memref<8x32xf32, #tpu.memory_space<vmem>>, vector<8x32xf32>
    tpu.vector_store %arg9[%c0_71, %c0_72], %215 {strides = array<i32>} : memref<8x32xf32, #tpu.memory_space<vmem>>, vector<8x32xf32>,
    %c0_73 = arith.constant 0 : index
    %c0_74 = arith.constant 0 : index
    %222 = vector.load %arg11[%c0_73, %c0_74] : memref<64x32xf32, #tpu.memory_space<vmem>>, vector<64x32xf32>
    %223 = arith.truncf %222 : vector<64x32xf32> to vector<64x32xbf16>
    %c0_75 = arith.constant 0 : index
    %c0_76 = arith.constant 0 : index
    %224 = vector.load %arg7[%c0_75, %c0_76] : memref<64x32xbf16, #tpu.memory_space<vmem>>, vector<64x32xbf16>
    tpu.vector_store %arg7[%c0_75, %c0_76], %223 {strides = array<i32>} : memref<64x32xbf16, #tpu.memory_space<vmem>>, vector<64x32xbf16>,
    return
  }
  func.func @transform_0(%arg0: i32) -> (i32, i32) {
    %c0_i32 = arith.constant 0 : i32
    %c0_i32_0 = arith.constant 0 : i32
    return %arg0, %c0_i32 : i32, i32
  }
  func.func @transform_1(%arg0: i32) -> (i32, i32) {
    %c0_i32 = arith.constant 0 : i32
    %c0_i32_0 = arith.constant 0 : i32
    %c0_i32_1 = arith.constant 0 : i32
    return %c0_i32, %c0_i32_0 : i32, i32
  }
  func.func @transform_2(%arg0: i32) -> (i32, i32) {
    %c0_i32 = arith.constant 0 : i32
    %c0_i32_0 = arith.constant 0 : i32
    %c0_i32_1 = arith.constant 0 : i32
    return %c0_i32, %c0_i32_0 : i32, i32
  }
  func.func @transform_3(%arg0: i32) -> (i32, i32) {
    %c0_i32 = arith.constant 0 : i32
    %c0_i32_0 = arith.constant 0 : i32
    %c0_i32_1 = arith.constant 0 : i32
    return %c0_i32, %c0_i32_0 : i32, i32
  }
  func.func @transform_4(%arg0: i32) -> (i32, i32) {
    %c0_i32 = arith.constant 0 : i32
    %c0_i32_0 = arith.constant 0 : i32
    %c0_i32_1 = arith.constant 0 : i32
    return %c0_i32, %c0_i32_0 : i32, i32
  }
  func.func @transform_5(%arg0: i32) -> (i32, i32) {
    %c0_i32 = arith.constant 0 : i32
    %c0_i32_0 = arith.constant 0 : i32
    %c0_i32_1 = arith.constant 0 : i32
    return %c0_i32, %c0_i32_0 : i32, i32
  }
  func.func @transform_6(%arg0: i32) -> (i32, i32) {
    %c0_i32 = arith.constant 0 : i32
    %c0_i32_0 = arith.constant 0 : i32
    return %arg0, %c0_i32 : i32, i32
  }
}

</mosaic_0001>

<llo_original>
// kernel: seq2seq_forward.9
$region0: #{seq2seq_forward.9}
  #allocation0 [shape = 'u32[]', space=smem, size = 0x4, offset = 0x4, fixed_abs, tag = 'smem constant byte address 0x4 - core index']
  #allocation1 [shape = 'u32[144,128]{1,0:T(1,128)}', space=vmem, size = 0x12000, scoped, tag = 'internal scratch']
  %s0 = inlined_call_operand.vmem [shape: bf16[64,32], index: 0, kind: input, shape index: {}]
  %s1 = inlined_call_operand.vmem [shape: bf16[32,128], index: 1, kind: input, shape index: {}]
  %s2 = inlined_call_operand.vmem [shape: f32[1,128], index: 2, kind: input, shape index: {}]
  %s3 = inlined_call_operand.vmem [shape: f32[64,128], index: 3, kind: output, shape index: {}]
  %s4 = sld [smem:[#allocation0]]
  $region22: #{seq2seq_forward.9} parent=0
    _
  %s6 = ssub.s32 1, %s4
  %s7 = scalar_select 0, %s6, %s4
  // Predicated region
  $region2: #{seq2seq_forward.9} parent=0 // pred_check
    _
  $region3: #{seq2seq_forward.9} parent=0 // pred_check_branch
    %9 = sbr.rel (0) target = $region5
  $region4: #{seq2seq_forward.9} parent=0 // pred_region
    _
  $region5: #{seq2seq_forward.9} parent=0 // pred_fallthru
    _
  // Predicated region
  $region6: #{seq2seq_forward.9} parent=0 // pred_check
    _
  $region7: #{seq2seq_forward.9} parent=0 // pred_check_branch
    %11 = sbr.rel (0) target = $region9
  $region8: #{seq2seq_forward.9} parent=0 // pred_region
    _
  $region9: #{seq2seq_forward.9} parent=0 // pred_fallthru
    _
  // Predicated region
  $region10: #{seq2seq_forward.9} parent=0 // pred_check
    _
  $region11: #{seq2seq_forward.9} parent=0 // pred_check_branch
    %13 = sbr.rel (0) target = $region13
  $region12: #{seq2seq_forward.9} parent=0 // pred_region
    _
  $region13: #{seq2seq_forward.9} parent=0 // pred_fallthru
    _
  %v15 = vld [vmem:[%s0] sm:$0xf]
  %v16 = vld [vmem:[%s0 + $0x4] sm:$0xf]
  %v17 = vld [vmem:[%s0 + $0x8] sm:$0xf]
  %v18 = vld [vmem:[%s0 + $0xc] sm:$0xf]
  %v19 = vld [vmem:[%s0 + $0x10] sm:$0xf]
  %v20 = vld [vmem:[%s0 + $0x14] sm:$0xf]
  %v21 = vld [vmem:[%s0 + $0x18] sm:$0xf]
  %v22 = vld [vmem:[%s0 + $0x1c] sm:$0xf]
  %v23 = vld [vmem:[%s1] sm:$0xf]
  %v24 = vld [vmem:[%s1 + $0x4] sm:$0xf]
  %v25 = vld [vmem:[%s1 + $0x8] sm:$0xf]
  %v26 = vld [vmem:[%s1 + $0xc] sm:$0xf]
  %v27 = vld [vmem:[%s2] sm:$0x1]
  %v29 = vlaneseq
  %v30 = vshrl.u32 %v29, 7
  %v31 = vsub.s32 0, %v30
  %v32 = vrot.slane %v27, %v31
  %v42 = vunpack.c.l.b16 %v15
  %v43 = vunpack.c.l.b16 %v16
  %v44 = vunpack.c.l.b16 %v17
  %v45 = vunpack.c.l.b16 %v18
  %v46 = vunpack.c.l.b16 %v19
  %v47 = vunpack.c.l.b16 %v20
  %v48 = vunpack.c.l.b16 %v21
  %v49 = vunpack.c.l.b16 %v22
  %v50 = vpack.c.b16 %v43, %v42
  %v51 = vpack.c.b16 %v45, %v44
  %v52 = vpack.c.b16 %v47, %v46
  %v53 = vpack.c.b16 %v49, %v48
  %v58 = vunpack.c.l.b16 %v23
  %v59 = vunpack.c.l.b16 %v24
  %v60 = vunpack.c.l.b16 %v25
  %v61 = vunpack.c.l.b16 %v26
  %v62 = vpack.c.b16 %v59, %v58
  %v63 = vpack.c.b16 %v61, %v60
  %vm66 = vcmask 261120
  %v68 = vsel %vm66, %v50, 0
  %v71 = vsel %vm66, %v51, 0
  %v74 = vsel %vm66, %v52, 0
  %v77 = vsel %vm66, %v53, 0
  %79 = vmatprep.subr.bf16.mxu0 0
  %80 = vmatpush1.bf16.msra.mxu0 0
  %81 = vmatprep.subr.bf16.mxu0 0
  %82 = vmatpush1.bf16.msra.mxu0 0
  %83 = vmatprep.subr.bf16.mxu0 0
  %84 = vmatpush1.bf16.msra.mxu0 0
  %85 = vmatprep.subr.bf16.mxu0 0
  %86 = vmatpush1.bf16.msra.mxu0 0
  %87 = vmatprep.subr.bf16.mxu0 0
  %88 = vmatpush1.bf16.msra.mxu0 0
  %89 = vmatprep.subr.bf16.mxu0 0
  %90 = vmatpush1.bf16.msra.mxu0 0
  %91 = vmatprep.subr.bf16.mxu0 0
  %92 = vmatpush1.bf16.msra.mxu0 %v63
  %93 = vmatprep.subr.bf16.mxu0 0
  %94 = vmatpush1.bf16.msra.mxu0 %v62
  %95 = vmatprep.subr.bf16.mxu0 0
  %96 = vmatpush2.bf16.msra.mxu0 0
  %97 = vmatprep.subr.bf16.mxu0 0
  %98 = vmatpush2.bf16.msra.mxu0 0
  %99 = vmatprep.subr.bf16.mxu0 0
  %100 = vmatpush2.bf16.msra.mxu0 0
  %101 = vmatprep.subr.bf16.mxu0 0
  %102 = vmatpush2.bf16.msra.mxu0 0
  %103 = vmatprep.subr.bf16.mxu0 0
  %104 = vmatpush2.bf16.msra.mxu0 0
  %105 = vmatprep.subr.bf16.mxu0 0
  %106 = vmatpush2.bf16.msra.mxu0 0
  %107 = vmatprep.subr.bf16.mxu0 0
  %108 = vmatpush2.bf16.msra.mxu0 0
  %109 = vmatprep.subr.bf16.mxu0 0
  %110 = vmatpush2.bf16.msra.mxu0 0
  %111 = vmatprep.mubr.bf16.mxu0 0
  %112 = vmatmul.mubr.bf16.gmra.mxu0 %v68
  %v113 = vpop.f32.mrf.mxu0
  %v114 = vadd.f32 %v32, %v113
  %v115 = vpop.f32.mrf.mxu0
  %v116 = vpop.f32.mrf.mxu0
  %v117 = vadd.f32 %v32, %v116
  %v118 = vpop.f32.mrf.mxu0
  %119 = vmatprep.mubr.bf16.mxu0 0
  %120 = vmatmul.mubr.bf16.gmra.mxu0 %v71
  %v121 = vpop.f32.mrf.mxu0
  %v122 = vadd.f32 %v32, %v121
  %v123 = vpop.f32.mrf.mxu0
  %v124 = vpop.f32.mrf.mxu0
  %v125 = vadd.f32 %v32, %v124
  %v126 = vpop.f32.mrf.mxu0
  %127 = vmatprep.mubr.bf16.mxu0 0
  %128 = vmatmul.mubr.bf16.gmra.mxu0 %v74
  %v129 = vpop.f32.mrf.mxu0
  %v130 = vadd.f32 %v32, %v129
  %v131 = vpop.f32.mrf.mxu0
  %v132 = vpop.f32.mrf.mxu0
  %v133 = vadd.f32 %v32, %v132
  %v134 = vpop.f32.mrf.mxu0
  %135 = vmatprep.mubr.bf16.mxu0 0
  %136 = vmatmul.mubr.bf16.gmra.mxu0 %v77
  %v137 = vpop.f32.mrf.mxu0
  %v138 = vadd.f32 %v32, %v137
  %v139 = vpop.f32.mrf.mxu0
  %v140 = vpop.f32.mrf.mxu0
  %v141 = vadd.f32 %v32, %v140
  %v142 = vpop.f32.mrf.mxu0
  %143 = vdwg.mxu0
  %v144 = vlaneseq
  %v145 = vand.u32 %v144, 127
  %vm146 = vcmp.lt.s32.totalorder %v145, 21
  %v147 = vsel %vm146, %v114, -1e+30
  %v148 = vsel %vm146, %v117, -1e+30
  %v149 = vsel %vm146, %v122, -1e+30
  %v150 = vsel %vm146, %v125, -1e+30
  %v151 = vsel %vm146, %v130, -1e+30
  %v152 = vsel %vm146, %v133, -1e+30
  %v153 = vsel %vm146, %v138, -1e+30
  %v154 = vsel %vm146, %v141, -1e+30
  %155 = vmax.xlane.f32.xlu0 %v147
  %v156 = vpop.xlane.xlu0 %155
  %157 = vmax.xlane.f32.xlu0 %v148
  %v158 = vpop.xlane.xlu0 %157
  %159 = vmax.xlane.f32.xlu0 %v149
  %v160 = vpop.xlane.xlu0 %159
  %161 = vmax.xlane.f32.xlu0 %v150
  %v162 = vpop.xlane.xlu0 %161
  %163 = vmax.xlane.f32.xlu0 %v151
  %v164 = vpop.xlane.xlu0 %163
  %165 = vmax.xlane.f32.xlu0 %v152
  %v166 = vpop.xlane.xlu0 %165
  %167 = vmax.xlane.f32.xlu0 %v153
  %v168 = vpop.xlane.xlu0 %167
  %169 = vmax.xlane.f32.xlu0 %v154
  %v170 = vpop.xlane.xlu0 %169
  %v171 = vsub.f32 %v147, %v156
  %v172 = vsub.f32 %v148, %v158
  %v173 = vsub.f32 %v149, %v160
  %v174 = vsub.f32 %v150, %v162
  %v175 = vsub.f32 %v151, %v164
  %v176 = vsub.f32 %v152, %v166
  %v177 = vsub.f32 %v153, %v168
  %v178 = vsub.f32 %v154, %v170
  %v179 = vmul.f32 %v171, 1.442695
  %v180 = vpow.pop %v179
  %v181 = vmul.f32 %v172, 1.442695
  %v182 = vpow.pop %v181
  %v183 = vmul.f32 %v173, 1.442695
  %v184 = vpow.pop %v183
  %v185 = vmul.f32 %v174, 1.442695
  %v186 = vpow.pop %v185
  %v187 = vmul.f32 %v175, 1.442695
  %v188 = vpow.pop %v187
  %v189 = vmul.f32 %v176, 1.442695
  %v190 = vpow.pop %v189
  %v191 = vmul.f32 %v177, 1.442695
  %v192 = vpow.pop %v191
  %v193 = vmul.f32 %v178, 1.442695
  %v194 = vpow.pop %v193
  %195 = vadd.xlane.f32.xlu0 %v180
  %v196 = vpop.xlane.xlu0 %195
  %197 = vadd.xlane.f32.xlu0 %v182
  %v198 = vpop.xlane.xlu0 %197
  %199 = vadd.xlane.f32.xlu0 %v184
  %v200 = vpop.xlane.xlu0 %199
  %201 = vadd.xlane.f32.xlu0 %v186
  %v202 = vpop.xlane.xlu0 %201
  %203 = vadd.xlane.f32.xlu0 %v188
  %v204 = vpop.xlane.xlu0 %203
  %205 = vadd.xlane.f32.xlu0 %v190
  %v206 = vpop.xlane.xlu0 %205
  %207 = vadd.xlane.f32.xlu0 %v192
  %v208 = vpop.xlane.xlu0 %207
  %209 = vadd.xlane.f32.xlu0 %v194
  %v210 = vpop.xlane.xlu0 %209
  %v211 = vlog2.pop %v196
  %v212 = vmul.f32 %v211, 0.6931472
  %v213 = vlog2.pop %v198
  %v214 = vmul.f32 %v213, 0.6931472
  %v215 = vlog2.pop %v200
  %v216 = vmul.f32 %v215, 0.6931472
  %v217 = vlog2.pop %v202
  %v218 = vmul.f32 %v217, 0.6931472
  %v219 = vlog2.pop %v204
  %v220 = vmul.f32 %v219, 0.6931472
  %v221 = vlog2.pop %v206
  %v222 = vmul.f32 %v221, 0.6931472
  %v223 = vlog2.pop %v208
  %v224 = vmul.f32 %v223, 0.6931472
  %v225 = vlog2.pop %v210
  %v226 = vmul.f32 %v225, 0.6931472
  %v227 = vsub.f32 %v171, %v212
  %v228 = vsub.f32 %v172, %v214
  %v229 = vsub.f32 %v173, %v216
  %v230 = vsub.f32 %v174, %v218
  %v231 = vsub.f32 %v175, %v220
  %v232 = vsub.f32 %v176, %v222
  %v233 = vsub.f32 %v177, %v224
  %v234 = vsub.f32 %v178, %v226
  %235 = vst [vmem:[%s3] sm:$0xff] %v227
  %236 = vst [vmem:[%s3 + $0x8] sm:$0xff] %v228
  %237 = vst [vmem:[%s3 + $0x10] sm:$0xff] %v229
  %238 = vst [vmem:[%s3 + $0x18] sm:$0xff] %v230
  %239 = vst [vmem:[%s3 + $0x20] sm:$0xff] %v231
  %240 = vst [vmem:[%s3 + $0x28] sm:$0xff] %v232
  %241 = vst [vmem:[%s3 + $0x30] sm:$0xff] %v233
  %242 = vst [vmem:[%s3 + $0x38] sm:$0xff] %v234
  // Predicated region
  $region14: #{seq2seq_forward.9} parent=0 // pred_check
    _
  $region15: #{seq2seq_forward.9} parent=0 // pred_check_branch
    %244 = sbr.rel (0) target = $region17
  $region16: #{seq2seq_forward.9} parent=0 // pred_region
    _
  $region17: #{seq2seq_forward.9} parent=0 // pred_fallthru
    _
  // Predicated region
  $region18: #{seq2seq_forward.9} parent=0 // pred_check
    _
  $region19: #{seq2seq_forward.9} parent=0 // pred_check_branch
    %246 = sbr.rel (0) target = $region21
  $region20: #{seq2seq_forward.9} parent=0 // pred_region
    _
  $region21: #{seq2seq_forward.9} parent=0 // pred_fallthru
    _

// kernel: seq2seq_forward.6
$region0: #{seq2seq_forward.6}
  #allocation0 [shape = 'u32[]', space=smem, size = 0x4, offset = 0x4, fixed_abs, tag = 'smem constant byte address 0x4 - core index']
  #allocation1 [shape = 'u32[144,128]{1,0:T(1,128)}', space=vmem, size = 0x12000, scoped, tag = 'internal scratch']
  #allocation2 [shape = 'f32[8,32]{1,0:T(8,128)}', space=vmem, size = 0x1000, scoped, tag = 'scratch operand']
  #allocation3 [shape = 'f32[8,32]{1,0:T(8,128)}', space=vmem, size = 0x1000, scoped, tag = 'scratch operand']
  #allocation4 [shape = 'f32[64,128]{1,0:T(8,128)}', space=vmem, size = 0x8000, scoped, tag = 'scratch operand']
  %s0 = inlined_call_operand.vmem [shape: bf16[64,32], index: 0, kind: input, shape index: {}]
  %s1 = inlined_call_operand.vmem [shape: bf16[32,128], index: 1, kind: input, shape index: {}]
  %s2 = inlined_call_operand.vmem [shape: bf16[32,128], index: 2, kind: input, shape index: {}]
  %s3 = inlined_call_operand.vmem [shape: f32[1,128], index: 3, kind: input, shape index: {}]
  %s4 = inlined_call_operand.vmem [shape: f32[8,32], index: 4, kind: output, shape index: {0}]
  %s5 = inlined_call_operand.vmem [shape: f32[8,32], index: 5, kind: output, shape index: {1}]
  %6 = xla_tuple %s4, %s5
  %s7 = sld [smem:[#allocation0]]
  $region42: #{seq2seq_forward.6} parent=0
    _
  %s9 = ssub.s32 1, %s7
  %s10 = scalar_select 0, %s9, %s7
  // Predicated region
  $region2: #{seq2seq_forward.6} parent=0 // pred_check
    _
  $region3: #{seq2seq_forward.6} parent=0 // pred_check_branch
    %12 = sbr.rel (0) target = $region5
  $region4: #{seq2seq_forward.6} parent=0 // pred_region
    _
  $region5: #{seq2seq_forward.6} parent=0 // pred_fallthru
    _
  // Predicated region
  $region6: #{seq2seq_forward.6} parent=0 // pred_check
    _
  $region7: #{seq2seq_forward.6} parent=0 // pred_check_branch
    %14 = sbr.rel (0) target = $region9
  $region8: #{seq2seq_forward.6} parent=0 // pred_region
    _
  $region9: #{seq2seq_forward.6} parent=0 // pred_fallthru
    _
  // Predicated region
  $region10: #{seq2seq_forward.6} parent=0 // pred_check
    _
  $region11: #{seq2seq_forward.6} parent=0 // pred_check_branch
    %16 = sbr.rel (0) target = $region13
  $region12: #{seq2seq_forward.6} parent=0 // pred_region
    _
  $region13: #{seq2seq_forward.6} parent=0 // pred_fallthru
    _
  // Predicated region
  $region14: #{seq2seq_forward.6} parent=0 // pred_check
    _
  $region15: #{seq2seq_forward.6} parent=0 // pred_check_branch
    %18 = sbr.rel (0) target = $region17
  $region16: #{seq2seq_forward.6} parent=0 // pred_region
    _
  $region17: #{seq2seq_forward.6} parent=0 // pred_fallthru
    _
  %p20 = scmp.eq.s32.totalorder 0, 0
  // Predicated region
  $region18: #{seq2seq_forward.6} parent=0 // pred_check
    %p21 = pneg %p20
  $region19: #{seq2seq_forward.6} parent=0 // pred_check_branch
    %23 = sbr.rel (%p21) target = $region21
  $region20: #{seq2seq_forward.6} parent=0 // pred_region
    %vm24 = vcmask 261120
    %25 = vst.msk [vmem:[#allocation2] sm:$0xff] %vm24, 0.0
    %26 = vst.msk [vmem:[#allocation3] sm:$0xff] %vm24, 0.0
  $region21: #{seq2seq_forward.6} parent=0 // pred_fallthru
    _
  %v27 = vld [vmem:[%s0] sm:$0xf]
  %v28 = vld [vmem:[%s0 + $0x4] sm:$0xf]
  %v29 = vld [vmem:[%s0 + $0x8] sm:$0xf]
  %v30 = vld [vmem:[%s0 + $0xc] sm:$0xf]
  %v31 = vld [vmem:[%s0 + $0x10] sm:$0xf]
  %v32 = vld [vmem:[%s0 + $0x14] sm:$0xf]
  %v33 = vld [vmem:[%s0 + $0x18] sm:$0xf]
  %v34 = vld [vmem:[%s0 + $0x1c] sm:$0xf]
  %v35 = vld [vmem:[%s1] sm:$0xf]
  %v36 = vld [vmem:[%s1 + $0x4] sm:$0xf]
  %v37 = vld [vmem:[%s1 + $0x8] sm:$0xf]
  %v38 = vld [vmem:[%s1 + $0xc] sm:$0xf]
  %v39 = vld [vmem:[%s3] sm:$0x1]
  %v41 = vlaneseq
  %v42 = vshrl.u32 %v41, 7
  %v43 = vsub.s32 0, %v42
  %v44 = vrot.slane %v39, %v43
  %v54 = vunpack.c.l.b16 %v27
  %v55 = vunpack.c.l.b16 %v28
  %v56 = vunpack.c.l.b16 %v29
  %v57 = vunpack.c.l.b16 %v30
  %v58 = vunpack.c.l.b16 %v31
  %v59 = vunpack.c.l.b16 %v32
  %v60 = vunpack.c.l.b16 %v33
  %v61 = vunpack.c.l.b16 %v34
  %v62 = vpack.c.b16 %v55, %v54
  %v63 = vpack.c.b16 %v57, %v56
  %v64 = vpack.c.b16 %v59, %v58
  %v65 = vpack.c.b16 %v61, %v60
  %v70 = vunpack.c.l.b16 %v35
  %v71 = vunpack.c.l.b16 %v36
  %v72 = vunpack.c.l.b16 %v37
  %v73 = vunpack.c.l.b16 %v38
  %v74 = vpack.c.b16 %v71, %v70
  %v75 = vpack.c.b16 %v73, %v72
  %vm78 = vcmask 261120
  %v80 = vsel %vm78, %v62, 0
  %v83 = vsel %vm78, %v63, 0
  %v86 = vsel %vm78, %v64, 0
  %v89 = vsel %vm78, %v65, 0
  %91 = vmatprep.subr.bf16.mxu0 0
  %92 = vmatpush1.bf16.msra.mxu0 0
  %93 = vmatprep.subr.bf16.mxu0 0
  %94 = vmatpush1.bf16.msra.mxu0 0
  %95 = vmatprep.subr.bf16.mxu0 0
  %96 = vmatpush1.bf16.msra.mxu0 0
  %97 = vmatprep.subr.bf16.mxu0 0
  %98 = vmatpush1.bf16.msra.mxu0 0
  %99 = vmatprep.subr.bf16.mxu0 0
  %100 = vmatpush1.bf16.msra.mxu0 0
  %101 = vmatprep.subr.bf16.mxu0 0
  %102 = vmatpush1.bf16.msra.mxu0 0
  %103 = vmatprep.subr.bf16.mxu0 0
  %104 = vmatpush1.bf16.msra.mxu0 %v75
  %105 = vmatprep.subr.bf16.mxu0 0
  %106 = vmatpush1.bf16.msra.mxu0 %v74
  %107 = vmatprep.subr.bf16.mxu0 0
  %108 = vmatpush2.bf16.msra.mxu0 0
  %109 = vmatprep.subr.bf16.mxu0 0
  %110 = vmatpush2.bf16.msra.mxu0 0
  %111 = vmatprep.subr.bf16.mxu0 0
  %112 = vmatpush2.bf16.msra.mxu0 0
  %113 = vmatprep.subr.bf16.mxu0 0
  %114 = vmatpush2.bf16.msra.mxu0 0
  %115 = vmatprep.subr.bf16.mxu0 0
  %116 = vmatpush2.bf16.msra.mxu0 0
  %117 = vmatprep.subr.bf16.mxu0 0
  %118 = vmatpush2.bf16.msra.mxu0 0
  %119 = vmatprep.subr.bf16.mxu0 0
  %120 = vmatpush2.bf16.msra.mxu0 0
  %121 = vmatprep.subr.bf16.mxu0 0
  %122 = vmatpush2.bf16.msra.mxu0 0
  %123 = vmatprep.mubr.bf16.mxu0 0
  %124 = vmatmul.mubr.bf16.gmra.mxu0 %v80
  %v125 = vpop.f32.mrf.mxu0
  %v126 = vadd.f32 %v44, %v125
  %v127 = vpop.f32.mrf.mxu0
  %v128 = vpop.f32.mrf.mxu0
  %v129 = vadd.f32 %v44, %v128
  %v130 = vpop.f32.mrf.mxu0
  %131 = vmatprep.mubr.bf16.mxu0 0
  %132 = vmatmul.mubr.bf16.gmra.mxu0 %v83
  %v133 = vpop.f32.mrf.mxu0
  %v134 = vadd.f32 %v44, %v133
  %v135 = vpop.f32.mrf.mxu0
  %v136 = vpop.f32.mrf.mxu0
  %v137 = vadd.f32 %v44, %v136
  %v138 = vpop.f32.mrf.mxu0
  %139 = vmatprep.mubr.bf16.mxu0 0
  %140 = vmatmul.mubr.bf16.gmra.mxu0 %v86
  %v141 = vpop.f32.mrf.mxu0
  %v142 = vadd.f32 %v44, %v141
  %v143 = vpop.f32.mrf.mxu0
  %v144 = vpop.f32.mrf.mxu0
  %v145 = vadd.f32 %v44, %v144
  %v146 = vpop.f32.mrf.mxu0
  %147 = vmatprep.mubr.bf16.mxu0 0
  %148 = vmatmul.mubr.bf16.gmra.mxu0 %v89
  %v149 = vpop.f32.mrf.mxu0
  %v150 = vadd.f32 %v44, %v149
  %v151 = vpop.f32.mrf.mxu0
  %v152 = vpop.f32.mrf.mxu0
  %v153 = vadd.f32 %v44, %v152
  %v154 = vpop.f32.mrf.mxu0
  %155 = vdwg.mxu0
  %156 = vst [vmem:[#allocation4] sm:$0xff] %v126
  %157 = vst [vmem:[#allocation4 + $0x8] sm:$0xff] %v129
  %158 = vst [vmem:[#allocation4 + $0x10] sm:$0xff] %v134
  %159 = vst [vmem:[#allocation4 + $0x18] sm:$0xff] %v137
  %160 = vst [vmem:[#allocation4 + $0x20] sm:$0xff] %v142
  %161 = vst [vmem:[#allocation4 + $0x28] sm:$0xff] %v145
  %162 = vst [vmem:[#allocation4 + $0x30] sm:$0xff] %v150
  %163 = vst [vmem:[#allocation4 + $0x38] sm:$0xff] %v153
  %v164 = vld [vmem:[#allocation2] sm:$0xff]
  %v165 = vld [vmem:[#allocation3] sm:$0xff]
  %v166 = vld [vmem:[#allocation4] sm:$0xff]
  %v167 = vpack.c.bf16 %v164, %v164
  %v168 = vld [vmem:[%s2] sm:$0xf]
  %v169 = vld [vmem:[%s2 + $0x4] sm:$0xf]
  %v170 = vld [vmem:[%s2 + $0x8] sm:$0xf]
  %v171 = vld [vmem:[%s2 + $0xc] sm:$0xf]
  %v176 = vunpack.c.l.b16 %v168
  %v177 = vunpack.c.l.b16 %v169
  %v178 = vunpack.c.l.b16 %v170
  %v179 = vunpack.c.l.b16 %v171
  %v180 = vpack.c.b16 %v177, %v176
  %v181 = vpack.c.b16 %v179, %v178
  %v185 = vsel %vm78, %v167, 0
  %187 = vmatprep.subr.bf16.mxu0 0
  %188 = vmatpush1.bf16.msra.mxu0 0
  %189 = vmatprep.subr.bf16.mxu0 0
  %190 = vmatpush1.bf16.msra.mxu0 0
  %191 = vmatprep.subr.bf16.mxu0 0
  %192 = vmatpush1.bf16.msra.mxu0 0
  %193 = vmatprep.subr.bf16.mxu0 0
  %194 = vmatpush1.bf16.msra.mxu0 0
  %195 = vmatprep.subr.bf16.mxu0 0
  %196 = vmatpush1.bf16.msra.mxu0 0
  %197 = vmatprep.subr.bf16.mxu0 0
  %198 = vmatpush1.bf16.msra.mxu0 0
  %199 = vmatprep.subr.bf16.mxu0 0
  %200 = vmatpush1.bf16.msra.mxu0 %v181
  %201 = vmatprep.subr.bf16.mxu0 0
  %202 = vmatpush1.bf16.msra.mxu0 %v180
  %203 = vmatprep.subr.bf16.mxu0 0
  %204 = vmatpush2.bf16.msra.mxu0 0
  %205 = vmatprep.subr.bf16.mxu0 0
  %206 = vmatpush2.bf16.msra.mxu0 0
  %207 = vmatprep.subr.bf16.mxu0 0
  %208 = vmatpush2.bf16.msra.mxu0 0
  %209 = vmatprep.subr.bf16.mxu0 0
  %210 = vmatpush2.bf16.msra.mxu0 0
  %211 = vmatprep.subr.bf16.mxu0 0
  %212 = vmatpush2.bf16.msra.mxu0 0
  %213 = vmatprep.subr.bf16.mxu0 0
  %214 = vmatpush2.bf16.msra.mxu0 0
  %215 = vmatprep.subr.bf16.mxu0 0
  %216 = vmatpush2.bf16.msra.mxu0 0
  %217 = vmatprep.subr.bf16.mxu0 0
  %218 = vmatpush2.bf16.msra.mxu0 0
  %219 = vmatprep.mubr.bf16.mxu0 0
  %220 = vmatmul.mubr.bf16.gmra.mxu0 %v185
  %v221 = vpop.f32.mrf.mxu0
  %v222 = vadd.f32 0.0, %v221
  %v223 = vpop.f32.mrf.mxu0
  %v224 = vpop.f32.mrf.mxu0
  %v225 = vpop.f32.mrf.mxu0
  %226 = vdwg.mxu0
  %v227 = vadd.f32 %v166, %v222
  %v228 = vxor.u32 %v227, 2147483648
  %v229 = vmul.f32 %v228, 1.442695
  %v230 = vpow.pop %v229
  %v231 = vadd.f32 %v230, 1.0
  %v232 = vrcp.pop %v231
  %v233 = vmul.f32 1.0, %v232
  %v234 = vtanh.pop %v227
  %236 = vrot.lane.b32.xlu0 %v165, 32
  %v237 = vpop.permute.xlu0 %236
  %v239 = vmul.f32 %v233, %v237
  %241 = vrot.lane.b32.xlu0 %v234, 32
  %v242 = vpop.permute.xlu0 %241
  %v244 = vmul.f32 %v233, %v242
  %246 = vrot.lane.b32.xlu0 %v244, 32
  %v247 = vpop.permute.xlu0 %246
  %v249 = vadd.f32 %v239, %v247
  %v250 = vtanh.pop %v249
  %252 = vrot.lane.b32.xlu0 %v250, 32
  %v253 = vpop.permute.xlu0 %252
  %v255 = vmul.f32 %v233, %v253
  %s256 = scalar_lea.vmem [#allocation4], 8
  %v257 = vld [vmem:[%s256] sm:$0xff]
  %v258 = vpack.c.bf16 %v255, %v255
  %260 = vrot.lane.b32.xlu0 %v258, 64
  %v261 = vpop.permute.xlu0 %260
  %v263 = vsel %vm78, %v261, 0
  %265 = vmatprep.subr.bf16.mxu0 0
  %266 = vmatpush1.bf16.msra.mxu0 0
  %267 = vmatprep.subr.bf16.mxu0 0
  %268 = vmatpush1.bf16.msra.mxu0 0
  %269 = vmatprep.subr.bf16.mxu0 0
  %270 = vmatpush1.bf16.msra.mxu0 0
  %271 = vmatprep.subr.bf16.mxu0 0
  %272 = vmatpush1.bf16.msra.mxu0 0
  %273 = vmatprep.subr.bf16.mxu0 0
  %274 = vmatpush1.bf16.msra.mxu0 0
  %275 = vmatprep.subr.bf16.mxu0 0
  %276 = vmatpush1.bf16.msra.mxu0 0
  %277 = vmatprep.subr.bf16.mxu0 0
  %278 = vmatpush1.bf16.msra.mxu0 %v181
  %279 = vmatprep.subr.bf16.mxu0 0
  %280 = vmatpush1.bf16.msra.mxu0 %v180
  %281 = vmatprep.subr.bf16.mxu0 0
  %282 = vmatpush2.bf16.msra.mxu0 0
  %283 = vmatprep.subr.bf16.mxu0 0
  %284 = vmatpush2.bf16.msra.mxu0 0
  %285 = vmatprep.subr.bf16.mxu0 0
  %286 = vmatpush2.bf16.msra.mxu0 0
  %287 = vmatprep.subr.bf16.mxu0 0
  %288 = vmatpush2.bf16.msra.mxu0 0
  %289 = vmatprep.subr.bf16.mxu0 0
  %290 = vmatpush2.bf16.msra.mxu0 0
  %291 = vmatprep.subr.bf16.mxu0 0
  %292 = vmatpush2.bf16.msra.mxu0 0
  %293 = vmatprep.subr.bf16.mxu0 0
  %294 = vmatpush2.bf16.msra.mxu0 0
  %295 = vmatprep.subr.bf16.mxu0 0
  %296 = vmatpush2.bf16.msra.mxu0 0
  %297 = vmatprep.mubr.bf16.mxu0 0
  %298 = vmatmul.mubr.bf16.gmra.mxu0 %v263
  %v299 = vpop.f32.mrf.mxu0
  %v300 = vadd.f32 0.0, %v299
  %v301 = vpop.f32.mrf.mxu0
  %v302 = vpop.f32.mrf.mxu0
  %v303 = vpop.f32.mrf.mxu0
  %304 = vdwg.mxu0
  %v305 = vadd.f32 %v257, %v300
  %v306 = vxor.u32 %v305, 2147483648
  %v307 = vmul.f32 %v306, 1.442695
  %v308 = vpow.pop %v307
  %v309 = vadd.f32 %v308, 1.0
  %v310 = vrcp.pop %v309
  %v311 = vmul.f32 1.0, %v310
  %v312 = vtanh.pop %v305
  %v313 = vmul.f32 %v311, %v249
  %315 = vrot.lane.b32.xlu0 %v312, 32
  %v316 = vpop.permute.xlu0 %315
  %v318 = vmul.f32 %v311, %v316
  %320 = vrot.lane.b32.xlu0 %v318, 32
  %v321 = vpop.permute.xlu0 %320
  %v323 = vadd.f32 %v313, %v321
  %v324 = vtanh.pop %v323
  %326 = vrot.lane.b32.xlu0 %v324, 32
  %v327 = vpop.permute.xlu0 %326
  %v329 = vmul.f32 %v311, %v327
  %s330 = scalar_lea.vmem [#allocation4], 16
  %v331 = vld [vmem:[%s330] sm:$0xff]
  %v332 = vpack.c.bf16 %v329, %v329
  %334 = vrot.lane.b32.xlu0 %v332, 64
  %v335 = vpop.permute.xlu0 %334
  %v337 = vsel %vm78, %v335, 0
  %339 = vmatprep.subr.bf16.mxu0 0
  %340 = vmatpush1.bf16.msra.mxu0 0
  %341 = vmatprep.subr.bf16.mxu0 0
  %342 = vmatpush1.bf16.msra.mxu0 0
  %343 = vmatprep.subr.bf16.mxu0 0
  %344 = vmatpush1.bf16.msra.mxu0 0
  %345 = vmatprep.subr.bf16.mxu0 0
  %346 = vmatpush1.bf16.msra.mxu0 0
  %347 = vmatprep.subr.bf16.mxu0 0
  %348 = vmatpush1.bf16.msra.mxu0 0
  %349 = vmatprep.subr.bf16.mxu0 0
  %350 = vmatpush1.bf16.msra.mxu0 0
  %351 = vmatprep.subr.bf16.mxu0 0
  %352 = vmatpush1.bf16.msra.mxu0 %v181
  %353 = vmatprep.subr.bf16.mxu0 0
  %354 = vmatpush1.bf16.msra.mxu0 %v180
  %355 = vmatprep.subr.bf16.mxu0 0
  %356 = vmatpush2.bf16.msra.mxu0 0
  %357 = vmatprep.subr.bf16.mxu0 0
  %358 = vmatpush2.bf16.msra.mxu0 0
  %359 = vmatprep.subr.bf16.mxu0 0
  %360 = vmatpush2.bf16.msra.mxu0 0
  %361 = vmatprep.subr.bf16.mxu0 0
  %362 = vmatpush2.bf16.msra.mxu0 0
  %363 = vmatprep.subr.bf16.mxu0 0
  %364 = vmatpush2.bf16.msra.mxu0 0
  %365 = vmatprep.subr.bf16.mxu0 0
  %366 = vmatpush2.bf16.msra.mxu0 0
  %367 = vmatprep.subr.bf16.mxu0 0
  %368 = vmatpush2.bf16.msra.mxu0 0
  %369 = vmatprep.subr.bf16.mxu0 0
  %370 = vmatpush2.bf16.msra.mxu0 0
  %371 = vmatprep.mubr.bf16.mxu0 0
  %372 = vmatmul.mubr.bf16.gmra.mxu0 %v337
  %v373 = vpop.f32.mrf.mxu0
  %v374 = vadd.f32 0.0, %v373
  %v375 = vpop.f32.mrf.mxu0
  %v376 = vpop.f32.mrf.mxu0
  %v377 = vpop.f32.mrf.mxu0
  %378 = vdwg.mxu0
  %v379 = vadd.f32 %v331, %v374
  %v380 = vxor.u32 %v379, 2147483648
  %v381 = vmul.f32 %v380, 1.442695
  %v382 = vpow.pop %v381
  %v383 = vadd.f32 %v382, 1.0
  %v384 = vrcp.pop %v383
  %v385 = vmul.f32 1.0, %v384
  %v386 = vtanh.pop %v379
  %v387 = vmul.f32 %v385, %v323
  %389 = vrot.lane.b32.xlu0 %v386, 32
  %v390 = vpop.permute.xlu0 %389
  %v392 = vmul.f32 %v385, %v390
  %394 = vrot.lane.b32.xlu0 %v392, 32
  %v395 = vpop.permute.xlu0 %394
  %v397 = vadd.f32 %v387, %v395
  %v398 = vtanh.pop %v397
  %400 = vrot.lane.b32.xlu0 %v398, 32
  %v401 = vpop.permute.xlu0 %400
  %v403 = vmul.f32 %v385, %v401
  %s404 = scalar_lea.vmem [#allocation4], 24
  %v405 = vld [vmem:[%s404] sm:$0xff]
  %v406 = vpack.c.bf16 %v403, %v403
  %408 = vrot.lane.b32.xlu0 %v406, 64
  %v409 = vpop.permute.xlu0 %408
  %v411 = vsel %vm78, %v409, 0
  %413 = vmatprep.subr.bf16.mxu0 0
  %414 = vmatpush1.bf16.msra.mxu0 0
  %415 = vmatprep.subr.bf16.mxu0 0
  %416 = vmatpush1.bf16.msra.mxu0 0
  %417 = vmatprep.subr.bf16.mxu0 0
  %418 = vmatpush1.bf16.msra.mxu0 0
  %419 = vmatprep.subr.bf16.mxu0 0
  %420 = vmatpush1.bf16.msra.mxu0 0
  %421 = vmatprep.subr.bf16.mxu0 0
  %422 = vmatpush1.bf16.msra.mxu0 0
  %423 = vmatprep.subr.bf16.mxu0 0
  %424 = vmatpush1.bf16.msra.mxu0 0
  %425 = vmatprep.subr.bf16.mxu0 0
  %426 = vmatpush1.bf16.msra.mxu0 %v181
  %427 = vmatprep.subr.bf16.mxu0 0
  %428 = vmatpush1.bf16.msra.mxu0 %v180
  %429 = vmatprep.subr.bf16.mxu0 0
  %430 = vmatpush2.bf16.msra.mxu0 0
  %431 = vmatprep.subr.bf16.mxu0 0
  %432 = vmatpush2.bf16.msra.mxu0 0
  %433 = vmatprep.subr.bf16.mxu0 0
  %434 = vmatpush2.bf16.msra.mxu0 0
  %435 = vmatprep.subr.bf16.mxu0 0
  %436 = vmatpush2.bf16.msra.mxu0 0
  %437 = vmatprep.subr.bf16.mxu0 0
  %438 = vmatpush2.bf16.msra.mxu0 0
  %439 = vmatprep.subr.bf16.mxu0 0
  %440 = vmatpush2.bf16.msra.mxu0 0
  %441 = vmatprep.subr.bf16.mxu0 0
  %442 = vmatpush2.bf16.msra.mxu0 0
  %443 = vmatprep.subr.bf16.mxu0 0
  %444 = vmatpush2.bf16.msra.mxu0 0
  %445 = vmatprep.mubr.bf16.mxu0 0
  %446 = vmatmul.mubr.bf16.gmra.mxu0 %v411
  %v447 = vpop.f32.mrf.mxu0
  %v448 = vadd.f32 0.0, %v447
  %v449 = vpop.f32.mrf.mxu0
  %v450 = vpop.f32.mrf.mxu0
  %v451 = vpop.f32.mrf.mxu0
  %452 = vdwg.mxu0
  %v453 = vadd.f32 %v405, %v448
  %v454 = vxor.u32 %v453, 2147483648
  %v455 = vmul.f32 %v454, 1.442695
  %v456 = vpow.pop %v455
  %v457 = vadd.f32 %v456, 1.0
  %v458 = vrcp.pop %v457
  %v459 = vmul.f32 1.0, %v458
  %v460 = vtanh.pop %v453
  %v461 = vmul.f32 %v459, %v397
  %463 = vrot.lane.b32.xlu0 %v460, 32
  %v464 = vpop.permute.xlu0 %463
  %v466 = vmul.f32 %v459, %v464
  %468 = vrot.lane.b32.xlu0 %v466, 32
  %v469 = vpop.permute.xlu0 %468
  %v471 = vadd.f32 %v461, %v469
  %v472 = vtanh.pop %v471
  %474 = vrot.lane.b32.xlu0 %v472, 32
  %v475 = vpop.permute.xlu0 %474
  %v477 = vmul.f32 %v459, %v475
  %s478 = scalar_lea.vmem [#allocation4], 32
  %v479 = vld [vmem:[%s478] sm:$0xff]
  %v480 = vpack.c.bf16 %v477, %v477
  %482 = vrot.lane.b32.xlu0 %v480, 64
  %v483 = vpop.permute.xlu0 %482
  %v485 = vsel %vm78, %v483, 0
  %487 = vmatprep.subr.bf16.mxu0 0
  %488 = vmatpush1.bf16.msra.mxu0 0
  %489 = vmatprep.subr.bf16.mxu0 0
  %490 = vmatpush1.bf16.msra.mxu0 0
  %491 = vmatprep.subr.bf16.mxu0 0
  %492 = vmatpush1.bf16.msra.mxu0 0
  %493 = vmatprep.subr.bf16.mxu0 0
  %494 = vmatpush1.bf16.msra.mxu0 0
  %495 = vmatprep.subr.bf16.mxu0 0
  %496 = vmatpush1.bf16.msra.mxu0 0
  %497 = vmatprep.subr.bf16.mxu0 0
  %498 = vmatpush1.bf16.msra.mxu0 0
  %499 = vmatprep.subr.bf16.mxu0 0
  %500 = vmatpush1.bf16.msra.mxu0 %v181
  %501 = vmatprep.subr.bf16.mxu0 0
  %502 = vmatpush1.bf16.msra.mxu0 %v180
  %503 = vmatprep.subr.bf16.mxu0 0
  %504 = vmatpush2.bf16.msra.mxu0 0
  %505 = vmatprep.subr.bf16.mxu0 0
  %506 = vmatpush2.bf16.msra.mxu0 0
  %507 = vmatprep.subr.bf16.mxu0 0
  %508 = vmatpush2.bf16.msra.mxu0 0
  %509 = vmatprep.subr.bf16.mxu0 0
  %510 = vmatpush2.bf16.msra.mxu0 0
  %511 = vmatprep.subr.bf16.mxu0 0
  %512 = vmatpush2.bf16.msra.mxu0 0
  %513 = vmatprep.subr.bf16.mxu0 0
  %514 = vmatpush2.bf16.msra.mxu0 0
  %515 = vmatprep.subr.bf16.mxu0 0
  %516 = vmatpush2.bf16.msra.mxu0 0
  %517 = vmatprep.subr.bf16.mxu0 0
  %518 = vmatpush2.bf16.msra.mxu0 0
  %519 = vmatprep.mubr.bf16.mxu0 0
  %520 = vmatmul.mubr.bf16.gmra.mxu0 %v485
  %v521 = vpop.f32.mrf.mxu0
  %v522 = vadd.f32 0.0, %v521
  %v523 = vpop.f32.mrf.mxu0
  %v524 = vpop.f32.mrf.mxu0
  %v525 = vpop.f32.mrf.mxu0
  %526 = vdwg.mxu0
  %v527 = vadd.f32 %v479, %v522
  %v528 = vxor.u32 %v527, 2147483648
  %v529 = vmul.f32 %v528, 1.442695
  %v530 = vpow.pop %v529
  %v531 = vadd.f32 %v530, 1.0
  %v532 = vrcp.pop %v531
  %v533 = vmul.f32 1.0, %v532
  %v534 = vtanh.pop %v527
  %v535 = vmul.f32 %v533, %v471
  %537 = vrot.lane.b32.xlu0 %v534, 32
  %v538 = vpop.permute.xlu0 %537
  %v540 = vmul.f32 %v533, %v538
  %542 = vrot.lane.b32.xlu0 %v540, 32
  %v543 = vpop.permute.xlu0 %542
  %v545 = vadd.f32 %v535, %v543
  %v546 = vtanh.pop %v545
  %548 = vrot.lane.b32.xlu0 %v546, 32
  %v549 = vpop.permute.xlu0 %548
  %v551 = vmul.f32 %v533, %v549
  %s552 = scalar_lea.vmem [#allocation4], 40
  %v553 = vld [vmem:[%s552] sm:$0xff]
  %v554 = vpack.c.bf16 %v551, %v551
  %556 = vrot.lane.b32.xlu0 %v554, 64
  %v557 = vpop.permute.xlu0 %556
  %v559 = vsel %vm78, %v557, 0
  %561 = vmatprep.subr.bf16.mxu0 0
  %562 = vmatpush1.bf16.msra.mxu0 0
  %563 = vmatprep.subr.bf16.mxu0 0
  %564 = vmatpush1.bf16.msra.mxu0 0
  %565 = vmatprep.subr.bf16.mxu0 0
  %566 = vmatpush1.bf16.msra.mxu0 0
  %567 = vmatprep.subr.bf16.mxu0 0
  %568 = vmatpush1.bf16.msra.mxu0 0
  %569 = vmatprep.subr.bf16.mxu0 0
  %570 = vmatpush1.bf16.msra.mxu0 0
  %571 = vmatprep.subr.bf16.mxu0 0
  %572 = vmatpush1.bf16.msra.mxu0 0
  %573 = vmatprep.subr.bf16.mxu0 0
  %574 = vmatpush1.bf16.msra.mxu0 %v181
  %575 = vmatprep.subr.bf16.mxu0 0
  %576 = vmatpush1.bf16.msra.mxu0 %v180
  %577 = vmatprep.subr.bf16.mxu0 0
  %578 = vmatpush2.bf16.msra.mxu0 0
  %579 = vmatprep.subr.bf16.mxu0 0
  %580 = vmatpush2.bf16.msra.mxu0 0
  %581 = vmatprep.subr.bf16.mxu0 0
  %582 = vmatpush2.bf16.msra.mxu0 0
  %583 = vmatprep.subr.bf16.mxu0 0
  %584 = vmatpush2.bf16.msra.mxu0 0
  %585 = vmatprep.subr.bf16.mxu0 0
  %586 = vmatpush2.bf16.msra.mxu0 0
  %587 = vmatprep.subr.bf16.mxu0 0
  %588 = vmatpush2.bf16.msra.mxu0 0
  %589 = vmatprep.subr.bf16.mxu0 0
  %590 = vmatpush2.bf16.msra.mxu0 0
  %591 = vmatprep.subr.bf16.mxu0 0
  %592 = vmatpush2.bf16.msra.mxu0 0
  %593 = vmatprep.mubr.bf16.mxu0 0
  %594 = vmatmul.mubr.bf16.gmra.mxu0 %v559
  %v595 = vpop.f32.mrf.mxu0
  %v596 = vadd.f32 0.0, %v595
  %v597 = vpop.f32.mrf.mxu0
  %v598 = vpop.f32.mrf.mxu0
  %v599 = vpop.f32.mrf.mxu0
  %600 = vdwg.mxu0
  %v601 = vadd.f32 %v553, %v596
  %v602 = vxor.u32 %v601, 2147483648
  %v603 = vmul.f32 %v602, 1.442695
  %v604 = vpow.pop %v603
  %v605 = vadd.f32 %v604, 1.0
  %v606 = vrcp.pop %v605
  %v607 = vmul.f32 1.0, %v606
  %v608 = vtanh.pop %v601
  %v609 = vmul.f32 %v607, %v545
  %611 = vrot.lane.b32.xlu0 %v608, 32
  %v612 = vpop.permute.xlu0 %611
  %v614 = vmul.f32 %v607, %v612
  %616 = vrot.lane.b32.xlu0 %v614, 32
  %v617 = vpop.permute.xlu0 %616
  %v619 = vadd.f32 %v609, %v617
  %v620 = vtanh.pop %v619
  %622 = vrot.lane.b32.xlu0 %v620, 32
  %v623 = vpop.permute.xlu0 %622
  %v625 = vmul.f32 %v607, %v623
  %s626 = scalar_lea.vmem [#allocation4], 48
  %v627 = vld [vmem:[%s626] sm:$0xff]
  %v628 = vpack.c.bf16 %v625, %v625
  %630 = vrot.lane.b32.xlu0 %v628, 64
  %v631 = vpop.permute.xlu0 %630
  %v633 = vsel %vm78, %v631, 0
  %635 = vmatprep.subr.bf16.mxu0 0
  %636 = vmatpush1.bf16.msra.mxu0 0
  %637 = vmatprep.subr.bf16.mxu0 0
  %638 = vmatpush1.bf16.msra.mxu0 0
  %639 = vmatprep.subr.bf16.mxu0 0
  %640 = vmatpush1.bf16.msra.mxu0 0
  %641 = vmatprep.subr.bf16.mxu0 0
  %642 = vmatpush1.bf16.msra.mxu0 0
  %643 = vmatprep.subr.bf16.mxu0 0
  %644 = vmatpush1.bf16.msra.mxu0 0
  %645 = vmatprep.subr.bf16.mxu0 0
  %646 = vmatpush1.bf16.msra.mxu0 0
  %647 = vmatprep.subr.bf16.mxu0 0
  %648 = vmatpush1.bf16.msra.mxu0 %v181
  %649 = vmatprep.subr.bf16.mxu0 0
  %650 = vmatpush1.bf16.msra.mxu0 %v180
  %651 = vmatprep.subr.bf16.mxu0 0
  %652 = vmatpush2.bf16.msra.mxu0 0
  %653 = vmatprep.subr.bf16.mxu0 0
  %654 = vmatpush2.bf16.msra.mxu0 0
  %655 = vmatprep.subr.bf16.mxu0 0
  %656 = vmatpush2.bf16.msra.mxu0 0
  %657 = vmatprep.subr.bf16.mxu0 0
  %658 = vmatpush2.bf16.msra.mxu0 0
  %659 = vmatprep.subr.bf16.mxu0 0
  %660 = vmatpush2.bf16.msra.mxu0 0
  %661 = vmatprep.subr.bf16.mxu0 0
  %662 = vmatpush2.bf16.msra.mxu0 0
  %663 = vmatprep.subr.bf16.mxu0 0
  %664 = vmatpush2.bf16.msra.mxu0 0
  %665 = vmatprep.subr.bf16.mxu0 0
  %666 = vmatpush2.bf16.msra.mxu0 0
  %667 = vmatprep.mubr.bf16.mxu0 0
  %668 = vmatmul.mubr.bf16.gmra.mxu0 %v633
  %v669 = vpop.f32.mrf.mxu0
  %v670 = vadd.f32 0.0, %v669
  %v671 = vpop.f32.mrf.mxu0
  %v672 = vpop.f32.mrf.mxu0
  %v673 = vpop.f32.mrf.mxu0
  %674 = vdwg.mxu0
  %v675 = vadd.f32 %v627, %v670
  %v676 = vxor.u32 %v675, 2147483648
  %v677 = vmul.f32 %v676, 1.442695
  %v678 = vpow.pop %v677
  %v679 = vadd.f32 %v678, 1.0
  %v680 = vrcp.pop %v679
  %v681 = vmul.f32 1.0, %v680
  %v682 = vtanh.pop %v675
  %v683 = vmul.f32 %v681, %v619
  %685 = vrot.lane.b32.xlu0 %v682, 32
  %v686 = vpop.permute.xlu0 %685
  %v688 = vmul.f32 %v681, %v686
  %690 = vrot.lane.b32.xlu0 %v688, 32
  %v691 = vpop.permute.xlu0 %690
  %v693 = vadd.f32 %v683, %v691
  %v694 = vtanh.pop %v693
  %696 = vrot.lane.b32.xlu0 %v694, 32
  %v697 = vpop.permute.xlu0 %696
  %v699 = vmul.f32 %v681, %v697
  %s700 = scalar_lea.vmem [#allocation4], 56
  %v701 = vld [vmem:[%s700] sm:$0xff]
  %v702 = vpack.c.bf16 %v699, %v699
  %704 = vrot.lane.b32.xlu0 %v702, 64
  %v705 = vpop.permute.xlu0 %704
  %v707 = vsel %vm78, %v705, 0
  %709 = vmatprep.subr.bf16.mxu0 0
  %710 = vmatpush1.bf16.msra.mxu0 0
  %711 = vmatprep.subr.bf16.mxu0 0
  %712 = vmatpush1.bf16.msra.mxu0 0
  %713 = vmatprep.subr.bf16.mxu0 0
  %714 = vmatpush1.bf16.msra.mxu0 0
  %715 = vmatprep.subr.bf16.mxu0 0
  %716 = vmatpush1.bf16.msra.mxu0 0
  %717 = vmatprep.subr.bf16.mxu0 0
  %718 = vmatpush1.bf16.msra.mxu0 0
  %719 = vmatprep.subr.bf16.mxu0 0
  %720 = vmatpush1.bf16.msra.mxu0 0
  %721 = vmatprep.subr.bf16.mxu0 0
  %722 = vmatpush1.bf16.msra.mxu0 %v181
  %723 = vmatprep.subr.bf16.mxu0 0
  %724 = vmatpush1.bf16.msra.mxu0 %v180
  %725 = vmatprep.subr.bf16.mxu0 0
  %726 = vmatpush2.bf16.msra.mxu0 0
  %727 = vmatprep.subr.bf16.mxu0 0
  %728 = vmatpush2.bf16.msra.mxu0 0
  %729 = vmatprep.subr.bf16.mxu0 0
  %730 = vmatpush2.bf16.msra.mxu0 0
  %731 = vmatprep.subr.bf16.mxu0 0
  %732 = vmatpush2.bf16.msra.mxu0 0
  %733 = vmatprep.subr.bf16.mxu0 0
  %734 = vmatpush2.bf16.msra.mxu0 0
  %735 = vmatprep.subr.bf16.mxu0 0
  %736 = vmatpush2.bf16.msra.mxu0 0
  %737 = vmatprep.subr.bf16.mxu0 0
  %738 = vmatpush2.bf16.msra.mxu0 0
  %739 = vmatprep.subr.bf16.mxu0 0
  %740 = vmatpush2.bf16.msra.mxu0 0
  %741 = vmatprep.mubr.bf16.mxu0 0
  %742 = vmatmul.mubr.bf16.gmra.mxu0 %v707
  %v743 = vpop.f32.mrf.mxu0
  %v744 = vadd.f32 0.0, %v743
  %v745 = vpop.f32.mrf.mxu0
  %v746 = vpop.f32.mrf.mxu0
  %v747 = vpop.f32.mrf.mxu0
  %748 = vdwg.mxu0
  %v749 = vadd.f32 %v701, %v744
  %v750 = vxor.u32 %v749, 2147483648
  %v751 = vmul.f32 %v750, 1.442695
  %v752 = vpow.pop %v751
  %v753 = vadd.f32 %v752, 1.0
  %v754 = vrcp.pop %v753
  %v755 = vmul.f32 1.0, %v754
  %v756 = vtanh.pop %v749
  %v757 = vmul.f32 %v755, %v693
  %759 = vrot.lane.b32.xlu0 %v756, 32
  %v760 = vpop.permute.xlu0 %759
  %v762 = vmul.f32 %v755, %v760
  %764 = vrot.lane.b32.xlu0 %v762, 32
  %v765 = vpop.permute.xlu0 %764
  %v767 = vadd.f32 %v757, %v765
  %v768 = vtanh.pop %v767
  %770 = vrot.lane.b32.xlu0 %v768, 32
  %v771 = vpop.permute.xlu0 %770
  %v773 = vmul.f32 %v755, %v771
  %775 = vrot.lane.b32.xlu0 %v773, 64
  %v776 = vpop.permute.xlu0 %775
  %778 = vst.msk [vmem:[#allocation2] sm:$0xff] %vm78, %v776
  %780 = vrot.lane.b32.xlu0 %v767, 96
  %v781 = vpop.permute.xlu0 %780
  %783 = vst.msk [vmem:[#allocation3] sm:$0xff] %vm78, %v781
  // Predicated region
  $region22: #{seq2seq_forward.6} parent=0 // pred_check
    %p784 = pneg %p20
  $region23: #{seq2seq_forward.6} parent=0 // pred_check_branch
    %786 = sbr.rel (%p784) target = $region25
  $region24: #{seq2seq_forward.6} parent=0 // pred_region
    %787 = vst.msk [vmem:[%s4] sm:$0xff] %vm78, %v776
    %788 = vst.msk [vmem:[%s5] sm:$0xff] %vm78, %v781
  $region25: #{seq2seq_forward.6} parent=0 // pred_fallthru
    _
  // Predicated region
  $region26: #{seq2seq_forward.6} parent=0 // pred_check
    _
  $region27: #{seq2seq_forward.6} parent=0 // pred_check_branch
    %790 = sbr.rel (0) target = $region29
  $region28: #{seq2seq_forward.6} parent=0 // pred_region
    _
  $region29: #{seq2seq_forward.6} parent=0 // pred_fallthru
    _
  // Predicated region
  $region30: #{seq2seq_forward.6} parent=0 // pred_check
    _
  $region31: #{seq2seq_forward.6} parent=0 // pred_check_branch
    %792 = sbr.rel (0) target = $region33
  $region32: #{seq2seq_forward.6} parent=0 // pred_region
    _
  $region33: #{seq2seq_forward.6} parent=0 // pred_fallthru
    _
  // Predicated region
  $region34: #{seq2seq_forward.6} parent=0 // pred_check
    _
  $region35: #{seq2seq_forward.6} parent=0 // pred_check_branch
    %794 = sbr.rel (0) target = $region37
  $region36: #{seq2seq_forward.6} parent=0 // pred_region
    _
  $region37: #{seq2seq_forward.6} parent=0 // pred_fallthru
    _
  // Predicated region
  $region38: #{seq2seq_forward.6} parent=0 // pred_check
    _
  $region39: #{seq2seq_forward.6} parent=0 // pred_check_branch
    %796 = sbr.rel (0) target = $region41
  $region40: #{seq2seq_forward.6} parent=0 // pred_region
    _
  $region41: #{seq2seq_forward.6} parent=0 // pred_fallthru
    _

// kernel: seq2seq_forward.7
$region0: #{seq2seq_forward.7}
  #allocation0 [shape = 'u32[]', space=smem, size = 0x4, offset = 0x4, fixed_abs, tag = 'smem constant byte address 0x4 - core index']
  #allocation1 [shape = 'u32[144,128]{1,0:T(1,128)}', space=vmem, size = 0x12000, scoped, tag = 'internal scratch']
  #allocation2 [shape = 'f32[8,32]{1,0:T(8,128)}', space=vmem, size = 0x1000, scoped, tag = 'scratch operand']
  #allocation3 [shape = 'f32[8,32]{1,0:T(8,128)}', space=vmem, size = 0x1000, scoped, tag = 'scratch operand']
  #allocation4 [shape = 'f32[64,128]{1,0:T(8,128)}', space=vmem, size = 0x8000, scoped, tag = 'scratch operand']
  #allocation5 [shape = 'f32[64,32]{1,0:T(8,128)}', space=vmem, size = 0x8000, scoped, tag = 'scratch operand']
  %s0 = inlined_call_operand.vmem [shape: bf16[64,32], index: 0, kind: input, shape index: {}]
  %s1 = inlined_call_operand.vmem [shape: f32[8,32], index: 1, kind: input, shape index: {}]
  %s2 = inlined_call_operand.vmem [shape: f32[8,32], index: 2, kind: input, shape index: {}]
  %s3 = inlined_call_operand.vmem [shape: bf16[32,128], index: 3, kind: input, shape index: {}]
  %s4 = inlined_call_operand.vmem [shape: bf16[32,128], index: 4, kind: input, shape index: {}]
  %s5 = inlined_call_operand.vmem [shape: f32[1,128], index: 5, kind: input, shape index: {}]
  %s6 = inlined_call_operand.vmem [shape: bf16[64,32], index: 6, kind: output, shape index: {}]
  %s7 = sld [smem:[#allocation0]]
  $region38: #{seq2seq_forward.7} parent=0
    _
  %s9 = ssub.s32 1, %s7
  %s10 = scalar_select 0, %s9, %s7
  // Predicated region
  $region2: #{seq2seq_forward.7} parent=0 // pred_check
    _
  $region3: #{seq2seq_forward.7} parent=0 // pred_check_branch
    %12 = sbr.rel (0) target = $region5
  $region4: #{seq2seq_forward.7} parent=0 // pred_region
    _
  $region5: #{seq2seq_forward.7} parent=0 // pred_fallthru
    _
  // Predicated region
  $region6: #{seq2seq_forward.7} parent=0 // pred_check
    _
  $region7: #{seq2seq_forward.7} parent=0 // pred_check_branch
    %14 = sbr.rel (0) target = $region9
  $region8: #{seq2seq_forward.7} parent=0 // pred_region
    _
  $region9: #{seq2seq_forward.7} parent=0 // pred_fallthru
    _
  // Predicated region
  $region10: #{seq2seq_forward.7} parent=0 // pred_check
    _
  $region11: #{seq2seq_forward.7} parent=0 // pred_check_branch
    %16 = sbr.rel (0) target = $region13
  $region12: #{seq2seq_forward.7} parent=0 // pred_region
    _
  $region13: #{seq2seq_forward.7} parent=0 // pred_fallthru
    _
  // Predicated region
  $region14: #{seq2seq_forward.7} parent=0 // pred_check
    _
  $region15: #{seq2seq_forward.7} parent=0 // pred_check_branch
    %18 = sbr.rel (0) target = $region17
  $region16: #{seq2seq_forward.7} parent=0 // pred_region
    _
  $region17: #{seq2seq_forward.7} parent=0 // pred_fallthru
    _
  // Predicated region
  $region18: #{seq2seq_forward.7} parent=0 // pred_check
    _
  $region19: #{seq2seq_forward.7} parent=0 // pred_check_branch
    %20 = sbr.rel (0) target = $region21
  $region20: #{seq2seq_forward.7} parent=0 // pred_region
    _
  $region21: #{seq2seq_forward.7} parent=0 // pred_fallthru
    _
  // Predicated region
  $region22: #{seq2seq_forward.7} parent=0 // pred_check
    _
  $region23: #{seq2seq_forward.7} parent=0 // pred_check_branch
    %22 = sbr.rel (0) target = $region25
  $region24: #{seq2seq_forward.7} parent=0 // pred_region
    _
  $region25: #{seq2seq_forward.7} parent=0 // pred_fallthru
    _
  %p24 = scmp.eq.s32.totalorder 0, 0
  // Predicated region
  $region26: #{seq2seq_forward.7} parent=0 // pred_check
    %p25 = pneg %p24
  $region27: #{seq2seq_forward.7} parent=0 // pred_check_branch
    %27 = sbr.rel (%p25) target = $region29
  $region28: #{seq2seq_forward.7} parent=0 // pred_region
    %v28 = vld [vmem:[%s1] sm:$0xff]
    %vm29 = vcmask 261120
    %30 = vst.msk [vmem:[#allocation2] sm:$0xff] %vm29, %v28
    %v31 = vld [vmem:[%s2] sm:$0xff]
    %32 = vst.msk [vmem:[#allocation3] sm:$0xff] %vm29, %v31
  $region29: #{seq2seq_forward.7} parent=0 // pred_fallthru
    _
  %v33 = vld [vmem:[%s0] sm:$0xf]
  %v34 = vld [vmem:[%s0 + $0x4] sm:$0xf]
  %v35 = vld [vmem:[%s0 + $0x8] sm:$0xf]
  %v36 = vld [vmem:[%s0 + $0xc] sm:$0xf]
  %v37 = vld [vmem:[%s0 + $0x10] sm:$0xf]
  %v38 = vld [vmem:[%s0 + $0x14] sm:$0xf]
  %v39 = vld [vmem:[%s0 + $0x18] sm:$0xf]
  %v40 = vld [vmem:[%s0 + $0x1c] sm:$0xf]
  %v41 = vld [vmem:[%s3] sm:$0xf]
  %v42 = vld [vmem:[%s3 + $0x4] sm:$0xf]
  %v43 = vld [vmem:[%s3 + $0x8] sm:$0xf]
  %v44 = vld [vmem:[%s3 + $0xc] sm:$0xf]
  %v45 = vld [vmem:[%s5] sm:$0x1]
  %v47 = vlaneseq
  %v48 = vshrl.u32 %v47, 7
  %v49 = vsub.s32 0, %v48
  %v50 = vrot.slane %v45, %v49
  %v60 = vunpack.c.l.b16 %v33
  %v61 = vunpack.c.l.b16 %v34
  %v62 = vunpack.c.l.b16 %v35
  %v63 = vunpack.c.l.b16 %v36
  %v64 = vunpack.c.l.b16 %v37
  %v65 = vunpack.c.l.b16 %v38
  %v66 = vunpack.c.l.b16 %v39
  %v67 = vunpack.c.l.b16 %v40
  %v68 = vpack.c.b16 %v61, %v60
  %v69 = vpack.c.b16 %v63, %v62
  %v70 = vpack.c.b16 %v65, %v64
  %v71 = vpack.c.b16 %v67, %v66
  %v76 = vunpack.c.l.b16 %v41
  %v77 = vunpack.c.l.b16 %v42
  %v78 = vunpack.c.l.b16 %v43
  %v79 = vunpack.c.l.b16 %v44
  %v80 = vpack.c.b16 %v77, %v76
  %v81 = vpack.c.b16 %v79, %v78
  %vm84 = vcmask 261120
  %v86 = vsel %vm84, %v68, 0
  %v89 = vsel %vm84, %v69, 0
  %v92 = vsel %vm84, %v70, 0
  %v95 = vsel %vm84, %v71, 0
  %97 = vmatprep.subr.bf16.mxu0 0
  %98 = vmatpush1.bf16.msra.mxu0 0
  %99 = vmatprep.subr.bf16.mxu0 0
  %100 = vmatpush1.bf16.msra.mxu0 0
  %101 = vmatprep.subr.bf16.mxu0 0
  %102 = vmatpush1.bf16.msra.mxu0 0
  %103 = vmatprep.subr.bf16.mxu0 0
  %104 = vmatpush1.bf16.msra.mxu0 0
  %105 = vmatprep.subr.bf16.mxu0 0
  %106 = vmatpush1.bf16.msra.mxu0 0
  %107 = vmatprep.subr.bf16.mxu0 0
  %108 = vmatpush1.bf16.msra.mxu0 0
  %109 = vmatprep.subr.bf16.mxu0 0
  %110 = vmatpush1.bf16.msra.mxu0 %v81
  %111 = vmatprep.subr.bf16.mxu0 0
  %112 = vmatpush1.bf16.msra.mxu0 %v80
  %113 = vmatprep.subr.bf16.mxu0 0
  %114 = vmatpush2.bf16.msra.mxu0 0
  %115 = vmatprep.subr.bf16.mxu0 0
  %116 = vmatpush2.bf16.msra.mxu0 0
  %117 = vmatprep.subr.bf16.mxu0 0
  %118 = vmatpush2.bf16.msra.mxu0 0
  %119 = vmatprep.subr.bf16.mxu0 0
  %120 = vmatpush2.bf16.msra.mxu0 0
  %121 = vmatprep.subr.bf16.mxu0 0
  %122 = vmatpush2.bf16.msra.mxu0 0
  %123 = vmatprep.subr.bf16.mxu0 0
  %124 = vmatpush2.bf16.msra.mxu0 0
  %125 = vmatprep.subr.bf16.mxu0 0
  %126 = vmatpush2.bf16.msra.mxu0 0
  %127 = vmatprep.subr.bf16.mxu0 0
  %128 = vmatpush2.bf16.msra.mxu0 0
  %129 = vmatprep.mubr.bf16.mxu0 0
  %130 = vmatmul.mubr.bf16.gmra.mxu0 %v86
  %v131 = vpop.f32.mrf.mxu0
  %v132 = vadd.f32 %v50, %v131
  %v133 = vpop.f32.mrf.mxu0
  %v134 = vpop.f32.mrf.mxu0
  %v135 = vadd.f32 %v50, %v134
  %v136 = vpop.f32.mrf.mxu0
  %137 = vmatprep.mubr.bf16.mxu0 0
  %138 = vmatmul.mubr.bf16.gmra.mxu0 %v89
  %v139 = vpop.f32.mrf.mxu0
  %v140 = vadd.f32 %v50, %v139
  %v141 = vpop.f32.mrf.mxu0
  %v142 = vpop.f32.mrf.mxu0
  %v143 = vadd.f32 %v50, %v142
  %v144 = vpop.f32.mrf.mxu0
  %145 = vmatprep.mubr.bf16.mxu0 0
  %146 = vmatmul.mubr.bf16.gmra.mxu0 %v92
  %v147 = vpop.f32.mrf.mxu0
  %v148 = vadd.f32 %v50, %v147
  %v149 = vpop.f32.mrf.mxu0
  %v150 = vpop.f32.mrf.mxu0
  %v151 = vadd.f32 %v50, %v150
  %v152 = vpop.f32.mrf.mxu0
  %153 = vmatprep.mubr.bf16.mxu0 0
  %154 = vmatmul.mubr.bf16.gmra.mxu0 %v95
  %v155 = vpop.f32.mrf.mxu0
  %v156 = vadd.f32 %v50, %v155
  %v157 = vpop.f32.mrf.mxu0
  %v158 = vpop.f32.mrf.mxu0
  %v159 = vadd.f32 %v50, %v158
  %v160 = vpop.f32.mrf.mxu0
  %161 = vdwg.mxu0
  %162 = vst [vmem:[#allocation4] sm:$0xff] %v132
  %163 = vst [vmem:[#allocation4 + $0x8] sm:$0xff] %v135
  %164 = vst [vmem:[#allocation4 + $0x10] sm:$0xff] %v140
  %165 = vst [vmem:[#allocation4 + $0x18] sm:$0xff] %v143
  %166 = vst [vmem:[#allocation4 + $0x20] sm:$0xff] %v148
  %167 = vst [vmem:[#allocation4 + $0x28] sm:$0xff] %v151
  %168 = vst [vmem:[#allocation4 + $0x30] sm:$0xff] %v156
  %169 = vst [vmem:[#allocation4 + $0x38] sm:$0xff] %v159
  %v170 = vld [vmem:[#allocation2] sm:$0xff]
  %v171 = vld [vmem:[#allocation3] sm:$0xff]
  %v172 = vld [vmem:[#allocation4] sm:$0xff]
  %v173 = vpack.c.bf16 %v170, %v170
  %v174 = vld [vmem:[%s4] sm:$0xf]
  %v175 = vld [vmem:[%s4 + $0x4] sm:$0xf]
  %v176 = vld [vmem:[%s4 + $0x8] sm:$0xf]
  %v177 = vld [vmem:[%s4 + $0xc] sm:$0xf]
  %v182 = vunpack.c.l.b16 %v174
  %v183 = vunpack.c.l.b16 %v175
  %v184 = vunpack.c.l.b16 %v176
  %v185 = vunpack.c.l.b16 %v177
  %v186 = vpack.c.b16 %v183, %v182
  %v187 = vpack.c.b16 %v185, %v184
  %v191 = vsel %vm84, %v173, 0
  %193 = vmatprep.subr.bf16.mxu0 0
  %194 = vmatpush1.bf16.msra.mxu0 0
  %195 = vmatprep.subr.bf16.mxu0 0
  %196 = vmatpush1.bf16.msra.mxu0 0
  %197 = vmatprep.subr.bf16.mxu0 0
  %198 = vmatpush1.bf16.msra.mxu0 0
  %199 = vmatprep.subr.bf16.mxu0 0
  %200 = vmatpush1.bf16.msra.mxu0 0
  %201 = vmatprep.subr.bf16.mxu0 0
  %202 = vmatpush1.bf16.msra.mxu0 0
  %203 = vmatprep.subr.bf16.mxu0 0
  %204 = vmatpush1.bf16.msra.mxu0 0
  %205 = vmatprep.subr.bf16.mxu0 0
  %206 = vmatpush1.bf16.msra.mxu0 %v187
  %207 = vmatprep.subr.bf16.mxu0 0
  %208 = vmatpush1.bf16.msra.mxu0 %v186
  %209 = vmatprep.subr.bf16.mxu0 0
  %210 = vmatpush2.bf16.msra.mxu0 0
  %211 = vmatprep.subr.bf16.mxu0 0
  %212 = vmatpush2.bf16.msra.mxu0 0
  %213 = vmatprep.subr.bf16.mxu0 0
  %214 = vmatpush2.bf16.msra.mxu0 0
  %215 = vmatprep.subr.bf16.mxu0 0
  %216 = vmatpush2.bf16.msra.mxu0 0
  %217 = vmatprep.subr.bf16.mxu0 0
  %218 = vmatpush2.bf16.msra.mxu0 0
  %219 = vmatprep.subr.bf16.mxu0 0
  %220 = vmatpush2.bf16.msra.mxu0 0
  %221 = vmatprep.subr.bf16.mxu0 0
  %222 = vmatpush2.bf16.msra.mxu0 0
  %223 = vmatprep.subr.bf16.mxu0 0
  %224 = vmatpush2.bf16.msra.mxu0 0
  %225 = vmatprep.mubr.bf16.mxu0 0
  %226 = vmatmul.mubr.bf16.gmra.mxu0 %v191
  %v227 = vpop.f32.mrf.mxu0
  %v228 = vadd.f32 0.0, %v227
  %v229 = vpop.f32.mrf.mxu0
  %v230 = vpop.f32.mrf.mxu0
  %v231 = vpop.f32.mrf.mxu0
  %232 = vdwg.mxu0
  %v233 = vadd.f32 %v172, %v228
  %v234 = vxor.u32 %v233, 2147483648
  %v235 = vmul.f32 %v234, 1.442695
  %v236 = vpow.pop %v235
  %v237 = vadd.f32 %v236, 1.0
  %v238 = vrcp.pop %v237
  %v239 = vmul.f32 1.0, %v238
  %v240 = vtanh.pop %v233
  %242 = vrot.lane.b32.xlu0 %v171, 32
  %v243 = vpop.permute.xlu0 %242
  %v245 = vmul.f32 %v239, %v243
  %247 = vrot.lane.b32.xlu0 %v240, 32
  %v248 = vpop.permute.xlu0 %247
  %v250 = vmul.f32 %v239, %v248
  %252 = vrot.lane.b32.xlu0 %v250, 32
  %v253 = vpop.permute.xlu0 %252
  %v255 = vadd.f32 %v245, %v253
  %v256 = vtanh.pop %v255
  %258 = vrot.lane.b32.xlu0 %v256, 32
  %v259 = vpop.permute.xlu0 %258
  %v261 = vmul.f32 %v239, %v259
  %263 = vrot.lane.b32.xlu0 %v261, 64
  %v264 = vpop.permute.xlu0 %263
  %266 = vst.msk [vmem:[#allocation5] sm:$0xff] %vm84, %v264
  %s267 = scalar_lea.vmem [#allocation4], 8
  %v268 = vld [vmem:[%s267] sm:$0xff]
  %v269 = vpack.c.bf16 %v261, %v261
  %v270 = vld [vmem:[%s4] sm:$0xf]
  %v271 = vld [vmem:[%s4 + $0x4] sm:$0xf]
  %v272 = vld [vmem:[%s4 + $0x8] sm:$0xf]
  %v273 = vld [vmem:[%s4 + $0xc] sm:$0xf]
  %275 = vrot.lane.b32.xlu0 %v269, 64
  %v276 = vpop.permute.xlu0 %275
  %v281 = vunpack.c.l.b16 %v270
  %v282 = vunpack.c.l.b16 %v271
  %v283 = vunpack.c.l.b16 %v272
  %v284 = vunpack.c.l.b16 %v273
  %v285 = vpack.c.b16 %v282, %v281
  %v286 = vpack.c.b16 %v284, %v283
  %v290 = vsel %vm84, %v276, 0
  %292 = vmatprep.subr.bf16.mxu0 0
  %293 = vmatpush1.bf16.msra.mxu0 0
  %294 = vmatprep.subr.bf16.mxu0 0
  %295 = vmatpush1.bf16.msra.mxu0 0
  %296 = vmatprep.subr.bf16.mxu0 0
  %297 = vmatpush1.bf16.msra.mxu0 0
  %298 = vmatprep.subr.bf16.mxu0 0
  %299 = vmatpush1.bf16.msra.mxu0 0
  %300 = vmatprep.subr.bf16.mxu0 0
  %301 = vmatpush1.bf16.msra.mxu0 0
  %302 = vmatprep.subr.bf16.mxu0 0
  %303 = vmatpush1.bf16.msra.mxu0 0
  %304 = vmatprep.subr.bf16.mxu0 0
  %305 = vmatpush1.bf16.msra.mxu0 %v286
  %306 = vmatprep.subr.bf16.mxu0 0
  %307 = vmatpush1.bf16.msra.mxu0 %v285
  %308 = vmatprep.subr.bf16.mxu0 0
  %309 = vmatpush2.bf16.msra.mxu0 0
  %310 = vmatprep.subr.bf16.mxu0 0
  %311 = vmatpush2.bf16.msra.mxu0 0
  %312 = vmatprep.subr.bf16.mxu0 0
  %313 = vmatpush2.bf16.msra.mxu0 0
  %314 = vmatprep.subr.bf16.mxu0 0
  %315 = vmatpush2.bf16.msra.mxu0 0
  %316 = vmatprep.subr.bf16.mxu0 0
  %317 = vmatpush2.bf16.msra.mxu0 0
  %318 = vmatprep.subr.bf16.mxu0 0
  %319 = vmatpush2.bf16.msra.mxu0 0
  %320 = vmatprep.subr.bf16.mxu0 0
  %321 = vmatpush2.bf16.msra.mxu0 0
  %322 = vmatprep.subr.bf16.mxu0 0
  %323 = vmatpush2.bf16.msra.mxu0 0
  %324 = vmatprep.mubr.bf16.mxu0 0
  %325 = vmatmul.mubr.bf16.gmra.mxu0 %v290
  %v326 = vpop.f32.mrf.mxu0
  %v327 = vadd.f32 0.0, %v326
  %v328 = vpop.f32.mrf.mxu0
  %v329 = vpop.f32.mrf.mxu0
  %v330 = vpop.f32.mrf.mxu0
  %331 = vdwg.mxu0
  %v332 = vadd.f32 %v268, %v327
  %v333 = vxor.u32 %v332, 2147483648
  %v334 = vmul.f32 %v333, 1.442695
  %v335 = vpow.pop %v334
  %v336 = vadd.f32 %v335, 1.0
  %v337 = vrcp.pop %v336
  %v338 = vmul.f32 1.0, %v337
  %v339 = vtanh.pop %v332
  %v340 = vmul.f32 %v338, %v255
  %342 = vrot.lane.b32.xlu0 %v339, 32
  %v343 = vpop.permute.xlu0 %342
  %v345 = vmul.f32 %v338, %v343
  %347 = vrot.lane.b32.xlu0 %v345, 32
  %v348 = vpop.permute.xlu0 %347
  %v350 = vadd.f32 %v340, %v348
  %v351 = vtanh.pop %v350
  %353 = vrot.lane.b32.xlu0 %v351, 32
  %v354 = vpop.permute.xlu0 %353
  %v356 = vmul.f32 %v338, %v354
  %358 = vrot.lane.b32.xlu0 %v356, 64
  %v359 = vpop.permute.xlu0 %358
  %s361 = scalar_lea.vmem [#allocation5], 8
  %362 = vst.msk [vmem:[%s361] sm:$0xff] %vm84, %v359
  %s363 = scalar_lea.vmem [#allocation4], 16
  %v364 = vld [vmem:[%s363] sm:$0xff]
  %v365 = vpack.c.bf16 %v356, %v356
  %v366 = vld [vmem:[%s4] sm:$0xf]
  %v367 = vld [vmem:[%s4 + $0x4] sm:$0xf]
  %v368 = vld [vmem:[%s4 + $0x8] sm:$0xf]
  %v369 = vld [vmem:[%s4 + $0xc] sm:$0xf]
  %371 = vrot.lane.b32.xlu0 %v365, 64
  %v372 = vpop.permute.xlu0 %371
  %v377 = vunpack.c.l.b16 %v366
  %v378 = vunpack.c.l.b16 %v367
  %v379 = vunpack.c.l.b16 %v368
  %v380 = vunpack.c.l.b16 %v369
  %v381 = vpack.c.b16 %v378, %v377
  %v382 = vpack.c.b16 %v380, %v379
  %v386 = vsel %vm84, %v372, 0
  %388 = vmatprep.subr.bf16.mxu0 0
  %389 = vmatpush1.bf16.msra.mxu0 0
  %390 = vmatprep.subr.bf16.mxu0 0
  %391 = vmatpush1.bf16.msra.mxu0 0
  %392 = vmatprep.subr.bf16.mxu0 0
  %393 = vmatpush1.bf16.msra.mxu0 0
  %394 = vmatprep.subr.bf16.mxu0 0
  %395 = vmatpush1.bf16.msra.mxu0 0
  %396 = vmatprep.subr.bf16.mxu0 0
  %397 = vmatpush1.bf16.msra.mxu0 0
  %398 = vmatprep.subr.bf16.mxu0 0
  %399 = vmatpush1.bf16.msra.mxu0 0
  %400 = vmatprep.subr.bf16.mxu0 0
  %401 = vmatpush1.bf16.msra.mxu0 %v382
  %402 = vmatprep.subr.bf16.mxu0 0
  %403 = vmatpush1.bf16.msra.mxu0 %v381
  %404 = vmatprep.subr.bf16.mxu0 0
  %405 = vmatpush2.bf16.msra.mxu0 0
  %406 = vmatprep.subr.bf16.mxu0 0
  %407 = vmatpush2.bf16.msra.mxu0 0
  %408 = vmatprep.subr.bf16.mxu0 0
  %409 = vmatpush2.bf16.msra.mxu0 0
  %410 = vmatprep.subr.bf16.mxu0 0
  %411 = vmatpush2.bf16.msra.mxu0 0
  %412 = vmatprep.subr.bf16.mxu0 0
  %413 = vmatpush2.bf16.msra.mxu0 0
  %414 = vmatprep.subr.bf16.mxu0 0
  %415 = vmatpush2.bf16.msra.mxu0 0
  %416 = vmatprep.subr.bf16.mxu0 0
  %417 = vmatpush2.bf16.msra.mxu0 0
  %418 = vmatprep.subr.bf16.mxu0 0
  %419 = vmatpush2.bf16.msra.mxu0 0
  %420 = vmatprep.mubr.bf16.mxu0 0
  %421 = vmatmul.mubr.bf16.gmra.mxu0 %v386
  %v422 = vpop.f32.mrf.mxu0
  %v423 = vadd.f32 0.0, %v422
  %v424 = vpop.f32.mrf.mxu0
  %v425 = vpop.f32.mrf.mxu0
  %v426 = vpop.f32.mrf.mxu0
  %427 = vdwg.mxu0
  %v428 = vadd.f32 %v364, %v423
  %v429 = vxor.u32 %v428, 2147483648
  %v430 = vmul.f32 %v429, 1.442695
  %v431 = vpow.pop %v430
  %v432 = vadd.f32 %v431, 1.0
  %v433 = vrcp.pop %v432
  %v434 = vmul.f32 1.0, %v433
  %v435 = vtanh.pop %v428
  %v436 = vmul.f32 %v434, %v350
  %438 = vrot.lane.b32.xlu0 %v435, 32
  %v439 = vpop.permute.xlu0 %438
  %v441 = vmul.f32 %v434, %v439
  %443 = vrot.lane.b32.xlu0 %v441, 32
  %v444 = vpop.permute.xlu0 %443
  %v446 = vadd.f32 %v436, %v444
  %v447 = vtanh.pop %v446
  %449 = vrot.lane.b32.xlu0 %v447, 32
  %v450 = vpop.permute.xlu0 %449
  %v452 = vmul.f32 %v434, %v450
  %454 = vrot.lane.b32.xlu0 %v452, 64
  %v455 = vpop.permute.xlu0 %454
  %s457 = scalar_lea.vmem [#allocation5], 16
  %458 = vst.msk [vmem:[%s457] sm:$0xff] %vm84, %v455
  %s459 = scalar_lea.vmem [#allocation4], 24
  %v460 = vld [vmem:[%s459] sm:$0xff]
  %v461 = vpack.c.bf16 %v452, %v452
  %v462 = vld [vmem:[%s4] sm:$0xf]
  %v463 = vld [vmem:[%s4 + $0x4] sm:$0xf]
  %v464 = vld [vmem:[%s4 + $0x8] sm:$0xf]
  %v465 = vld [vmem:[%s4 + $0xc] sm:$0xf]
  %467 = vrot.lane.b32.xlu0 %v461, 64
  %v468 = vpop.permute.xlu0 %467
  %v473 = vunpack.c.l.b16 %v462
  %v474 = vunpack.c.l.b16 %v463
  %v475 = vunpack.c.l.b16 %v464
  %v476 = vunpack.c.l.b16 %v465
  %v477 = vpack.c.b16 %v474, %v473
  %v478 = vpack.c.b16 %v476, %v475
  %v482 = vsel %vm84, %v468, 0
  %484 = vmatprep.subr.bf16.mxu0 0
  %485 = vmatpush1.bf16.msra.mxu0 0
  %486 = vmatprep.subr.bf16.mxu0 0
  %487 = vmatpush1.bf16.msra.mxu0 0
  %488 = vmatprep.subr.bf16.mxu0 0
  %489 = vmatpush1.bf16.msra.mxu0 0
  %490 = vmatprep.subr.bf16.mxu0 0
  %491 = vmatpush1.bf16.msra.mxu0 0
  %492 = vmatprep.subr.bf16.mxu0 0
  %493 = vmatpush1.bf16.msra.mxu0 0
  %494 = vmatprep.subr.bf16.mxu0 0
  %495 = vmatpush1.bf16.msra.mxu0 0
  %496 = vmatprep.subr.bf16.mxu0 0
  %497 = vmatpush1.bf16.msra.mxu0 %v478
  %498 = vmatprep.subr.bf16.mxu0 0
  %499 = vmatpush1.bf16.msra.mxu0 %v477
  %500 = vmatprep.subr.bf16.mxu0 0
  %501 = vmatpush2.bf16.msra.mxu0 0
  %502 = vmatprep.subr.bf16.mxu0 0
  %503 = vmatpush2.bf16.msra.mxu0 0
  %504 = vmatprep.subr.bf16.mxu0 0
  %505 = vmatpush2.bf16.msra.mxu0 0
  %506 = vmatprep.subr.bf16.mxu0 0
  %507 = vmatpush2.bf16.msra.mxu0 0
  %508 = vmatprep.subr.bf16.mxu0 0
  %509 = vmatpush2.bf16.msra.mxu0 0
  %510 = vmatprep.subr.bf16.mxu0 0
  %511 = vmatpush2.bf16.msra.mxu0 0
  %512 = vmatprep.subr.bf16.mxu0 0
  %513 = vmatpush2.bf16.msra.mxu0 0
  %514 = vmatprep.subr.bf16.mxu0 0
  %515 = vmatpush2.bf16.msra.mxu0 0
  %516 = vmatprep.mubr.bf16.mxu0 0
  %517 = vmatmul.mubr.bf16.gmra.mxu0 %v482
  %v518 = vpop.f32.mrf.mxu0
  %v519 = vadd.f32 0.0, %v518
  %v520 = vpop.f32.mrf.mxu0
  %v521 = vpop.f32.mrf.mxu0
  %v522 = vpop.f32.mrf.mxu0
  %523 = vdwg.mxu0
  %v524 = vadd.f32 %v460, %v519
  %v525 = vxor.u32 %v524, 2147483648
  %v526 = vmul.f32 %v525, 1.442695
  %v527 = vpow.pop %v526
  %v528 = vadd.f32 %v527, 1.0
  %v529 = vrcp.pop %v528
  %v530 = vmul.f32 1.0, %v529
  %v531 = vtanh.pop %v524
  %v532 = vmul.f32 %v530, %v446
  %534 = vrot.lane.b32.xlu0 %v531, 32
  %v535 = vpop.permute.xlu0 %534
  %v537 = vmul.f32 %v530, %v535
  %539 = vrot.lane.b32.xlu0 %v537, 32
  %v540 = vpop.permute.xlu0 %539
  %v542 = vadd.f32 %v532, %v540
  %v543 = vtanh.pop %v542
  %545 = vrot.lane.b32.xlu0 %v543, 32
  %v546 = vpop.permute.xlu0 %545
  %v548 = vmul.f32 %v530, %v546
  %550 = vrot.lane.b32.xlu0 %v548, 64
  %v551 = vpop.permute.xlu0 %550
  %s553 = scalar_lea.vmem [#allocation5], 24
  %554 = vst.msk [vmem:[%s553] sm:$0xff] %vm84, %v551
  %s555 = scalar_lea.vmem [#allocation4], 32
  %v556 = vld [vmem:[%s555] sm:$0xff]
  %v557 = vpack.c.bf16 %v548, %v548
  %v558 = vld [vmem:[%s4] sm:$0xf]
  %v559 = vld [vmem:[%s4 + $0x4] sm:$0xf]
  %v560 = vld [vmem:[%s4 + $0x8] sm:$0xf]
  %v561 = vld [vmem:[%s4 + $0xc] sm:$0xf]
  %563 = vrot.lane.b32.xlu0 %v557, 64
  %v564 = vpop.permute.xlu0 %563
  %v569 = vunpack.c.l.b16 %v558
  %v570 = vunpack.c.l.b16 %v559
  %v571 = vunpack.c.l.b16 %v560
  %v572 = vunpack.c.l.b16 %v561
  %v573 = vpack.c.b16 %v570, %v569
  %v574 = vpack.c.b16 %v572, %v571
  %v578 = vsel %vm84, %v564, 0
  %580 = vmatprep.subr.bf16.mxu0 0
  %581 = vmatpush1.bf16.msra.mxu0 0
  %582 = vmatprep.subr.bf16.mxu0 0
  %583 = vmatpush1.bf16.msra.mxu0 0
  %584 = vmatprep.subr.bf16.mxu0 0
  %585 = vmatpush1.bf16.msra.mxu0 0
  %586 = vmatprep.subr.bf16.mxu0 0
  %587 = vmatpush1.bf16.msra.mxu0 0
  %588 = vmatprep.subr.bf16.mxu0 0
  %589 = vmatpush1.bf16.msra.mxu0 0
  %590 = vmatprep.subr.bf16.mxu0 0
  %591 = vmatpush1.bf16.msra.mxu0 0
  %592 = vmatprep.subr.bf16.mxu0 0
  %593 = vmatpush1.bf16.msra.mxu0 %v574
  %594 = vmatprep.subr.bf16.mxu0 0
  %595 = vmatpush1.bf16.msra.mxu0 %v573
  %596 = vmatprep.subr.bf16.mxu0 0
  %597 = vmatpush2.bf16.msra.mxu0 0
  %598 = vmatprep.subr.bf16.mxu0 0
  %599 = vmatpush2.bf16.msra.mxu0 0
  %600 = vmatprep.subr.bf16.mxu0 0
  %601 = vmatpush2.bf16.msra.mxu0 0
  %602 = vmatprep.subr.bf16.mxu0 0
  %603 = vmatpush2.bf16.msra.mxu0 0
  %604 = vmatprep.subr.bf16.mxu0 0
  %605 = vmatpush2.bf16.msra.mxu0 0
  %606 = vmatprep.subr.bf16.mxu0 0
  %607 = vmatpush2.bf16.msra.mxu0 0
  %608 = vmatprep.subr.bf16.mxu0 0
  %609 = vmatpush2.bf16.msra.mxu0 0
  %610 = vmatprep.subr.bf16.mxu0 0
  %611 = vmatpush2.bf16.msra.mxu0 0
  %612 = vmatprep.mubr.bf16.mxu0 0
  %613 = vmatmul.mubr.bf16.gmra.mxu0 %v578
  %v614 = vpop.f32.mrf.mxu0
  %v615 = vadd.f32 0.0, %v614
  %v616 = vpop.f32.mrf.mxu0
  %v617 = vpop.f32.mrf.mxu0
  %v618 = vpop.f32.mrf.mxu0
  %619 = vdwg.mxu0
  %v620 = vadd.f32 %v556, %v615
  %v621 = vxor.u32 %v620, 2147483648
  %v622 = vmul.f32 %v621, 1.442695
  %v623 = vpow.pop %v622
  %v624 = vadd.f32 %v623, 1.0
  %v625 = vrcp.pop %v624
  %v626 = vmul.f32 1.0, %v625
  %v627 = vtanh.pop %v620
  %v628 = vmul.f32 %v626, %v542
  %630 = vrot.lane.b32.xlu0 %v627, 32
  %v631 = vpop.permute.xlu0 %630
  %v633 = vmul.f32 %v626, %v631
  %635 = vrot.lane.b32.xlu0 %v633, 32
  %v636 = vpop.permute.xlu0 %635
  %v638 = vadd.f32 %v628, %v636
  %v639 = vtanh.pop %v638
  %641 = vrot.lane.b32.xlu0 %v639, 32
  %v642 = vpop.permute.xlu0 %641
  %v644 = vmul.f32 %v626, %v642
  %646 = vrot.lane.b32.xlu0 %v644, 64
  %v647 = vpop.permute.xlu0 %646
  %s649 = scalar_lea.vmem [#allocation5], 32
  %650 = vst.msk [vmem:[%s649] sm:$0xff] %vm84, %v647
  %s651 = scalar_lea.vmem [#allocation4], 40
  %v652 = vld [vmem:[%s651] sm:$0xff]
  %v653 = vpack.c.bf16 %v644, %v644
  %v654 = vld [vmem:[%s4] sm:$0xf]
  %v655 = vld [vmem:[%s4 + $0x4] sm:$0xf]
  %v656 = vld [vmem:[%s4 + $0x8] sm:$0xf]
  %v657 = vld [vmem:[%s4 + $0xc] sm:$0xf]
  %659 = vrot.lane.b32.xlu0 %v653, 64
  %v660 = vpop.permute.xlu0 %659
  %v665 = vunpack.c.l.b16 %v654
  %v666 = vunpack.c.l.b16 %v655
  %v667 = vunpack.c.l.b16 %v656
  %v668 = vunpack.c.l.b16 %v657
  %v669 = vpack.c.b16 %v666, %v665
  %v670 = vpack.c.b16 %v668, %v667
  %v674 = vsel %vm84, %v660, 0
  %676 = vmatprep.subr.bf16.mxu0 0
  %677 = vmatpush1.bf16.msra.mxu0 0
  %678 = vmatprep.subr.bf16.mxu0 0
  %679 = vmatpush1.bf16.msra.mxu0 0
  %680 = vmatprep.subr.bf16.mxu0 0
  %681 = vmatpush1.bf16.msra.mxu0 0
  %682 = vmatprep.subr.bf16.mxu0 0
  %683 = vmatpush1.bf16.msra.mxu0 0
  %684 = vmatprep.subr.bf16.mxu0 0
  %685 = vmatpush1.bf16.msra.mxu0 0
  %686 = vmatprep.subr.bf16.mxu0 0
  %687 = vmatpush1.bf16.msra.mxu0 0
  %688 = vmatprep.subr.bf16.mxu0 0
  %689 = vmatpush1.bf16.msra.mxu0 %v670
  %690 = vmatprep.subr.bf16.mxu0 0
  %691 = vmatpush1.bf16.msra.mxu0 %v669
  %692 = vmatprep.subr.bf16.mxu0 0
  %693 = vmatpush2.bf16.msra.mxu0 0
  %694 = vmatprep.subr.bf16.mxu0 0
  %695 = vmatpush2.bf16.msra.mxu0 0
  %696 = vmatprep.subr.bf16.mxu0 0
  %697 = vmatpush2.bf16.msra.mxu0 0
  %698 = vmatprep.subr.bf16.mxu0 0
  %699 = vmatpush2.bf16.msra.mxu0 0
  %700 = vmatprep.subr.bf16.mxu0 0
  %701 = vmatpush2.bf16.msra.mxu0 0
  %702 = vmatprep.subr.bf16.mxu0 0
  %703 = vmatpush2.bf16.msra.mxu0 0
  %704 = vmatprep.subr.bf16.mxu0 0
  %705 = vmatpush2.bf16.msra.mxu0 0
  %706 = vmatprep.subr.bf16.mxu0 0
  %707 = vmatpush2.bf16.msra.mxu0 0
  %708 = vmatprep.mubr.bf16.mxu0 0
  %709 = vmatmul.mubr.bf16.gmra.mxu0 %v674
  %v710 = vpop.f32.mrf.mxu0
  %v711 = vadd.f32 0.0, %v710
  %v712 = vpop.f32.mrf.mxu0
  %v713 = vpop.f32.mrf.mxu0
  %v714 = vpop.f32.mrf.mxu0
  %715 = vdwg.mxu0
  %v716 = vadd.f32 %v652, %v711
  %v717 = vxor.u32 %v716, 2147483648
  %v718 = vmul.f32 %v717, 1.442695
  %v719 = vpow.pop %v718
  %v720 = vadd.f32 %v719, 1.0
  %v721 = vrcp.pop %v720
  %v722 = vmul.f32 1.0, %v721
  %v723 = vtanh.pop %v716
  %v724 = vmul.f32 %v722, %v638
  %726 = vrot.lane.b32.xlu0 %v723, 32
  %v727 = vpop.permute.xlu0 %726
  %v729 = vmul.f32 %v722, %v727
  %731 = vrot.lane.b32.xlu0 %v729, 32
  %v732 = vpop.permute.xlu0 %731
  %v734 = vadd.f32 %v724, %v732
  %v735 = vtanh.pop %v734
  %737 = vrot.lane.b32.xlu0 %v735, 32
  %v738 = vpop.permute.xlu0 %737
  %v740 = vmul.f32 %v722, %v738
  %742 = vrot.lane.b32.xlu0 %v740, 64
  %v743 = vpop.permute.xlu0 %742
  %s745 = scalar_lea.vmem [#allocation5], 40
  %746 = vst.msk [vmem:[%s745] sm:$0xff] %vm84, %v743
  %s747 = scalar_lea.vmem [#allocation4], 48
  %v748 = vld [vmem:[%s747] sm:$0xff]
  %v749 = vpack.c.bf16 %v740, %v740
  %v750 = vld [vmem:[%s4] sm:$0xf]
  %v751 = vld [vmem:[%s4 + $0x4] sm:$0xf]
  %v752 = vld [vmem:[%s4 + $0x8] sm:$0xf]
  %v753 = vld [vmem:[%s4 + $0xc] sm:$0xf]
  %755 = vrot.lane.b32.xlu0 %v749, 64
  %v756 = vpop.permute.xlu0 %755
  %v761 = vunpack.c.l.b16 %v750
  %v762 = vunpack.c.l.b16 %v751
  %v763 = vunpack.c.l.b16 %v752
  %v764 = vunpack.c.l.b16 %v753
  %v765 = vpack.c.b16 %v762, %v761
  %v766 = vpack.c.b16 %v764, %v763
  %v770 = vsel %vm84, %v756, 0
  %772 = vmatprep.subr.bf16.mxu0 0
  %773 = vmatpush1.bf16.msra.mxu0 0
  %774 = vmatprep.subr.bf16.mxu0 0
  %775 = vmatpush1.bf16.msra.mxu0 0
  %776 = vmatprep.subr.bf16.mxu0 0
  %777 = vmatpush1.bf16.msra.mxu0 0
  %778 = vmatprep.subr.bf16.mxu0 0
  %779 = vmatpush1.bf16.msra.mxu0 0
  %780 = vmatprep.subr.bf16.mxu0 0
  %781 = vmatpush1.bf16.msra.mxu0 0
  %782 = vmatprep.subr.bf16.mxu0 0
  %783 = vmatpush1.bf16.msra.mxu0 0
  %784 = vmatprep.subr.bf16.mxu0 0
  %785 = vmatpush1.bf16.msra.mxu0 %v766
  %786 = vmatprep.subr.bf16.mxu0 0
  %787 = vmatpush1.bf16.msra.mxu0 %v765
  %788 = vmatprep.subr.bf16.mxu0 0
  %789 = vmatpush2.bf16.msra.mxu0 0
  %790 = vmatprep.subr.bf16.mxu0 0
  %791 = vmatpush2.bf16.msra.mxu0 0
  %792 = vmatprep.subr.bf16.mxu0 0
  %793 = vmatpush2.bf16.msra.mxu0 0
  %794 = vmatprep.subr.bf16.mxu0 0
  %795 = vmatpush2.bf16.msra.mxu0 0
  %796 = vmatprep.subr.bf16.mxu0 0
  %797 = vmatpush2.bf16.msra.mxu0 0
  %798 = vmatprep.subr.bf16.mxu0 0
  %799 = vmatpush2.bf16.msra.mxu0 0
  %800 = vmatprep.subr.bf16.mxu0 0
  %801 = vmatpush2.bf16.msra.mxu0 0
  %802 = vmatprep.subr.bf16.mxu0 0
  %803 = vmatpush2.bf16.msra.mxu0 0
  %804 = vmatprep.mubr.bf16.mxu0 0
  %805 = vmatmul.mubr.bf16.gmra.mxu0 %v770
  %v806 = vpop.f32.mrf.mxu0
  %v807 = vadd.f32 0.0, %v806
  %v808 = vpop.f32.mrf.mxu0
  %v809 = vpop.f32.mrf.mxu0
  %v810 = vpop.f32.mrf.mxu0
  %811 = vdwg.mxu0
  %v812 = vadd.f32 %v748, %v807
  %v813 = vxor.u32 %v812, 2147483648
  %v814 = vmul.f32 %v813, 1.442695
  %v815 = vpow.pop %v814
  %v816 = vadd.f32 %v815, 1.0
  %v817 = vrcp.pop %v816
  %v818 = vmul.f32 1.0, %v817
  %v819 = vtanh.pop %v812
  %v820 = vmul.f32 %v818, %v734
  %822 = vrot.lane.b32.xlu0 %v819, 32
  %v823 = vpop.permute.xlu0 %822
  %v825 = vmul.f32 %v818, %v823
  %827 = vrot.lane.b32.xlu0 %v825, 32
  %v828 = vpop.permute.xlu0 %827
  %v830 = vadd.f32 %v820, %v828
  %v831 = vtanh.pop %v830
  %833 = vrot.lane.b32.xlu0 %v831, 32
  %v834 = vpop.permute.xlu0 %833
  %v836 = vmul.f32 %v818, %v834
  %838 = vrot.lane.b32.xlu0 %v836, 64
  %v839 = vpop.permute.xlu0 %838
  %s841 = scalar_lea.vmem [#allocation5], 48
  %842 = vst.msk [vmem:[%s841] sm:$0xff] %vm84, %v839
  %s843 = scalar_lea.vmem [#allocation4], 56
  %v844 = vld [vmem:[%s843] sm:$0xff]
  %v845 = vpack.c.bf16 %v836, %v836
  %v846 = vld [vmem:[%s4] sm:$0xf]
  %v847 = vld [vmem:[%s4 + $0x4] sm:$0xf]
  %v848 = vld [vmem:[%s4 + $0x8] sm:$0xf]
  %v849 = vld [vmem:[%s4 + $0xc] sm:$0xf]
  %851 = vrot.lane.b32.xlu0 %v845, 64
  %v852 = vpop.permute.xlu0 %851
  %v857 = vunpack.c.l.b16 %v846
  %v858 = vunpack.c.l.b16 %v847
  %v859 = vunpack.c.l.b16 %v848
  %v860 = vunpack.c.l.b16 %v849
  %v861 = vpack.c.b16 %v858, %v857
  %v862 = vpack.c.b16 %v860, %v859
  %v866 = vsel %vm84, %v852, 0
  %868 = vmatprep.subr.bf16.mxu0 0
  %869 = vmatpush1.bf16.msra.mxu0 0
  %870 = vmatprep.subr.bf16.mxu0 0
  %871 = vmatpush1.bf16.msra.mxu0 0
  %872 = vmatprep.subr.bf16.mxu0 0
  %873 = vmatpush1.bf16.msra.mxu0 0
  %874 = vmatprep.subr.bf16.mxu0 0
  %875 = vmatpush1.bf16.msra.mxu0 0
  %876 = vmatprep.subr.bf16.mxu0 0
  %877 = vmatpush1.bf16.msra.mxu0 0
  %878 = vmatprep.subr.bf16.mxu0 0
  %879 = vmatpush1.bf16.msra.mxu0 0
  %880 = vmatprep.subr.bf16.mxu0 0
  %881 = vmatpush1.bf16.msra.mxu0 %v862
  %882 = vmatprep.subr.bf16.mxu0 0
  %883 = vmatpush1.bf16.msra.mxu0 %v861
  %884 = vmatprep.subr.bf16.mxu0 0
  %885 = vmatpush2.bf16.msra.mxu0 0
  %886 = vmatprep.subr.bf16.mxu0 0
  %887 = vmatpush2.bf16.msra.mxu0 0
  %888 = vmatprep.subr.bf16.mxu0 0
  %889 = vmatpush2.bf16.msra.mxu0 0
  %890 = vmatprep.subr.bf16.mxu0 0
  %891 = vmatpush2.bf16.msra.mxu0 0
  %892 = vmatprep.subr.bf16.mxu0 0
  %893 = vmatpush2.bf16.msra.mxu0 0
  %894 = vmatprep.subr.bf16.mxu0 0
  %895 = vmatpush2.bf16.msra.mxu0 0
  %896 = vmatprep.subr.bf16.mxu0 0
  %897 = vmatpush2.bf16.msra.mxu0 0
  %898 = vmatprep.subr.bf16.mxu0 0
  %899 = vmatpush2.bf16.msra.mxu0 0
  %900 = vmatprep.mubr.bf16.mxu0 0
  %901 = vmatmul.mubr.bf16.gmra.mxu0 %v866
  %v902 = vpop.f32.mrf.mxu0
  %v903 = vadd.f32 0.0, %v902
  %v904 = vpop.f32.mrf.mxu0
  %v905 = vpop.f32.mrf.mxu0
  %v906 = vpop.f32.mrf.mxu0
  %907 = vdwg.mxu0
  %v908 = vadd.f32 %v844, %v903
  %v909 = vxor.u32 %v908, 2147483648
  %v910 = vmul.f32 %v909, 1.442695
  %v911 = vpow.pop %v910
  %v912 = vadd.f32 %v911, 1.0
  %v913 = vrcp.pop %v912
  %v914 = vmul.f32 1.0, %v913
  %v915 = vtanh.pop %v908
  %v916 = vmul.f32 %v914, %v830
  %918 = vrot.lane.b32.xlu0 %v915, 32
  %v919 = vpop.permute.xlu0 %918
  %v921 = vmul.f32 %v914, %v919
  %923 = vrot.lane.b32.xlu0 %v921, 32
  %v924 = vpop.permute.xlu0 %923
  %v926 = vadd.f32 %v916, %v924
  %v927 = vtanh.pop %v926
  %929 = vrot.lane.b32.xlu0 %v927, 32
  %v930 = vpop.permute.xlu0 %929
  %v932 = vmul.f32 %v914, %v930
  %934 = vrot.lane.b32.xlu0 %v932, 64
  %v935 = vpop.permute.xlu0 %934
  %s937 = scalar_lea.vmem [#allocation5], 56
  %938 = vst.msk [vmem:[%s937] sm:$0xff] %vm84, %v935
  %939 = vst.msk [vmem:[#allocation2] sm:$0xff] %vm84, %v935
  %941 = vrot.lane.b32.xlu0 %v926, 96
  %v942 = vpop.permute.xlu0 %941
  %944 = vst.msk [vmem:[#allocation3] sm:$0xff] %vm84, %v942
  %v945 = vld [vmem:[#allocation5] sm:$0xff]
  %v946 = vld [vmem:[#allocation5 + $0x8] sm:$0xff]
  %v947 = vld [vmem:[#allocation5 + $0x10] sm:$0xff]
  %v948 = vld [vmem:[#allocation5 + $0x18] sm:$0xff]
  %v949 = vld [vmem:[#allocation5 + $0x20] sm:$0xff]
  %v950 = vld [vmem:[#allocation5 + $0x28] sm:$0xff]
  %v951 = vld [vmem:[#allocation5 + $0x30] sm:$0xff]
  %v952 = vld [vmem:[#allocation5 + $0x38] sm:$0xff]
  %v953 = vpack.c.bf16 %v946, %v945
  %v954 = vpack.c.bf16 %v948, %v947
  %v955 = vpack.c.bf16 %v950, %v949
  %v956 = vpack.c.bf16 %v952, %v951
  %v961 = vunpack.c.l.b16 %v953
  %v962 = vunpack.c.h.b16 %v953
  %v963 = vunpack.c.l.b16 %v954
  %v964 = vunpack.c.h.b16 %v954
  %v965 = vunpack.c.l.b16 %v955
  %v966 = vunpack.c.h.b16 %v955
  %v967 = vunpack.c.l.b16 %v956
  %v968 = vunpack.c.h.b16 %v956
  %v969 = vpack.c.b16 %v961, %v961
  %v970 = vpack.c.b16 %v962, %v962
  %v971 = vpack.c.b16 %v963, %v963
  %v972 = vpack.c.b16 %v964, %v964
  %v973 = vpack.c.b16 %v965, %v965
  %v974 = vpack.c.b16 %v966, %v966
  %v975 = vpack.c.b16 %v967, %v967
  %v976 = vpack.c.b16 %v968, %v968
  %vm985 = vcmask 257024
  %986 = vst.msk [vmem:[%s6] sm:$0xf] %vm985, %v969
  %987 = vst.msk [vmem:[%s6 + $0x4] sm:$0xf] %vm985, %v970
  %988 = vst.msk [vmem:[%s6 + $0x8] sm:$0xf] %vm985, %v971
  %989 = vst.msk [vmem:[%s6 + $0xc] sm:$0xf] %vm985, %v972
  %990 = vst.msk [vmem:[%s6 + $0x10] sm:$0xf] %vm985, %v973
  %991 = vst.msk [vmem:[%s6 + $0x14] sm:$0xf] %vm985, %v974
  %992 = vst.msk [vmem:[%s6 + $0x18] sm:$0xf] %vm985, %v975
  %993 = vst.msk [vmem:[%s6 + $0x1c] sm:$0xf] %vm985, %v976
  // Predicated region
  $region30: #{seq2seq_forward.7} parent=0 // pred_check
    _
  $region31: #{seq2seq_forward.7} parent=0 // pred_check_branch
    %995 = sbr.rel (0) target = $region33
  $region32: #{seq2seq_forward.7} parent=0 // pred_region
    _
  $region33: #{seq2seq_forward.7} parent=0 // pred_fallthru
    _
  // Predicated region
  $region34: #{seq2seq_forward.7} parent=0 // pred_check
    _
  $region35: #{seq2seq_forward.7} parent=0 // pred_check_branch
    %997 = sbr.rel (0) target = $region37
  $region36: #{seq2seq_forward.7} parent=0 // pred_region
    _
  $region37: #{seq2seq_forward.7} parent=0 // pred_fallthru
    _

// kernel: seq2seq_forward.5
$region0: #{seq2seq_forward.5}
  #allocation0 [shape = 'u32[]', space=smem, size = 0x4, offset = 0x4, fixed_abs, tag = 'smem constant byte address 0x4 - core index']
  #allocation1 [shape = 'u32[144,128]{1,0:T(1,128)}', space=vmem, size = 0x12000, scoped, tag = 'internal scratch']
  #allocation2 [shape = 'f32[8,32]{1,0:T(8,128)}', space=vmem, size = 0x1000, scoped, tag = 'scratch operand']
  #allocation3 [shape = 'f32[8,32]{1,0:T(8,128)}', space=vmem, size = 0x1000, scoped, tag = 'scratch operand']
  #allocation4 [shape = 'f32[64,128]{1,0:T(8,128)}', space=vmem, size = 0x8000, scoped, tag = 'scratch operand']
  #allocation5 [shape = 'f32[64,32]{1,0:T(8,128)}', space=vmem, size = 0x8000, scoped, tag = 'scratch operand']
  %s0 = inlined_call_operand.vmem [shape: bf16[64,32], index: 0, kind: input, shape index: {}]
  %s1 = inlined_call_operand.vmem [shape: bf16[32,128], index: 1, kind: input, shape index: {}]
  %s2 = inlined_call_operand.vmem [shape: bf16[32,128], index: 2, kind: input, shape index: {}]
  %s3 = inlined_call_operand.vmem [shape: f32[1,128], index: 3, kind: input, shape index: {}]
  %s4 = inlined_call_operand.vmem [shape: bf16[64,32], index: 4, kind: output, shape index: {0}]
  %s5 = inlined_call_operand.vmem [shape: f32[8,32], index: 5, kind: output, shape index: {1}]
  %s6 = inlined_call_operand.vmem [shape: f32[8,32], index: 6, kind: output, shape index: {2}]
  %7 = xla_tuple %s4, %s5, %s6
  %s8 = sld [smem:[#allocation0]]
  $region50: #{seq2seq_forward.5} parent=0
    _
  %s10 = ssub.s32 1, %s8
  %s11 = scalar_select 0, %s10, %s8
  // Predicated region
  $region2: #{seq2seq_forward.5} parent=0 // pred_check
    _
  $region3: #{seq2seq_forward.5} parent=0 // pred_check_branch
    %13 = sbr.rel (0) target = $region5
  $region4: #{seq2seq_forward.5} parent=0 // pred_region
    _
  $region5: #{seq2seq_forward.5} parent=0 // pred_fallthru
    _
  // Predicated region
  $region6: #{seq2seq_forward.5} parent=0 // pred_check
    _
  $region7: #{seq2seq_forward.5} parent=0 // pred_check_branch
    %15 = sbr.rel (0) target = $region9
  $region8: #{seq2seq_forward.5} parent=0 // pred_region
    _
  $region9: #{seq2seq_forward.5} parent=0 // pred_fallthru
    _
  // Predicated region
  $region10: #{seq2seq_forward.5} parent=0 // pred_check
    _
  $region11: #{seq2seq_forward.5} parent=0 // pred_check_branch
    %17 = sbr.rel (0) target = $region13
  $region12: #{seq2seq_forward.5} parent=0 // pred_region
    _
  $region13: #{seq2seq_forward.5} parent=0 // pred_fallthru
    _
  // Predicated region
  $region14: #{seq2seq_forward.5} parent=0 // pred_check
    _
  $region15: #{seq2seq_forward.5} parent=0 // pred_check_branch
    %19 = sbr.rel (0) target = $region17
  $region16: #{seq2seq_forward.5} parent=0 // pred_region
    _
  $region17: #{seq2seq_forward.5} parent=0 // pred_fallthru
    _
  %p21 = scmp.eq.s32.totalorder 0, 0
  // Predicated region
  $region18: #{seq2seq_forward.5} parent=0 // pred_check
    %p22 = pneg %p21
  $region19: #{seq2seq_forward.5} parent=0 // pred_check_branch
    %24 = sbr.rel (%p22) target = $region21
  $region20: #{seq2seq_forward.5} parent=0 // pred_region
    %vm25 = vcmask 261120
    %26 = vst.msk [vmem:[#allocation2] sm:$0xff] %vm25, 0.0
    %27 = vst.msk [vmem:[#allocation3] sm:$0xff] %vm25, 0.0
  $region21: #{seq2seq_forward.5} parent=0 // pred_fallthru
    _
  %v28 = vld [vmem:[%s0] sm:$0xf]
  %v29 = vld [vmem:[%s0 + $0x4] sm:$0xf]
  %v30 = vld [vmem:[%s0 + $0x8] sm:$0xf]
  %v31 = vld [vmem:[%s0 + $0xc] sm:$0xf]
  %v32 = vld [vmem:[%s0 + $0x10] sm:$0xf]
  %v33 = vld [vmem:[%s0 + $0x14] sm:$0xf]
  %v34 = vld [vmem:[%s0 + $0x18] sm:$0xf]
  %v35 = vld [vmem:[%s0 + $0x1c] sm:$0xf]
  %v36 = vld [vmem:[%s1] sm:$0xf]
  %v37 = vld [vmem:[%s1 + $0x4] sm:$0xf]
  %v38 = vld [vmem:[%s1 + $0x8] sm:$0xf]
  %v39 = vld [vmem:[%s1 + $0xc] sm:$0xf]
  %v40 = vld [vmem:[%s3] sm:$0x1]
  %v42 = vlaneseq
  %v43 = vshrl.u32 %v42, 7
  %v44 = vsub.s32 0, %v43
  %v45 = vrot.slane %v40, %v44
  %v55 = vunpack.c.l.b16 %v28
  %v56 = vunpack.c.l.b16 %v29
  %v57 = vunpack.c.l.b16 %v30
  %v58 = vunpack.c.l.b16 %v31
  %v59 = vunpack.c.l.b16 %v32
  %v60 = vunpack.c.l.b16 %v33
  %v61 = vunpack.c.l.b16 %v34
  %v62 = vunpack.c.l.b16 %v35
  %v63 = vpack.c.b16 %v56, %v55
  %v64 = vpack.c.b16 %v58, %v57
  %v65 = vpack.c.b16 %v60, %v59
  %v66 = vpack.c.b16 %v62, %v61
  %v71 = vunpack.c.l.b16 %v36
  %v72 = vunpack.c.l.b16 %v37
  %v73 = vunpack.c.l.b16 %v38
  %v74 = vunpack.c.l.b16 %v39
  %v75 = vpack.c.b16 %v72, %v71
  %v76 = vpack.c.b16 %v74, %v73
  %vm79 = vcmask 261120
  %v81 = vsel %vm79, %v63, 0
  %v84 = vsel %vm79, %v64, 0
  %v87 = vsel %vm79, %v65, 0
  %v90 = vsel %vm79, %v66, 0
  %92 = vmatprep.subr.bf16.mxu0 0
  %93 = vmatpush1.bf16.msra.mxu0 0
  %94 = vmatprep.subr.bf16.mxu0 0
  %95 = vmatpush1.bf16.msra.mxu0 0
  %96 = vmatprep.subr.bf16.mxu0 0
  %97 = vmatpush1.bf16.msra.mxu0 0
  %98 = vmatprep.subr.bf16.mxu0 0
  %99 = vmatpush1.bf16.msra.mxu0 0
  %100 = vmatprep.subr.bf16.mxu0 0
  %101 = vmatpush1.bf16.msra.mxu0 0
  %102 = vmatprep.subr.bf16.mxu0 0
  %103 = vmatpush1.bf16.msra.mxu0 0
  %104 = vmatprep.subr.bf16.mxu0 0
  %105 = vmatpush1.bf16.msra.mxu0 %v76
  %106 = vmatprep.subr.bf16.mxu0 0
  %107 = vmatpush1.bf16.msra.mxu0 %v75
  %108 = vmatprep.subr.bf16.mxu0 0
  %109 = vmatpush2.bf16.msra.mxu0 0
  %110 = vmatprep.subr.bf16.mxu0 0
  %111 = vmatpush2.bf16.msra.mxu0 0
  %112 = vmatprep.subr.bf16.mxu0 0
  %113 = vmatpush2.bf16.msra.mxu0 0
  %114 = vmatprep.subr.bf16.mxu0 0
  %115 = vmatpush2.bf16.msra.mxu0 0
  %116 = vmatprep.subr.bf16.mxu0 0
  %117 = vmatpush2.bf16.msra.mxu0 0
  %118 = vmatprep.subr.bf16.mxu0 0
  %119 = vmatpush2.bf16.msra.mxu0 0
  %120 = vmatprep.subr.bf16.mxu0 0
  %121 = vmatpush2.bf16.msra.mxu0 0
  %122 = vmatprep.subr.bf16.mxu0 0
  %123 = vmatpush2.bf16.msra.mxu0 0
  %124 = vmatprep.mubr.bf16.mxu0 0
  %125 = vmatmul.mubr.bf16.gmra.mxu0 %v81
  %v126 = vpop.f32.mrf.mxu0
  %v127 = vadd.f32 %v45, %v126
  %v128 = vpop.f32.mrf.mxu0
  %v129 = vpop.f32.mrf.mxu0
  %v130 = vadd.f32 %v45, %v129
  %v131 = vpop.f32.mrf.mxu0
  %132 = vmatprep.mubr.bf16.mxu0 0
  %133 = vmatmul.mubr.bf16.gmra.mxu0 %v84
  %v134 = vpop.f32.mrf.mxu0
  %v135 = vadd.f32 %v45, %v134
  %v136 = vpop.f32.mrf.mxu0
  %v137 = vpop.f32.mrf.mxu0
  %v138 = vadd.f32 %v45, %v137
  %v139 = vpop.f32.mrf.mxu0
  %140 = vmatprep.mubr.bf16.mxu0 0
  %141 = vmatmul.mubr.bf16.gmra.mxu0 %v87
  %v142 = vpop.f32.mrf.mxu0
  %v143 = vadd.f32 %v45, %v142
  %v144 = vpop.f32.mrf.mxu0
  %v145 = vpop.f32.mrf.mxu0
  %v146 = vadd.f32 %v45, %v145
  %v147 = vpop.f32.mrf.mxu0
  %148 = vmatprep.mubr.bf16.mxu0 0
  %149 = vmatmul.mubr.bf16.gmra.mxu0 %v90
  %v150 = vpop.f32.mrf.mxu0
  %v151 = vadd.f32 %v45, %v150
  %v152 = vpop.f32.mrf.mxu0
  %v153 = vpop.f32.mrf.mxu0
  %v154 = vadd.f32 %v45, %v153
  %v155 = vpop.f32.mrf.mxu0
  %156 = vdwg.mxu0
  %157 = vst [vmem:[#allocation4] sm:$0xff] %v127
  %158 = vst [vmem:[#allocation4 + $0x8] sm:$0xff] %v130
  %159 = vst [vmem:[#allocation4 + $0x10] sm:$0xff] %v135
  %160 = vst [vmem:[#allocation4 + $0x18] sm:$0xff] %v138
  %161 = vst [vmem:[#allocation4 + $0x20] sm:$0xff] %v143
  %162 = vst [vmem:[#allocation4 + $0x28] sm:$0xff] %v146
  %163 = vst [vmem:[#allocation4 + $0x30] sm:$0xff] %v151
  %164 = vst [vmem:[#allocation4 + $0x38] sm:$0xff] %v154
  %v165 = vld [vmem:[#allocation2] sm:$0xff]
  %v166 = vld [vmem:[#allocation3] sm:$0xff]
  %v167 = vld [vmem:[#allocation4] sm:$0xff]
  %v168 = vpack.c.bf16 %v165, %v165
  %v169 = vld [vmem:[%s2] sm:$0xf]
  %v170 = vld [vmem:[%s2 + $0x4] sm:$0xf]
  %v171 = vld [vmem:[%s2 + $0x8] sm:$0xf]
  %v172 = vld [vmem:[%s2 + $0xc] sm:$0xf]
  %v177 = vunpack.c.l.b16 %v169
  %v178 = vunpack.c.l.b16 %v170
  %v179 = vunpack.c.l.b16 %v171
  %v180 = vunpack.c.l.b16 %v172
  %v181 = vpack.c.b16 %v178, %v177
  %v182 = vpack.c.b16 %v180, %v179
  %v186 = vsel %vm79, %v168, 0
  %188 = vmatprep.subr.bf16.mxu0 0
  %189 = vmatpush1.bf16.msra.mxu0 0
  %190 = vmatprep.subr.bf16.mxu0 0
  %191 = vmatpush1.bf16.msra.mxu0 0
  %192 = vmatprep.subr.bf16.mxu0 0
  %193 = vmatpush1.bf16.msra.mxu0 0
  %194 = vmatprep.subr.bf16.mxu0 0
  %195 = vmatpush1.bf16.msra.mxu0 0
  %196 = vmatprep.subr.bf16.mxu0 0
  %197 = vmatpush1.bf16.msra.mxu0 0
  %198 = vmatprep.subr.bf16.mxu0 0
  %199 = vmatpush1.bf16.msra.mxu0 0
  %200 = vmatprep.subr.bf16.mxu0 0
  %201 = vmatpush1.bf16.msra.mxu0 %v182
  %202 = vmatprep.subr.bf16.mxu0 0
  %203 = vmatpush1.bf16.msra.mxu0 %v181
  %204 = vmatprep.subr.bf16.mxu0 0
  %205 = vmatpush2.bf16.msra.mxu0 0
  %206 = vmatprep.subr.bf16.mxu0 0
  %207 = vmatpush2.bf16.msra.mxu0 0
  %208 = vmatprep.subr.bf16.mxu0 0
  %209 = vmatpush2.bf16.msra.mxu0 0
  %210 = vmatprep.subr.bf16.mxu0 0
  %211 = vmatpush2.bf16.msra.mxu0 0
  %212 = vmatprep.subr.bf16.mxu0 0
  %213 = vmatpush2.bf16.msra.mxu0 0
  %214 = vmatprep.subr.bf16.mxu0 0
  %215 = vmatpush2.bf16.msra.mxu0 0
  %216 = vmatprep.subr.bf16.mxu0 0
  %217 = vmatpush2.bf16.msra.mxu0 0
  %218 = vmatprep.subr.bf16.mxu0 0
  %219 = vmatpush2.bf16.msra.mxu0 0
  %220 = vmatprep.mubr.bf16.mxu0 0
  %221 = vmatmul.mubr.bf16.gmra.mxu0 %v186
  %v222 = vpop.f32.mrf.mxu0
  %v223 = vadd.f32 0.0, %v222
  %v224 = vpop.f32.mrf.mxu0
  %v225 = vpop.f32.mrf.mxu0
  %v226 = vpop.f32.mrf.mxu0
  %227 = vdwg.mxu0
  %v228 = vadd.f32 %v167, %v223
  %v229 = vxor.u32 %v228, 2147483648
  %v230 = vmul.f32 %v229, 1.442695
  %v231 = vpow.pop %v230
  %v232 = vadd.f32 %v231, 1.0
  %v233 = vrcp.pop %v232
  %v234 = vmul.f32 1.0, %v233
  %v235 = vtanh.pop %v228
  %237 = vrot.lane.b32.xlu0 %v166, 32
  %v238 = vpop.permute.xlu0 %237
  %v240 = vmul.f32 %v234, %v238
  %242 = vrot.lane.b32.xlu0 %v235, 32
  %v243 = vpop.permute.xlu0 %242
  %v245 = vmul.f32 %v234, %v243
  %247 = vrot.lane.b32.xlu0 %v245, 32
  %v248 = vpop.permute.xlu0 %247
  %v250 = vadd.f32 %v240, %v248
  %v251 = vtanh.pop %v250
  %253 = vrot.lane.b32.xlu0 %v251, 32
  %v254 = vpop.permute.xlu0 %253
  %v256 = vmul.f32 %v234, %v254
  %258 = vrot.lane.b32.xlu0 %v256, 64
  %v259 = vpop.permute.xlu0 %258
  %261 = vst.msk [vmem:[#allocation5] sm:$0xff] %vm79, %v259
  %s262 = scalar_lea.vmem [#allocation4], 8
  %v263 = vld [vmem:[%s262] sm:$0xff]
  %v264 = vpack.c.bf16 %v256, %v256
  %v265 = vld [vmem:[%s2] sm:$0xf]
  %v266 = vld [vmem:[%s2 + $0x4] sm:$0xf]
  %v267 = vld [vmem:[%s2 + $0x8] sm:$0xf]
  %v268 = vld [vmem:[%s2 + $0xc] sm:$0xf]
  %270 = vrot.lane.b32.xlu0 %v264, 64
  %v271 = vpop.permute.xlu0 %270
  %v276 = vunpack.c.l.b16 %v265
  %v277 = vunpack.c.l.b16 %v266
  %v278 = vunpack.c.l.b16 %v267
  %v279 = vunpack.c.l.b16 %v268
  %v280 = vpack.c.b16 %v277, %v276
  %v281 = vpack.c.b16 %v279, %v278
  %v285 = vsel %vm79, %v271, 0
  %287 = vmatprep.subr.bf16.mxu0 0
  %288 = vmatpush1.bf16.msra.mxu0 0
  %289 = vmatprep.subr.bf16.mxu0 0
  %290 = vmatpush1.bf16.msra.mxu0 0
  %291 = vmatprep.subr.bf16.mxu0 0
  %292 = vmatpush1.bf16.msra.mxu0 0
  %293 = vmatprep.subr.bf16.mxu0 0
  %294 = vmatpush1.bf16.msra.mxu0 0
  %295 = vmatprep.subr.bf16.mxu0 0
  %296 = vmatpush1.bf16.msra.mxu0 0
  %297 = vmatprep.subr.bf16.mxu0 0
  %298 = vmatpush1.bf16.msra.mxu0 0
  %299 = vmatprep.subr.bf16.mxu0 0
  %300 = vmatpush1.bf16.msra.mxu0 %v281
  %301 = vmatprep.subr.bf16.mxu0 0
  %302 = vmatpush1.bf16.msra.mxu0 %v280
  %303 = vmatprep.subr.bf16.mxu0 0
  %304 = vmatpush2.bf16.msra.mxu0 0
  %305 = vmatprep.subr.bf16.mxu0 0
  %306 = vmatpush2.bf16.msra.mxu0 0
  %307 = vmatprep.subr.bf16.mxu0 0
  %308 = vmatpush2.bf16.msra.mxu0 0
  %309 = vmatprep.subr.bf16.mxu0 0
  %310 = vmatpush2.bf16.msra.mxu0 0
  %311 = vmatprep.subr.bf16.mxu0 0
  %312 = vmatpush2.bf16.msra.mxu0 0
  %313 = vmatprep.subr.bf16.mxu0 0
  %314 = vmatpush2.bf16.msra.mxu0 0
  %315 = vmatprep.subr.bf16.mxu0 0
  %316 = vmatpush2.bf16.msra.mxu0 0
  %317 = vmatprep.subr.bf16.mxu0 0
  %318 = vmatpush2.bf16.msra.mxu0 0
  %319 = vmatprep.mubr.bf16.mxu0 0
  %320 = vmatmul.mubr.bf16.gmra.mxu0 %v285
  %v321 = vpop.f32.mrf.mxu0
  %v322 = vadd.f32 0.0, %v321
  %v323 = vpop.f32.mrf.mxu0
  %v324 = vpop.f32.mrf.mxu0
  %v325 = vpop.f32.mrf.mxu0
  %326 = vdwg.mxu0
  %v327 = vadd.f32 %v263, %v322
  %v328 = vxor.u32 %v327, 2147483648
  %v329 = vmul.f32 %v328, 1.442695
  %v330 = vpow.pop %v329
  %v331 = vadd.f32 %v330, 1.0
  %v332 = vrcp.pop %v331
  %v333 = vmul.f32 1.0, %v332
  %v334 = vtanh.pop %v327
  %v335 = vmul.f32 %v333, %v250
  %337 = vrot.lane.b32.xlu0 %v334, 32
  %v338 = vpop.permute.xlu0 %337
  %v340 = vmul.f32 %v333, %v338
  %342 = vrot.lane.b32.xlu0 %v340, 32
  %v343 = vpop.permute.xlu0 %342
  %v345 = vadd.f32 %v335, %v343
  %v346 = vtanh.pop %v345
  %348 = vrot.lane.b32.xlu0 %v346, 32
  %v349 = vpop.permute.xlu0 %348
  %v351 = vmul.f32 %v333, %v349
  %353 = vrot.lane.b32.xlu0 %v351, 64
  %v354 = vpop.permute.xlu0 %353
  %s356 = scalar_lea.vmem [#allocation5], 8
  %357 = vst.msk [vmem:[%s356] sm:$0xff] %vm79, %v354
  %s358 = scalar_lea.vmem [#allocation4], 16
  %v359 = vld [vmem:[%s358] sm:$0xff]
  %v360 = vpack.c.bf16 %v351, %v351
  %v361 = vld [vmem:[%s2] sm:$0xf]
  %v362 = vld [vmem:[%s2 + $0x4] sm:$0xf]
  %v363 = vld [vmem:[%s2 + $0x8] sm:$0xf]
  %v364 = vld [vmem:[%s2 + $0xc] sm:$0xf]
  %366 = vrot.lane.b32.xlu0 %v360, 64
  %v367 = vpop.permute.xlu0 %366
  %v372 = vunpack.c.l.b16 %v361
  %v373 = vunpack.c.l.b16 %v362
  %v374 = vunpack.c.l.b16 %v363
  %v375 = vunpack.c.l.b16 %v364
  %v376 = vpack.c.b16 %v373, %v372
  %v377 = vpack.c.b16 %v375, %v374
  %v381 = vsel %vm79, %v367, 0
  %383 = vmatprep.subr.bf16.mxu0 0
  %384 = vmatpush1.bf16.msra.mxu0 0
  %385 = vmatprep.subr.bf16.mxu0 0
  %386 = vmatpush1.bf16.msra.mxu0 0
  %387 = vmatprep.subr.bf16.mxu0 0
  %388 = vmatpush1.bf16.msra.mxu0 0
  %389 = vmatprep.subr.bf16.mxu0 0
  %390 = vmatpush1.bf16.msra.mxu0 0
  %391 = vmatprep.subr.bf16.mxu0 0
  %392 = vmatpush1.bf16.msra.mxu0 0
  %393 = vmatprep.subr.bf16.mxu0 0
  %394 = vmatpush1.bf16.msra.mxu0 0
  %395 = vmatprep.subr.bf16.mxu0 0
  %396 = vmatpush1.bf16.msra.mxu0 %v377
  %397 = vmatprep.subr.bf16.mxu0 0
  %398 = vmatpush1.bf16.msra.mxu0 %v376
  %399 = vmatprep.subr.bf16.mxu0 0
  %400 = vmatpush2.bf16.msra.mxu0 0
  %401 = vmatprep.subr.bf16.mxu0 0
  %402 = vmatpush2.bf16.msra.mxu0 0
  %403 = vmatprep.subr.bf16.mxu0 0
  %404 = vmatpush2.bf16.msra.mxu0 0
  %405 = vmatprep.subr.bf16.mxu0 0
  %406 = vmatpush2.bf16.msra.mxu0 0
  %407 = vmatprep.subr.bf16.mxu0 0
  %408 = vmatpush2.bf16.msra.mxu0 0
  %409 = vmatprep.subr.bf16.mxu0 0
  %410 = vmatpush2.bf16.msra.mxu0 0
  %411 = vmatprep.subr.bf16.mxu0 0
  %412 = vmatpush2.bf16.msra.mxu0 0
  %413 = vmatprep.subr.bf16.mxu0 0
  %414 = vmatpush2.bf16.msra.mxu0 0
  %415 = vmatprep.mubr.bf16.mxu0 0
  %416 = vmatmul.mubr.bf16.gmra.mxu0 %v381
  %v417 = vpop.f32.mrf.mxu0
  %v418 = vadd.f32 0.0, %v417
  %v419 = vpop.f32.mrf.mxu0
  %v420 = vpop.f32.mrf.mxu0
  %v421 = vpop.f32.mrf.mxu0
  %422 = vdwg.mxu0
  %v423 = vadd.f32 %v359, %v418
  %v424 = vxor.u32 %v423, 2147483648
  %v425 = vmul.f32 %v424, 1.442695
  %v426 = vpow.pop %v425
  %v427 = vadd.f32 %v426, 1.0
  %v428 = vrcp.pop %v427
  %v429 = vmul.f32 1.0, %v428
  %v430 = vtanh.pop %v423
  %v431 = vmul.f32 %v429, %v345
  %433 = vrot.lane.b32.xlu0 %v430, 32
  %v434 = vpop.permute.xlu0 %433
  %v436 = vmul.f32 %v429, %v434
  %438 = vrot.lane.b32.xlu0 %v436, 32
  %v439 = vpop.permute.xlu0 %438
  %v441 = vadd.f32 %v431, %v439
  %v442 = vtanh.pop %v441
  %444 = vrot.lane.b32.xlu0 %v442, 32
  %v445 = vpop.permute.xlu0 %444
  %v447 = vmul.f32 %v429, %v445
  %449 = vrot.lane.b32.xlu0 %v447, 64
  %v450 = vpop.permute.xlu0 %449
  %s452 = scalar_lea.vmem [#allocation5], 16
  %453 = vst.msk [vmem:[%s452] sm:$0xff] %vm79, %v450
  %s454 = scalar_lea.vmem [#allocation4], 24
  %v455 = vld [vmem:[%s454] sm:$0xff]
  %v456 = vpack.c.bf16 %v447, %v447
  %v457 = vld [vmem:[%s2] sm:$0xf]
  %v458 = vld [vmem:[%s2 + $0x4] sm:$0xf]
  %v459 = vld [vmem:[%s2 + $0x8] sm:$0xf]
  %v460 = vld [vmem:[%s2 + $0xc] sm:$0xf]
  %462 = vrot.lane.b32.xlu0 %v456, 64
  %v463 = vpop.permute.xlu0 %462
  %v468 = vunpack.c.l.b16 %v457
  %v469 = vunpack.c.l.b16 %v458
  %v470 = vunpack.c.l.b16 %v459
  %v471 = vunpack.c.l.b16 %v460
  %v472 = vpack.c.b16 %v469, %v468
  %v473 = vpack.c.b16 %v471, %v470
  %v477 = vsel %vm79, %v463, 0
  %479 = vmatprep.subr.bf16.mxu0 0
  %480 = vmatpush1.bf16.msra.mxu0 0
  %481 = vmatprep.subr.bf16.mxu0 0
  %482 = vmatpush1.bf16.msra.mxu0 0
  %483 = vmatprep.subr.bf16.mxu0 0
  %484 = vmatpush1.bf16.msra.mxu0 0
  %485 = vmatprep.subr.bf16.mxu0 0
  %486 = vmatpush1.bf16.msra.mxu0 0
  %487 = vmatprep.subr.bf16.mxu0 0
  %488 = vmatpush1.bf16.msra.mxu0 0
  %489 = vmatprep.subr.bf16.mxu0 0
  %490 = vmatpush1.bf16.msra.mxu0 0
  %491 = vmatprep.subr.bf16.mxu0 0
  %492 = vmatpush1.bf16.msra.mxu0 %v473
  %493 = vmatprep.subr.bf16.mxu0 0
  %494 = vmatpush1.bf16.msra.mxu0 %v472
  %495 = vmatprep.subr.bf16.mxu0 0
  %496 = vmatpush2.bf16.msra.mxu0 0
  %497 = vmatprep.subr.bf16.mxu0 0
  %498 = vmatpush2.bf16.msra.mxu0 0
  %499 = vmatprep.subr.bf16.mxu0 0
  %500 = vmatpush2.bf16.msra.mxu0 0
  %501 = vmatprep.subr.bf16.mxu0 0
  %502 = vmatpush2.bf16.msra.mxu0 0
  %503 = vmatprep.subr.bf16.mxu0 0
  %504 = vmatpush2.bf16.msra.mxu0 0
  %505 = vmatprep.subr.bf16.mxu0 0
  %506 = vmatpush2.bf16.msra.mxu0 0
  %507 = vmatprep.subr.bf16.mxu0 0
  %508 = vmatpush2.bf16.msra.mxu0 0
  %509 = vmatprep.subr.bf16.mxu0 0
  %510 = vmatpush2.bf16.msra.mxu0 0
  %511 = vmatprep.mubr.bf16.mxu0 0
  %512 = vmatmul.mubr.bf16.gmra.mxu0 %v477
  %v513 = vpop.f32.mrf.mxu0
  %v514 = vadd.f32 0.0, %v513
  %v515 = vpop.f32.mrf.mxu0
  %v516 = vpop.f32.mrf.mxu0
  %v517 = vpop.f32.mrf.mxu0
  %518 = vdwg.mxu0
  %v519 = vadd.f32 %v455, %v514
  %v520 = vxor.u32 %v519, 2147483648
  %v521 = vmul.f32 %v520, 1.442695
  %v522 = vpow.pop %v521
  %v523 = vadd.f32 %v522, 1.0
  %v524 = vrcp.pop %v523
  %v525 = vmul.f32 1.0, %v524
  %v526 = vtanh.pop %v519
  %v527 = vmul.f32 %v525, %v441
  %529 = vrot.lane.b32.xlu0 %v526, 32
  %v530 = vpop.permute.xlu0 %529
  %v532 = vmul.f32 %v525, %v530
  %534 = vrot.lane.b32.xlu0 %v532, 32
  %v535 = vpop.permute.xlu0 %534
  %v537 = vadd.f32 %v527, %v535
  %v538 = vtanh.pop %v537
  %540 = vrot.lane.b32.xlu0 %v538, 32
  %v541 = vpop.permute.xlu0 %540
  %v543 = vmul.f32 %v525, %v541
  %545 = vrot.lane.b32.xlu0 %v543, 64
  %v546 = vpop.permute.xlu0 %545
  %s548 = scalar_lea.vmem [#allocation5], 24
  %549 = vst.msk [vmem:[%s548] sm:$0xff] %vm79, %v546
  %s550 = scalar_lea.vmem [#allocation4], 32
  %v551 = vld [vmem:[%s550] sm:$0xff]
  %v552 = vpack.c.bf16 %v543, %v543
  %v553 = vld [vmem:[%s2] sm:$0xf]
  %v554 = vld [vmem:[%s2 + $0x4] sm:$0xf]
  %v555 = vld [vmem:[%s2 + $0x8] sm:$0xf]
  %v556 = vld [vmem:[%s2 + $0xc] sm:$0xf]
  %558 = vrot.lane.b32.xlu0 %v552, 64
  %v559 = vpop.permute.xlu0 %558
  %v564 = vunpack.c.l.b16 %v553
  %v565 = vunpack.c.l.b16 %v554
  %v566 = vunpack.c.l.b16 %v555
  %v567 = vunpack.c.l.b16 %v556
  %v568 = vpack.c.b16 %v565, %v564
  %v569 = vpack.c.b16 %v567, %v566
  %v573 = vsel %vm79, %v559, 0
  %575 = vmatprep.subr.bf16.mxu0 0
  %576 = vmatpush1.bf16.msra.mxu0 0
  %577 = vmatprep.subr.bf16.mxu0 0
  %578 = vmatpush1.bf16.msra.mxu0 0
  %579 = vmatprep.subr.bf16.mxu0 0
  %580 = vmatpush1.bf16.msra.mxu0 0
  %581 = vmatprep.subr.bf16.mxu0 0
  %582 = vmatpush1.bf16.msra.mxu0 0
  %583 = vmatprep.subr.bf16.mxu0 0
  %584 = vmatpush1.bf16.msra.mxu0 0
  %585 = vmatprep.subr.bf16.mxu0 0
  %586 = vmatpush1.bf16.msra.mxu0 0
  %587 = vmatprep.subr.bf16.mxu0 0
  %588 = vmatpush1.bf16.msra.mxu0 %v569
  %589 = vmatprep.subr.bf16.mxu0 0
  %590 = vmatpush1.bf16.msra.mxu0 %v568
  %591 = vmatprep.subr.bf16.mxu0 0
  %592 = vmatpush2.bf16.msra.mxu0 0
  %593 = vmatprep.subr.bf16.mxu0 0
  %594 = vmatpush2.bf16.msra.mxu0 0
  %595 = vmatprep.subr.bf16.mxu0 0
  %596 = vmatpush2.bf16.msra.mxu0 0
  %597 = vmatprep.subr.bf16.mxu0 0
  %598 = vmatpush2.bf16.msra.mxu0 0
  %599 = vmatprep.subr.bf16.mxu0 0
  %600 = vmatpush2.bf16.msra.mxu0 0
  %601 = vmatprep.subr.bf16.mxu0 0
  %602 = vmatpush2.bf16.msra.mxu0 0
  %603 = vmatprep.subr.bf16.mxu0 0
  %604 = vmatpush2.bf16.msra.mxu0 0
  %605 = vmatprep.subr.bf16.mxu0 0
  %606 = vmatpush2.bf16.msra.mxu0 0
  %607 = vmatprep.mubr.bf16.mxu0 0
  %608 = vmatmul.mubr.bf16.gmra.mxu0 %v573
  %v609 = vpop.f32.mrf.mxu0
  %v610 = vadd.f32 0.0, %v609
  %v611 = vpop.f32.mrf.mxu0
  %v612 = vpop.f32.mrf.mxu0
  %v613 = vpop.f32.mrf.mxu0
  %614 = vdwg.mxu0
  %v615 = vadd.f32 %v551, %v610
  %v616 = vxor.u32 %v615, 2147483648
  %v617 = vmul.f32 %v616, 1.442695
  %v618 = vpow.pop %v617
  %v619 = vadd.f32 %v618, 1.0
  %v620 = vrcp.pop %v619
  %v621 = vmul.f32 1.0, %v620
  %v622 = vtanh.pop %v615
  %v623 = vmul.f32 %v621, %v537
  %625 = vrot.lane.b32.xlu0 %v622, 32
  %v626 = vpop.permute.xlu0 %625
  %v628 = vmul.f32 %v621, %v626
  %630 = vrot.lane.b32.xlu0 %v628, 32
  %v631 = vpop.permute.xlu0 %630
  %v633 = vadd.f32 %v623, %v631
  %v634 = vtanh.pop %v633
  %636 = vrot.lane.b32.xlu0 %v634, 32
  %v637 = vpop.permute.xlu0 %636
  %v639 = vmul.f32 %v621, %v637
  %641 = vrot.lane.b32.xlu0 %v639, 64
  %v642 = vpop.permute.xlu0 %641
  %s644 = scalar_lea.vmem [#allocation5], 32
  %645 = vst.msk [vmem:[%s644] sm:$0xff] %vm79, %v642
  %s646 = scalar_lea.vmem [#allocation4], 40
  %v647 = vld [vmem:[%s646] sm:$0xff]
  %v648 = vpack.c.bf16 %v639, %v639
  %v649 = vld [vmem:[%s2] sm:$0xf]
  %v650 = vld [vmem:[%s2 + $0x4] sm:$0xf]
  %v651 = vld [vmem:[%s2 + $0x8] sm:$0xf]
  %v652 = vld [vmem:[%s2 + $0xc] sm:$0xf]
  %654 = vrot.lane.b32.xlu0 %v648, 64
  %v655 = vpop.permute.xlu0 %654
  %v660 = vunpack.c.l.b16 %v649
  %v661 = vunpack.c.l.b16 %v650
  %v662 = vunpack.c.l.b16 %v651
  %v663 = vunpack.c.l.b16 %v652
  %v664 = vpack.c.b16 %v661, %v660
  %v665 = vpack.c.b16 %v663, %v662
  %v669 = vsel %vm79, %v655, 0
  %671 = vmatprep.subr.bf16.mxu0 0
  %672 = vmatpush1.bf16.msra.mxu0 0
  %673 = vmatprep.subr.bf16.mxu0 0
  %674 = vmatpush1.bf16.msra.mxu0 0
  %675 = vmatprep.subr.bf16.mxu0 0
  %676 = vmatpush1.bf16.msra.mxu0 0
  %677 = vmatprep.subr.bf16.mxu0 0
  %678 = vmatpush1.bf16.msra.mxu0 0
  %679 = vmatprep.subr.bf16.mxu0 0
  %680 = vmatpush1.bf16.msra.mxu0 0
  %681 = vmatprep.subr.bf16.mxu0 0
  %682 = vmatpush1.bf16.msra.mxu0 0
  %683 = vmatprep.subr.bf16.mxu0 0
  %684 = vmatpush1.bf16.msra.mxu0 %v665
  %685 = vmatprep.subr.bf16.mxu0 0
  %686 = vmatpush1.bf16.msra.mxu0 %v664
  %687 = vmatprep.subr.bf16.mxu0 0
  %688 = vmatpush2.bf16.msra.mxu0 0
  %689 = vmatprep.subr.bf16.mxu0 0
  %690 = vmatpush2.bf16.msra.mxu0 0
  %691 = vmatprep.subr.bf16.mxu0 0
  %692 = vmatpush2.bf16.msra.mxu0 0
  %693 = vmatprep.subr.bf16.mxu0 0
  %694 = vmatpush2.bf16.msra.mxu0 0
  %695 = vmatprep.subr.bf16.mxu0 0
  %696 = vmatpush2.bf16.msra.mxu0 0
  %697 = vmatprep.subr.bf16.mxu0 0
  %698 = vmatpush2.bf16.msra.mxu0 0
  %699 = vmatprep.subr.bf16.mxu0 0
  %700 = vmatpush2.bf16.msra.mxu0 0
  %701 = vmatprep.subr.bf16.mxu0 0
  %702 = vmatpush2.bf16.msra.mxu0 0
  %703 = vmatprep.mubr.bf16.mxu0 0
  %704 = vmatmul.mubr.bf16.gmra.mxu0 %v669
  %v705 = vpop.f32.mrf.mxu0
  %v706 = vadd.f32 0.0, %v705
  %v707 = vpop.f32.mrf.mxu0
  %v708 = vpop.f32.mrf.mxu0
  %v709 = vpop.f32.mrf.mxu0
  %710 = vdwg.mxu0
  %v711 = vadd.f32 %v647, %v706
  %v712 = vxor.u32 %v711, 2147483648
  %v713 = vmul.f32 %v712, 1.442695
  %v714 = vpow.pop %v713
  %v715 = vadd.f32 %v714, 1.0
  %v716 = vrcp.pop %v715
  %v717 = vmul.f32 1.0, %v716
  %v718 = vtanh.pop %v711
  %v719 = vmul.f32 %v717, %v633
  %721 = vrot.lane.b32.xlu0 %v718, 32
  %v722 = vpop.permute.xlu0 %721
  %v724 = vmul.f32 %v717, %v722
  %726 = vrot.lane.b32.xlu0 %v724, 32
  %v727 = vpop.permute.xlu0 %726
  %v729 = vadd.f32 %v719, %v727
  %v730 = vtanh.pop %v729
  %732 = vrot.lane.b32.xlu0 %v730, 32
  %v733 = vpop.permute.xlu0 %732
  %v735 = vmul.f32 %v717, %v733
  %737 = vrot.lane.b32.xlu0 %v735, 64
  %v738 = vpop.permute.xlu0 %737
  %s740 = scalar_lea.vmem [#allocation5], 40
  %741 = vst.msk [vmem:[%s740] sm:$0xff] %vm79, %v738
  %s742 = scalar_lea.vmem [#allocation4], 48
  %v743 = vld [vmem:[%s742] sm:$0xff]
  %v744 = vpack.c.bf16 %v735, %v735
  %v745 = vld [vmem:[%s2] sm:$0xf]
  %v746 = vld [vmem:[%s2 + $0x4] sm:$0xf]
  %v747 = vld [vmem:[%s2 + $0x8] sm:$0xf]
  %v748 = vld [vmem:[%s2 + $0xc] sm:$0xf]
  %750 = vrot.lane.b32.xlu0 %v744, 64
  %v751 = vpop.permute.xlu0 %750
  %v756 = vunpack.c.l.b16 %v745
  %v757 = vunpack.c.l.b16 %v746
  %v758 = vunpack.c.l.b16 %v747
  %v759 = vunpack.c.l.b16 %v748
  %v760 = vpack.c.b16 %v757, %v756
  %v761 = vpack.c.b16 %v759, %v758
  %v765 = vsel %vm79, %v751, 0
  %767 = vmatprep.subr.bf16.mxu0 0
  %768 = vmatpush1.bf16.msra.mxu0 0
  %769 = vmatprep.subr.bf16.mxu0 0
  %770 = vmatpush1.bf16.msra.mxu0 0
  %771 = vmatprep.subr.bf16.mxu0 0
  %772 = vmatpush1.bf16.msra.mxu0 0
  %773 = vmatprep.subr.bf16.mxu0 0
  %774 = vmatpush1.bf16.msra.mxu0 0
  %775 = vmatprep.subr.bf16.mxu0 0
  %776 = vmatpush1.bf16.msra.mxu0 0
  %777 = vmatprep.subr.bf16.mxu0 0
  %778 = vmatpush1.bf16.msra.mxu0 0
  %779 = vmatprep.subr.bf16.mxu0 0
  %780 = vmatpush1.bf16.msra.mxu0 %v761
  %781 = vmatprep.subr.bf16.mxu0 0
  %782 = vmatpush1.bf16.msra.mxu0 %v760
  %783 = vmatprep.subr.bf16.mxu0 0
  %784 = vmatpush2.bf16.msra.mxu0 0
  %785 = vmatprep.subr.bf16.mxu0 0
  %786 = vmatpush2.bf16.msra.mxu0 0
  %787 = vmatprep.subr.bf16.mxu0 0
  %788 = vmatpush2.bf16.msra.mxu0 0
  %789 = vmatprep.subr.bf16.mxu0 0
  %790 = vmatpush2.bf16.msra.mxu0 0
  %791 = vmatprep.subr.bf16.mxu0 0
  %792 = vmatpush2.bf16.msra.mxu0 0
  %793 = vmatprep.subr.bf16.mxu0 0
  %794 = vmatpush2.bf16.msra.mxu0 0
  %795 = vmatprep.subr.bf16.mxu0 0
  %796 = vmatpush2.bf16.msra.mxu0 0
  %797 = vmatprep.subr.bf16.mxu0 0
  %798 = vmatpush2.bf16.msra.mxu0 0
  %799 = vmatprep.mubr.bf16.mxu0 0
  %800 = vmatmul.mubr.bf16.gmra.mxu0 %v765
  %v801 = vpop.f32.mrf.mxu0
  %v802 = vadd.f32 0.0, %v801
  %v803 = vpop.f32.mrf.mxu0
  %v804 = vpop.f32.mrf.mxu0
  %v805 = vpop.f32.mrf.mxu0
  %806 = vdwg.mxu0
  %v807 = vadd.f32 %v743, %v802
  %v808 = vxor.u32 %v807, 2147483648
  %v809 = vmul.f32 %v808, 1.442695
  %v810 = vpow.pop %v809
  %v811 = vadd.f32 %v810, 1.0
  %v812 = vrcp.pop %v811
  %v813 = vmul.f32 1.0, %v812
  %v814 = vtanh.pop %v807
  %v815 = vmul.f32 %v813, %v729
  %817 = vrot.lane.b32.xlu0 %v814, 32
  %v818 = vpop.permute.xlu0 %817
  %v820 = vmul.f32 %v813, %v818
  %822 = vrot.lane.b32.xlu0 %v820, 32
  %v823 = vpop.permute.xlu0 %822
  %v825 = vadd.f32 %v815, %v823
  %v826 = vtanh.pop %v825
  %828 = vrot.lane.b32.xlu0 %v826, 32
  %v829 = vpop.permute.xlu0 %828
  %v831 = vmul.f32 %v813, %v829
  %833 = vrot.lane.b32.xlu0 %v831, 64
  %v834 = vpop.permute.xlu0 %833
  %s836 = scalar_lea.vmem [#allocation5], 48
  %837 = vst.msk [vmem:[%s836] sm:$0xff] %vm79, %v834
  %s838 = scalar_lea.vmem [#allocation4], 56
  %v839 = vld [vmem:[%s838] sm:$0xff]
  %v840 = vpack.c.bf16 %v831, %v831
  %v841 = vld [vmem:[%s2] sm:$0xf]
  %v842 = vld [vmem:[%s2 + $0x4] sm:$0xf]
  %v843 = vld [vmem:[%s2 + $0x8] sm:$0xf]
  %v844 = vld [vmem:[%s2 + $0xc] sm:$0xf]
  %846 = vrot.lane.b32.xlu0 %v840, 64
  %v847 = vpop.permute.xlu0 %846
  %v852 = vunpack.c.l.b16 %v841
  %v853 = vunpack.c.l.b16 %v842
  %v854 = vunpack.c.l.b16 %v843
  %v855 = vunpack.c.l.b16 %v844
  %v856 = vpack.c.b16 %v853, %v852
  %v857 = vpack.c.b16 %v855, %v854
  %v861 = vsel %vm79, %v847, 0
  %863 = vmatprep.subr.bf16.mxu0 0
  %864 = vmatpush1.bf16.msra.mxu0 0
  %865 = vmatprep.subr.bf16.mxu0 0
  %866 = vmatpush1.bf16.msra.mxu0 0
  %867 = vmatprep.subr.bf16.mxu0 0
  %868 = vmatpush1.bf16.msra.mxu0 0
  %869 = vmatprep.subr.bf16.mxu0 0
  %870 = vmatpush1.bf16.msra.mxu0 0
  %871 = vmatprep.subr.bf16.mxu0 0
  %872 = vmatpush1.bf16.msra.mxu0 0
  %873 = vmatprep.subr.bf16.mxu0 0
  %874 = vmatpush1.bf16.msra.mxu0 0
  %875 = vmatprep.subr.bf16.mxu0 0
  %876 = vmatpush1.bf16.msra.mxu0 %v857
  %877 = vmatprep.subr.bf16.mxu0 0
  %878 = vmatpush1.bf16.msra.mxu0 %v856
  %879 = vmatprep.subr.bf16.mxu0 0
  %880 = vmatpush2.bf16.msra.mxu0 0
  %881 = vmatprep.subr.bf16.mxu0 0
  %882 = vmatpush2.bf16.msra.mxu0 0
  %883 = vmatprep.subr.bf16.mxu0 0
  %884 = vmatpush2.bf16.msra.mxu0 0
  %885 = vmatprep.subr.bf16.mxu0 0
  %886 = vmatpush2.bf16.msra.mxu0 0
  %887 = vmatprep.subr.bf16.mxu0 0
  %888 = vmatpush2.bf16.msra.mxu0 0
  %889 = vmatprep.subr.bf16.mxu0 0
  %890 = vmatpush2.bf16.msra.mxu0 0
  %891 = vmatprep.subr.bf16.mxu0 0
  %892 = vmatpush2.bf16.msra.mxu0 0
  %893 = vmatprep.subr.bf16.mxu0 0
  %894 = vmatpush2.bf16.msra.mxu0 0
  %895 = vmatprep.mubr.bf16.mxu0 0
  %896 = vmatmul.mubr.bf16.gmra.mxu0 %v861
  %v897 = vpop.f32.mrf.mxu0
  %v898 = vadd.f32 0.0, %v897
  %v899 = vpop.f32.mrf.mxu0
  %v900 = vpop.f32.mrf.mxu0
  %v901 = vpop.f32.mrf.mxu0
  %902 = vdwg.mxu0
  %v903 = vadd.f32 %v839, %v898
  %v904 = vxor.u32 %v903, 2147483648
  %v905 = vmul.f32 %v904, 1.442695
  %v906 = vpow.pop %v905
  %v907 = vadd.f32 %v906, 1.0
  %v908 = vrcp.pop %v907
  %v909 = vmul.f32 1.0, %v908
  %v910 = vtanh.pop %v903
  %v911 = vmul.f32 %v909, %v825
  %913 = vrot.lane.b32.xlu0 %v910, 32
  %v914 = vpop.permute.xlu0 %913
  %v916 = vmul.f32 %v909, %v914
  %918 = vrot.lane.b32.xlu0 %v916, 32
  %v919 = vpop.permute.xlu0 %918
  %v921 = vadd.f32 %v911, %v919
  %v922 = vtanh.pop %v921
  %924 = vrot.lane.b32.xlu0 %v922, 32
  %v925 = vpop.permute.xlu0 %924
  %v927 = vmul.f32 %v909, %v925
  %929 = vrot.lane.b32.xlu0 %v927, 64
  %v930 = vpop.permute.xlu0 %929
  %s932 = scalar_lea.vmem [#allocation5], 56
  %933 = vst.msk [vmem:[%s932] sm:$0xff] %vm79, %v930
  %934 = vst.msk [vmem:[#allocation2] sm:$0xff] %vm79, %v930
  %936 = vrot.lane.b32.xlu0 %v921, 96
  %v937 = vpop.permute.xlu0 %936
  %939 = vst.msk [vmem:[#allocation3] sm:$0xff] %vm79, %v937
  %v940 = vld [vmem:[#allocation5] sm:$0xff]
  %v941 = vld [vmem:[#allocation5 + $0x8] sm:$0xff]
  %v942 = vld [vmem:[#allocation5 + $0x10] sm:$0xff]
  %v943 = vld [vmem:[#allocation5 + $0x18] sm:$0xff]
  %v944 = vld [vmem:[#allocation5 + $0x20] sm:$0xff]
  %v945 = vld [vmem:[#allocation5 + $0x28] sm:$0xff]
  %v946 = vld [vmem:[#allocation5 + $0x30] sm:$0xff]
  %v947 = vld [vmem:[#allocation5 + $0x38] sm:$0xff]
  %v948 = vpack.c.bf16 %v941, %v940
  %v949 = vpack.c.bf16 %v943, %v942
  %v950 = vpack.c.bf16 %v945, %v944
  %v951 = vpack.c.bf16 %v947, %v946
  %v956 = vunpack.c.l.b16 %v948
  %v957 = vunpack.c.h.b16 %v948
  %v958 = vunpack.c.l.b16 %v949
  %v959 = vunpack.c.h.b16 %v949
  %v960 = vunpack.c.l.b16 %v950
  %v961 = vunpack.c.h.b16 %v950
  %v962 = vunpack.c.l.b16 %v951
  %v963 = vunpack.c.h.b16 %v951
  %v964 = vpack.c.b16 %v956, %v956
  %v965 = vpack.c.b16 %v957, %v957
  %v966 = vpack.c.b16 %v958, %v958
  %v967 = vpack.c.b16 %v959, %v959
  %v968 = vpack.c.b16 %v960, %v960
  %v969 = vpack.c.b16 %v961, %v961
  %v970 = vpack.c.b16 %v962, %v962
  %v971 = vpack.c.b16 %v963, %v963
  %vm980 = vcmask 257024
  %981 = vst.msk [vmem:[%s4] sm:$0xf] %vm980, %v964
  %982 = vst.msk [vmem:[%s4 + $0x4] sm:$0xf] %vm980, %v965
  %983 = vst.msk [vmem:[%s4 + $0x8] sm:$0xf] %vm980, %v966
  %984 = vst.msk [vmem:[%s4 + $0xc] sm:$0xf] %vm980, %v967
  %985 = vst.msk [vmem:[%s4 + $0x10] sm:$0xf] %vm980, %v968
  %986 = vst.msk [vmem:[%s4 + $0x14] sm:$0xf] %vm980, %v969
  %987 = vst.msk [vmem:[%s4 + $0x18] sm:$0xf] %vm980, %v970
  %988 = vst.msk [vmem:[%s4 + $0x1c] sm:$0xf] %vm980, %v971
  // Predicated region
  $region22: #{seq2seq_forward.5} parent=0 // pred_check
    %p989 = pneg %p21
  $region23: #{seq2seq_forward.5} parent=0 // pred_check_branch
    %991 = sbr.rel (%p989) target = $region25
  $region24: #{seq2seq_forward.5} parent=0 // pred_region
    %992 = vst.msk [vmem:[%s5] sm:$0xff] %vm79, %v930
    %993 = vst.msk [vmem:[%s6] sm:$0xff] %vm79, %v937
  $region25: #{seq2seq_forward.5} parent=0 // pred_fallthru
    _
  // Predicated region
  $region26: #{seq2seq_forward.5} parent=0 // pred_check
    _
  $region27: #{seq2seq_forward.5} parent=0 // pred_check_branch
    %995 = sbr.rel (0) target = $region29
  $region28: #{seq2seq_forward.5} parent=0 // pred_region
    _
  $region29: #{seq2seq_forward.5} parent=0 // pred_fallthru
    _
  // Predicated region
  $region30: #{seq2seq_forward.5} parent=0 // pred_check
    _
  $region31: #{seq2seq_forward.5} parent=0 // pred_check_branch
    %997 = sbr.rel (0) target = $region33
  $region32: #{seq2seq_forward.5} parent=0 // pred_region
    _
  $region33: #{seq2seq_forward.5} parent=0 // pred_fallthru
    _
  // Predicated region
  $region34: #{seq2seq_forward.5} parent=0 // pred_check
    _
  $region35: #{seq2seq_forward.5} parent=0 // pred_check_branch
    %999 = sbr.rel (0) target = $region37
  $region36: #{seq2seq_forward.5} parent=0 // pred_region
    _
  $region37: #{seq2seq_forward.5} parent=0 // pred_fallthru
    _
  // Predicated region
  $region38: #{seq2seq_forward.5} parent=0 // pred_check
    _
  $region39: #{seq2seq_forward.5} parent=0 // pred_check_branch
    %1001 = sbr.rel (0) target = $region41
  $region40: #{seq2seq_forward.5} parent=0 // pred_region
    _
  $region41: #{seq2seq_forward.5} parent=0 // pred_fallthru
    _
  // Predicated region
  $region42: #{seq2seq_forward.5} parent=0 // pred_check
    _
  $region43: #{seq2seq_forward.5} parent=0 // pred_check_branch
    %1003 = sbr.rel (0) target = $region45
  $region44: #{seq2seq_forward.5} parent=0 // pred_region
    _
  $region45: #{seq2seq_forward.5} parent=0 // pred_fallthru
    _
  // Predicated region
  $region46: #{seq2seq_forward.5} parent=0 // pred_check
    _
  $region47: #{seq2seq_forward.5} parent=0 // pred_check_branch
    %1005 = sbr.rel (0) target = $region49
  $region48: #{seq2seq_forward.5} parent=0 // pred_region
    _
  $region49: #{seq2seq_forward.5} parent=0 // pred_fallthru
    _

</llo_original>
